<compile_context>
chip_gen: v5e
topology: v5e:2x2
jax: 0.10.0
libtpu: 0.0.40
codegen_flags: <defaults>
</compile_context>

<pallas_src>
import functools

import jax
import jax.numpy as jnp
from jax.experimental import pallas as pl
from jax.experimental.pallas import tpu as pltpu

EPS = 1e-5
# Scoped-VMEM budget: <= ~48 MiB keeps the same configuration safe on v7x
# (64 MiB physical VMEM) while being generous for these tile sizes; v5e/v6e
# (128 MiB) could raise it together with the per-step batch block.
VMEM_LIMIT = 48 * 1024 * 1024
PADL = 8   # left zero-pad of the conv2 VMEM image -> sublane-aligned store


def _pick_bblk(batch, per_sample_bytes, budget=8 * 1024 * 1024):
    """Batch elements per grid step: amortize per-step overhead, stay inside a
    conservative VMEM budget, and keep >=2 grid steps when batch > 1 so both
    v7x TensorCores get work under dimension_semantics='parallel'."""
    cap = max(1, budget // max(int(per_sample_bytes), 1))
    target = batch if batch == 1 else min(cap, max(1, batch // 2))
    target = max(1, min(target, batch))
    for bb in range(target, 0, -1):
        if batch % bb == 0:
            return bb
    return 1


# ---------------------------------------------------------------------------
# Kernel 1: conv1 as a single im2col matmul (K = 9*Cin) + BN1 statistics
# ---------------------------------------------------------------------------
def _conv1_kernel(xc_ref, w_ref, h_ref, mean_ref, m2_ref, *, bblk):
    hw = xc_ref.shape[1]
    k = xc_ref.shape[2]
    c = w_ref.shape[-1]
    xc = xc_ref[...].reshape(bblk * hw, k)                         # bf16
    acc = jnp.dot(xc, w_ref[...], preferred_element_type=jnp.float32)
    acc3 = acc.reshape(bblk, hw, c)
    h_ref[...] = acc3.astype(h_ref.dtype)                          # bf16 writeback
    # BN statistics while the f32 accumulator is still in VMEM.
    mu = jnp.mean(acc3, axis=1, keepdims=True)                     # (bblk, 1, c)
    mean_ref[...] = mu
    m2_ref[...] = jnp.sum(jnp.square(acc3 - mu), axis=1, keepdims=True)


def conv1_block(xcol, wcol):
    B, HW, K = xcol.shape
    C = wcol.shape[-1]
    bblk = _pick_bblk(B, HW * (K * 2 + C * 2 + C * 4) * 2)
    grid = (B // bblk,)
    return pl.pallas_call(
        functools.partial(_conv1_kernel, bblk=bblk),
        out_shape=(jax.ShapeDtypeStruct((B, HW, C), jnp.bfloat16),
                   jax.ShapeDtypeStruct((B, 1, C), jnp.float32),
                   jax.ShapeDtypeStruct((B, 1, C), jnp.float32)),
        grid=grid,
        in_specs=[pl.BlockSpec((bblk, HW, K), lambda b: (b, 0, 0)),
                  pl.BlockSpec((K, C), lambda b: (0, 0))],
        out_specs=(pl.BlockSpec((bblk, HW, C), lambda b: (b, 0, 0)),
                   pl.BlockSpec((bblk, 1, C), lambda b: (b, 0, 0)),
                   pl.BlockSpec((bblk, 1, C), lambda b: (b, 0, 0))),
        compiler_params=pltpu.CompilerParams(
            dimension_semantics=("parallel",),
            vmem_limit_bytes=VMEM_LIMIT),
    )(xcol, wcol)


# ---------------------------------------------------------------------------
# BN batch-statistics combine (tiny (B,C) glue; Chan's parallel-variance
# formula avoids E[x^2]-mean^2 cancellation).  Matches PyTorch training-mode
# normalization (biased variance over B*HW elements).
# ---------------------------------------------------------------------------
def batch_stats_to_affine(mean_b, m2_b, gamma, beta, hw):
    mean_b = mean_b[:, 0, :]                                       # (B, C)
    m2_b = m2_b[:, 0, :]                                           # (B, C)
    B = mean_b.shape[0]
    mu = jnp.mean(mean_b, axis=0)                                  # (C,)
    var = (jnp.sum(m2_b, axis=0)
           + hw * jnp.sum(jnp.square(mean_b - mu), axis=0)) / (B * hw)
    scale = gamma * jax.lax.rsqrt(var + EPS)
    shift = beta - mu * scale
    return scale.reshape(1, -1), shift.reshape(1, -1)


# ---------------------------------------------------------------------------
# Kernel 2: fused BN1 + ReLU + SE1 -> conv2 (single K=9*C1 matmul)
#           + BN2 statistics epilogue.  a1 never touches HBM.
# ---------------------------------------------------------------------------
def _se1_conv2_kernel(h1_ref, sc_ref, sh_ref, w1_ref, w2_ref, wc_ref,
                      h2_ref, mean_ref, m2_ref, pad_ref, *, bblk, H, W):
    HW = H * W
    C1 = h1_ref.shape[-1]
    C2 = wc_ref.shape[-1]

    # --- BN1 (batch affine) + ReLU, f32 ---
    x = h1_ref[...].astype(jnp.float32).reshape(bblk * HW, C1)
    xr = jnp.maximum(x * sc_ref[...] + sh_ref[...], 0.0)
    xr3 = xr.reshape(bblk, HW, C1)

    # --- SE1 (M = bblk instead of 1) ---
    y = jnp.mean(xr3, axis=1)                                      # (bblk, C1)
    h = jnp.maximum(jnp.dot(y, w1_ref[...],
                            preferred_element_type=jnp.float32), 0.0)
    s = jax.nn.sigmoid(jnp.dot(h, w2_ref[...],
                               preferred_element_type=jnp.float32))
    a1 = (xr3 * s.reshape(bblk, 1, C1)).astype(jnp.bfloat16)       # (bblk, HW, C1)

    # --- zero-padded image lives only in VMEM; interior store starts at
    #     sublane offset PADL (=8) so it is tile-aligned ---
    pad_ref[...] = jnp.zeros(pad_ref.shape, pad_ref.dtype)
    pad_ref[:, 1:H + 1, PADL:PADL + W, :] = a1.reshape(bblk, H, W, C1)

    # --- conv2 as ONE matmul: concatenate 9 shifted slabs -> K = 9*C1 ---
    slabs = [
        pad_ref[:, kh:kh + H, (PADL - 1) + kw:(PADL - 1) + kw + W, :]
        .reshape(bblk * HW, C1)
        for kh in range(3) for kw in range(3)
    ]
    xcol = jnp.concatenate(slabs, axis=-1)                         # (bblk*HW, 9*C1)
    acc = jnp.dot(xcol, wc_ref[...], preferred_element_type=jnp.float32)
    acc3 = acc.reshape(bblk, HW, C2)
    h2_ref[...] = acc3.astype(h2_ref.dtype)                        # bf16 writeback

    # --- BN2 statistics epilogue (f32, before the bf16 cast) ---
    mu = jnp.mean(acc3, axis=1, keepdims=True)
    mean_ref[...] = mu
    m2_ref[...] = jnp.sum(jnp.square(acc3 - mu), axis=1, keepdims=True)


def se1_conv2_block(h1, scale1, shift1, w1, w2, wcol2, H, W):
    B, HW, C1 = h1.shape
    C2 = wcol2.shape[-1]
    r = w1.shape[-1]
    # per-sample working set dominated by the im2col column + f32 accumulator
    per_sample = HW * (9 * C1 * 2 + C2 * 4 + C1 * 4 + C1 * 2 + C2 * 2) * 2
    bblk = _pick_bblk(B, per_sample)
    grid = (B // bblk,)
    return pl.pallas_call(
        functools.partial(_se1_conv2_kernel, bblk=bblk, H=H, W=W),
        out_shape=(jax.ShapeDtypeStruct((B, HW, C2), jnp.bfloat16),
                   jax.ShapeDtypeStruct((B, 1, C2), jnp.float32),
                   jax.ShapeDtypeStruct((B, 1, C2), jnp.float32)),
        grid=grid,
        in_specs=[pl.BlockSpec((bblk, HW, C1), lambda b: (b, 0, 0)),
                  pl.BlockSpec((1, C1), lambda b: (0, 0)),
                  pl.BlockSpec((1, C1), lambda b: (0, 0)),
                  pl.BlockSpec((C1, r), lambda b: (0, 0)),
                  pl.BlockSpec((r, C1), lambda b: (0, 0)),
                  pl.BlockSpec((9 * C1, C2), lambda b: (0, 0))],
        out_specs=(pl.BlockSpec((bblk, HW, C2), lambda b: (b, 0, 0)),
                   pl.BlockSpec((bblk, 1, C2), lambda b: (b, 0, 0)),
                   pl.BlockSpec((bblk, 1, C2), lambda b: (b, 0, 0))),
        scratch_shapes=[pltpu.VMEM((bblk, H + 2, W + 2 * PADL, C1),
                                   jnp.bfloat16)],
        compiler_params=pltpu.CompilerParams(
            dimension_semantics=("parallel",),
            vmem_limit_bytes=VMEM_LIMIT),
    )(h1, scale1, shift1, w1, w2, wcol2)


# ---------------------------------------------------------------------------
# Kernel 3: fused BN2 + ReLU + SE2 + global-avg-pool + Linear head
#           (mean_hw(xr * s) == mean_hw(xr) * s)
# ---------------------------------------------------------------------------
def _se2_head_kernel(h2_ref, sc_ref, sh_ref, w1_ref, w2_ref, fw_ref, fb_ref,
                     o_ref, *, bblk):
    HW = h2_ref.shape[1]
    C = h2_ref.shape[-1]
    NC = fw_ref.shape[-1]
    x = h2_ref[...].astype(jnp.float32).reshape(bblk * HW, C)
    xr = jnp.maximum(x * sc_ref[...] + sh_ref[...], 0.0)           # BN2 + ReLU
    y = jnp.mean(xr.reshape(bblk, HW, C), axis=1)                  # (bblk, C)
    h = jnp.maximum(jnp.dot(y, w1_ref[...],
                            preferred_element_type=jnp.float32), 0.0)
    s = jax.nn.sigmoid(jnp.dot(h, w2_ref[...],
                               preferred_element_type=jnp.float32))
    ys = y * s                                                     # == mean_hw(xr*s)
    logits = jnp.dot(ys, fw_ref[...],
                     preferred_element_type=jnp.float32) + fb_ref[...]
    o_ref[...] = logits.reshape(bblk, 1, NC)


def se2_head_block(h2, scale2, shift2, w1, w2, fc_w, fc_b):
    B, HW, C = h2.shape
    r = w1.shape[-1]
    NC = fc_w.shape[-1]
    bblk = _pick_bblk(B, HW * (C * 2 + C * 4) * 2)
    grid = (B // bblk,)
    logits = pl.pallas_call(
        functools.partial(_se2_head_kernel, bblk=bblk),
        out_shape=jax.ShapeDtypeStruct((B, 1, NC), jnp.float32),
        grid=grid,
        in_specs=[pl.BlockSpec((bblk, HW, C), lambda b: (b, 0, 0)),
                  pl.BlockSpec((1, C), lambda b: (0, 0)),
                  pl.BlockSpec((1, C), lambda b: (0, 0)),
                  pl.BlockSpec((C, r), lambda b: (0, 0)),
                  pl.BlockSpec((r, C), lambda b: (0, 0)),
                  pl.BlockSpec((C, NC), lambda b: (0, 0)),
                  pl.BlockSpec((1, NC), lambda b: (0, 0))],
        out_specs=pl.BlockSpec((bblk, 1, NC), lambda b: (b, 0, 0)),
        compiler_params=pltpu.CompilerParams(
            dimension_semantics=("parallel",),
            vmem_limit_bytes=VMEM_LIMIT),
    )(h2, scale2, shift2, w1, w2, fc_w, fc_b)
    return logits[:, 0, :]


# ---------------------------------------------------------------------------
# Parameters (PyTorch layouts) + one-time layout preparation
# ---------------------------------------------------------------------------
def init_params(key, num_classes=10):
    ks = jax.random.split(key, 14)
    p = {}
    p["conv1_w"] = jax.random.normal(ks[0], (64, 3, 3, 3), jnp.float32) * 0.1
    p["conv1_b"] = jax.random.normal(ks[1], (64,), jnp.float32) * 0.1
    p["bn1_g"] = 1.0 + jax.random.normal(ks[2], (64,), jnp.float32) * 0.1
    p["bn1_b"] = jax.random.normal(ks[3], (64,), jnp.float32) * 0.1
    p["se1_w1"] = jax.random.normal(ks[4], (4, 64), jnp.float32) * 0.1     # torch (out,in)
    p["se1_w2"] = jax.random.normal(ks[5], (64, 4), jnp.float32) * 0.1
    p["conv2_w"] = jax.random.normal(ks[6], (128, 64, 3, 3), jnp.float32) * 0.05
    p["conv2_b"] = jax.random.normal(ks[7], (128,), jnp.float32) * 0.1
    p["bn2_g"] = 1.0 + jax.random.normal(ks[8], (128,), jnp.float32) * 0.1
    p["bn2_b"] = jax.random.normal(ks[9], (128,), jnp.float32) * 0.1
    p["se2_w1"] = jax.random.normal(ks[10], (8, 128), jnp.float32) * 0.1
    p["se2_w2"] = jax.random.normal(ks[11], (128, 8), jnp.float32) * 0.1
    p["fc_w"] = jax.random.normal(ks[12], (num_classes, 128), jnp.float32) * 0.1
    p["fc_b"] = jax.random.normal(ks[13], (num_classes,), jnp.float32) * 0.1
    return p


def prepare_params(p):
    """One-time weight layout prep (kept out of the per-call forward graph).
    Conv biases are intentionally unused: BatchNorm with batch statistics
    cancels a per-channel constant exactly, so the forward is unchanged."""
    def conv_cols(w):   # torch (Cout, Cin, 3, 3) -> (9*Cin, Cout) bf16 im2col layout
        co, ci = w.shape[0], w.shape[1]
        return jnp.transpose(w, (2, 3, 1, 0)).reshape(9 * ci, co).astype(jnp.bfloat16)
    return {
        "conv1_wcol": conv_cols(p["conv1_w"]),                   # (27, 64)
        "conv2_wcol": conv_cols(p["conv2_w"]),                   # (576, 128)
        "bn1_g": p["bn1_g"], "bn1_b": p["bn1_b"],
        "bn2_g": p["bn2_g"], "bn2_b": p["bn2_b"],
        "se1_w1": p["se1_w1"].T, "se1_w2": p["se1_w2"].T,        # (C, C/16), (C/16, C)
        "se2_w1": p["se2_w1"].T, "se2_w2": p["se2_w2"].T,
        "fc_w": p["fc_w"].T,                                     # (128, num_classes)
        "fc_b": p["fc_b"].reshape(1, -1),
    }


# ---------------------------------------------------------------------------
# Full forward
# ---------------------------------------------------------------------------
def simple_cnn_with_se(prep, x_nchw):
    B, Cin, H, W = x_nchw.shape
    HW = H * W

    # conv1 im2col pre-pack (tiny XLA glue; Cin=3 would leave the MXU idle).
    x = jnp.transpose(x_nchw, (0, 2, 3, 1)).astype(jnp.bfloat16)   # NCHW -> NHWC
    xp = jnp.pad(x, ((0, 0), (1, 1), (1, 1), (0, 0)))
    cols = [xp[:, kh:kh + H, kw:kw + W, :] for kh in range(3) for kw in range(3)]
    xcol = jnp.concatenate(cols, axis=-1).reshape(B, HW, 9 * Cin)  # (B, HW, 27)

    # block 1: conv1 (+ per-sample BN1 statistics in the same kernel)
    h1, m1, v1 = conv1_block(xcol, prep["conv1_wcol"])             # (B, HW, 64) bf16
    sc1, sh1 = batch_stats_to_affine(m1, v1, prep["bn1_g"], prep["bn1_b"], HW)

    # fused BN1+ReLU+SE1 -> conv2 (+ BN2 statistics); a1 never touches HBM
    h2, m2, v2 = se1_conv2_block(h1, sc1, sh1, prep["se1_w1"], prep["se1_w2"],
                                 prep["conv2_wcol"], H, W)         # (B, HW, 128) bf16
    sc2, sh2 = batch_stats_to_affine(m2, v2, prep["bn2_g"], prep["bn2_b"], HW)

    # fused BN2+ReLU+SE2 + global average pool + classifier
    return se2_head_block(h2, sc2, sh2, prep["se2_w1"], prep["se2_w2"],
                          prep["fc_w"], prep["fc_b"])              # (B, num_classes)


if __name__ == "__main__":
    key = jax.random.PRNGKey(0)
    k_x, k_p = jax.random.split(key)
    x = jax.random.normal(k_x, (2, 3, 16, 16), jnp.float32)        # NCHW input
    params = init_params(k_p, num_classes=10)
    prep = prepare_params(params)                                  # one-time layout prep

    fwd = jax.jit(simple_cnn_with_se)
    out = jax.block_until_ready(fwd(prep, x))
    assert out.shape == (2, 10), out.shape
    assert bool(jnp.all(jnp.isfinite(out)))
    print("KERNEL_OK")
</pallas_src>

<mosaic_0001>
module attributes {stable_mosaic.version = 11 : i64} {
  func.func @_conv1_kernel(%arg0: i32, %arg1: memref<1x256x27xbf16, #tpu.memory_space<vmem>>, %arg2: memref<27x64xbf16, #tpu.memory_space<vmem>>, %arg3: memref<1x256x64xbf16, #tpu.memory_space<vmem>>, %arg4: memref<1x1x64xf32, #tpu.memory_space<vmem>>, %arg5: memref<1x1x64xf32, #tpu.memory_space<vmem>>) attributes {dimension_semantics = [#tpu.dimension_semantics<parallel>], iteration_bounds = array<i64: 2>, scalar_prefetch = 0 : i64, scratch_operands = 0 : i64, tpu.core_type = #tpu.core_type<tc>, window_params = [{transform_indices = @transform_0, window_bounds = array<i64: 1, 256, 27>}, {pipeline_mode = #tpu.pipeline_mode<synchronous>, transform_indices = @transform_1, window_bounds = array<i64: 27, 64>}, {transform_indices = @transform_2, window_bounds = array<i64: 1, 256, 64>}, {transform_indices = @transform_3, window_bounds = array<i64: 1, 1, 64>}, {transform_indices = @transform_4, window_bounds = array<i64: 1, 1, 64>}]} {
    %c0 = arith.constant 0 : index
    %c0_0 = arith.constant 0 : index
    %c0_1 = arith.constant 0 : index
    %0 = vector.load %arg1[%c0, %c0_0, %c0_1] : memref<1x256x27xbf16, #tpu.memory_space<vmem>>, vector<1x256x27xbf16>
    %1 = vector.shape_cast %0 : vector<1x256x27xbf16> to vector<256x27xbf16>
    %c0_2 = arith.constant 0 : index
    %c0_3 = arith.constant 0 : index
    %2 = vector.load %arg2[%c0_2, %c0_3] : memref<27x64xbf16, #tpu.memory_space<vmem>>, vector<27x64xbf16>
    %cst = arith.constant dense<0.000000e+00> : vector<256x64xf32>
    %3 = tpu.matmul %1, %2, %cst {dimension_numbers = #tpu.dot_dimension_numbers<[1], [0], [0], [1], [0, 0, 1, 1], [], []>} : vector<256x27xbf16>, vector<27x64xbf16>, vector<256x64xf32> -> vector<256x64xf32>
    %4 = vector.shape_cast %3 : vector<256x64xf32> to vector<1x256x64xf32>
    %5 = arith.truncf %4 : vector<1x256x64xf32> to vector<1x256x64xbf16>
    %c0_4 = arith.constant 0 : index
    %c0_5 = arith.constant 0 : index
    %c0_6 = arith.constant 0 : index
    %6 = vector.load %arg3[%c0_4, %c0_5, %c0_6] : memref<1x256x64xbf16, #tpu.memory_space<vmem>>, vector<1x256x64xbf16>
    tpu.vector_store %arg3[%c0_4, %c0_5, %c0_6], %5 {strides = array<i32>} : memref<1x256x64xbf16, #tpu.memory_space<vmem>>, vector<1x256x64xbf16>,
    %cst_7 = arith.constant dense<0.000000e+00> : vector<1x64xf32>
    %7 = vector.multi_reduction <add>, %4, %cst_7 [1] : vector<1x256x64xf32> to vector<1x64xf32>
    %8 = vector.shape_cast %7 : vector<1x64xf32> to vector<1x1x64xf32>
    %cst_8 = arith.constant 2.560000e+02 : f32
    %9 = vector.broadcast %cst_8 : f32 to vector<1x1x64xf32>
    %10 = arith.divf %8, %9 : vector<1x1x64xf32>
    %c0_9 = arith.constant 0 : index
    %c0_10 = arith.constant 0 : index
    %c0_11 = arith.constant 0 : index
    %11 = vector.load %arg4[%c0_9, %c0_10, %c0_11] : memref<1x1x64xf32, #tpu.memory_space<vmem>>, vector<1x1x64xf32>
    tpu.vector_store %arg4[%c0_9, %c0_10, %c0_11], %10 {strides = array<i32>} : memref<1x1x64xf32, #tpu.memory_space<vmem>>, vector<1x1x64xf32>,
    %12 = vector.broadcast %10 : vector<1x1x64xf32> to vector<1x256x64xf32>
    %13 = arith.subf %4, %12 : vector<1x256x64xf32>
    %14 = arith.mulf %13, %13 : vector<1x256x64xf32>
    %cst_12 = arith.constant dense<0.000000e+00> : vector<1x64xf32>
    %15 = vector.multi_reduction <add>, %14, %cst_12 [1] : vector<1x256x64xf32> to vector<1x64xf32>
    %16 = vector.shape_cast %15 : vector<1x64xf32> to vector<1x1x64xf32>
    %c0_13 = arith.constant 0 : index
    %c0_14 = arith.constant 0 : index
    %c0_15 = arith.constant 0 : index
    %17 = vector.load %arg5[%c0_13, %c0_14, %c0_15] : memref<1x1x64xf32, #tpu.memory_space<vmem>>, vector<1x1x64xf32>
    tpu.vector_store %arg5[%c0_13, %c0_14, %c0_15], %16 {strides = array<i32>} : memref<1x1x64xf32, #tpu.memory_space<vmem>>, vector<1x1x64xf32>,
    return
  }
  func.func @transform_0(%arg0: i32) -> (i32, i32, i32) {
    %c0_i32 = arith.constant 0 : i32
    %c0_i32_0 = arith.constant 0 : i32
    %c0_i32_1 = arith.constant 0 : i32
    return %arg0, %c0_i32, %c0_i32_0 : i32, i32, i32
  }
  func.func @transform_1(%arg0: i32) -> (i32, i32) {
    %c0_i32 = arith.constant 0 : i32
    %c0_i32_0 = arith.constant 0 : i32
    %c0_i32_1 = arith.constant 0 : i32
    return %c0_i32, %c0_i32_0 : i32, i32
  }
  func.func @transform_2(%arg0: i32) -> (i32, i32, i32) {
    %c0_i32 = arith.constant 0 : i32
    %c0_i32_0 = arith.constant 0 : i32
    %c0_i32_1 = arith.constant 0 : i32
    return %arg0, %c0_i32, %c0_i32_0 : i32, i32, i32
  }
  func.func @transform_3(%arg0: i32) -> (i32, i32, i32) {
    %c0_i32 = arith.constant 0 : i32
    %c0_i32_0 = arith.constant 0 : i32
    %c0_i32_1 = arith.constant 0 : i32
    return %arg0, %c0_i32, %c0_i32_0 : i32, i32, i32
  }
  func.func @transform_4(%arg0: i32) -> (i32, i32, i32) {
    %c0_i32 = arith.constant 0 : i32
    %c0_i32_0 = arith.constant 0 : i32
    %c0_i32_1 = arith.constant 0 : i32
    return %arg0, %c0_i32, %c0_i32_0 : i32, i32, i32
  }
}

module attributes {stable_mosaic.version = 11 : i64} {
  func.func @_se1_conv2_kernel(%arg0: i32, %arg1: memref<1x256x64xbf16, #tpu.memory_space<vmem>>, %arg2: memref<1x64xf32, #tpu.memory_space<vmem>>, %arg3: memref<1x64xf32, #tpu.memory_space<vmem>>, %arg4: memref<64x4xf32, #tpu.memory_space<vmem>>, %arg5: memref<4x64xf32, #tpu.memory_space<vmem>>, %arg6: memref<576x128xbf16, #tpu.memory_space<vmem>>, %arg7: memref<1x256x128xbf16, #tpu.memory_space<vmem>>, %arg8: memref<1x1x128xf32, #tpu.memory_space<vmem>>, %arg9: memref<1x1x128xf32, #tpu.memory_space<vmem>>, %arg10: memref<1x18x32x64xbf16, #tpu.memory_space<vmem>>) attributes {dimension_semantics = [#tpu.dimension_semantics<parallel>], iteration_bounds = array<i64: 2>, scalar_prefetch = 0 : i64, scratch_operands = 1 : i64, tpu.core_type = #tpu.core_type<tc>, window_params = [{transform_indices = @transform_0, window_bounds = array<i64: 1, 256, 64>}, {pipeline_mode = #tpu.pipeline_mode<synchronous>, transform_indices = @transform_1, window_bounds = array<i64: 1, 64>}, {pipeline_mode = #tpu.pipeline_mode<synchronous>, transform_indices = @transform_2, window_bounds = array<i64: 1, 64>}, {pipeline_mode = #tpu.pipeline_mode<synchronous>, transform_indices = @transform_3, window_bounds = array<i64: 64, 4>}, {pipeline_mode = #tpu.pipeline_mode<synchronous>, transform_indices = @transform_4, window_bounds = array<i64: 4, 64>}, {pipeline_mode = #tpu.pipeline_mode<synchronous>, transform_indices = @transform_5, window_bounds = array<i64: 576, 128>}, {transform_indices = @transform_6, window_bounds = array<i64: 1, 256, 128>}, {transform_indices = @transform_7, window_bounds = array<i64: 1, 1, 128>}, {transform_indices = @transform_8, window_bounds = array<i64: 1, 1, 128>}]} {
    %c0 = arith.constant 0 : index
    %c0_0 = arith.constant 0 : index
    %c0_1 = arith.constant 0 : index
    %0 = vector.load %arg1[%c0, %c0_0, %c0_1] : memref<1x256x64xbf16, #tpu.memory_space<vmem>>, vector<1x256x64xbf16>
    %1 = arith.extf %0 : vector<1x256x64xbf16> to vector<1x256x64xf32>
    %2 = vector.shape_cast %1 : vector<1x256x64xf32> to vector<256x64xf32>
    %c0_2 = arith.constant 0 : index
    %c0_3 = arith.constant 0 : index
    %3 = vector.load %arg2[%c0_2, %c0_3] : memref<1x64xf32, #tpu.memory_space<vmem>>, vector<1x64xf32>
    %4 = vector.broadcast %3 : vector<1x64xf32> to vector<256x64xf32>
    %5 = arith.mulf %2, %4 : vector<256x64xf32>
    %c0_4 = arith.constant 0 : index
    %c0_5 = arith.constant 0 : index
    %6 = vector.load %arg3[%c0_4, %c0_5] : memref<1x64xf32, #tpu.memory_space<vmem>>, vector<1x64xf32>
    %7 = vector.broadcast %6 : vector<1x64xf32> to vector<256x64xf32>
    %8 = arith.addf %5, %7 : vector<256x64xf32>
    %cst = arith.constant 0.000000e+00 : f32
    %9 = vector.broadcast %cst : f32 to vector<256x64xf32>
    %10 = arith.maximumf %8, %9 : vector<256x64xf32>
    %11 = vector.shape_cast %10 : vector<256x64xf32> to vector<1x256x64xf32>
    %cst_6 = arith.constant dense<0.000000e+00> : vector<1x64xf32>
    %12 = vector.multi_reduction <add>, %11, %cst_6 [1] : vector<1x256x64xf32> to vector<1x64xf32>
    %cst_7 = arith.constant 2.560000e+02 : f32
    %13 = vector.broadcast %cst_7 : f32 to vector<1x64xf32>
    %14 = arith.divf %12, %13 : vector<1x64xf32>
    %c0_8 = arith.constant 0 : index
    %c0_9 = arith.constant 0 : index
    %15 = vector.load %arg4[%c0_8, %c0_9] : memref<64x4xf32, #tpu.memory_space<vmem>>, vector<64x4xf32>
    %cst_10 = arith.constant dense<0.000000e+00> : vector<1x4xf32>
    %16 = tpu.matmul %14, %15, %cst_10 {dimension_numbers = #tpu.dot_dimension_numbers<[1], [0], [0], [1], [0, 0, 1, 1], [], []>} : vector<1x64xf32>, vector<64x4xf32>, vector<1x4xf32> -> vector<1x4xf32>
    %cst_11 = arith.constant 0.000000e+00 : f32
    %17 = vector.broadcast %cst_11 : f32 to vector<1x4xf32>
    %18 = arith.maximumf %16, %17 : vector<1x4xf32>
    %c0_12 = arith.constant 0 : index
    %c0_13 = arith.constant 0 : index
    %19 = vector.load %arg5[%c0_12, %c0_13] : memref<4x64xf32, #tpu.memory_space<vmem>>, vector<4x64xf32>
    %cst_14 = arith.constant dense<0.000000e+00> : vector<1x64xf32>
    %20 = tpu.matmul %18, %19, %cst_14 {dimension_numbers = #tpu.dot_dimension_numbers<[1], [0], [0], [1], [0, 0, 1, 1], [], []>} : vector<1x4xf32>, vector<4x64xf32>, vector<1x64xf32> -> vector<1x64xf32>
    %21 = arith.negf %20 : vector<1x64xf32>
    %22 = math.exp %21 : vector<1x64xf32>
    %cst_15 = arith.constant 1.000000e+00 : f32
    %23 = vector.broadcast %cst_15 : f32 to vector<1x64xf32>
    %24 = arith.addf %23, %22 : vector<1x64xf32>
    %25 = arith.divf %23, %24 : vector<1x64xf32>
    %26 = vector.shape_cast %25 : vector<1x64xf32> to vector<1x1x64xf32>
    %27 = vector.broadcast %26 : vector<1x1x64xf32> to vector<1x256x64xf32>
    %28 = arith.mulf %11, %27 : vector<1x256x64xf32>
    %29 = arith.truncf %28 : vector<1x256x64xf32> to vector<1x256x64xbf16>
    %cst_16 = arith.constant 0.000000e+00 : bf16
    %30 = vector.broadcast %cst_16 : bf16 to vector<1x18x32x64xbf16>
    %c0_17 = arith.constant 0 : index
    %c0_18 = arith.constant 0 : index
    %c0_19 = arith.constant 0 : index
    %c0_20 = arith.constant 0 : index
    %31 = vector.load %arg10[%c0_17, %c0_18, %c0_19, %c0_20] : memref<1x18x32x64xbf16, #tpu.memory_space<vmem>>, vector<1x18x32x64xbf16>
    tpu.vector_store %arg10[%c0_17, %c0_18, %c0_19, %c0_20], %30 {strides = array<i32>} : memref<1x18x32x64xbf16, #tpu.memory_space<vmem>>, vector<1x18x32x64xbf16>,
    %32 = vector.shape_cast %29 : vector<1x256x64xbf16> to vector<1x16x16x64xbf16>
    %c0_21 = arith.constant 0 : index
    %c1 = arith.constant 1 : index
    %c8 = arith.constant 8 : index
    %c0_22 = arith.constant 0 : index
    %33 = vector.load %arg10[%c0_21, %c1, %c8, %c0_22] : memref<1x18x32x64xbf16, #tpu.memory_space<vmem>>, vector<1x16x16x64xbf16>
    tpu.vector_store %arg10[%c0_21, %c1, %c8, %c0_22], %32 {strides = array<i32>} : memref<1x18x32x64xbf16, #tpu.memory_space<vmem>>, vector<1x16x16x64xbf16>,
    %c0_23 = arith.constant 0 : index
    %c0_24 = arith.constant 0 : index
    %c7 = arith.constant 7 : index
    %c0_25 = arith.constant 0 : index
    %34 = vector.load %arg10[%c0_23, %c0_24, %c7, %c0_25] : memref<1x18x32x64xbf16, #tpu.memory_space<vmem>>, vector<1x16x16x64xbf16>
    %35 = vector.shape_cast %34 : vector<1x16x16x64xbf16> to vector<256x64xbf16>
    %c0_26 = arith.constant 0 : index
    %c0_27 = arith.constant 0 : index
    %c8_28 = arith.constant 8 : index
    %c0_29 = arith.constant 0 : index
    %36 = vector.load %arg10[%c0_26, %c0_27, %c8_28, %c0_29] : memref<1x18x32x64xbf16, #tpu.memory_space<vmem>>, vector<1x16x16x64xbf16>
    %37 = vector.shape_cast %36 : vector<1x16x16x64xbf16> to vector<256x64xbf16>
    %c0_30 = arith.constant 0 : index
    %c0_31 = arith.constant 0 : index
    %c9 = arith.constant 9 : index
    %c0_32 = arith.constant 0 : index
    %38 = vector.load %arg10[%c0_30, %c0_31, %c9, %c0_32] : memref<1x18x32x64xbf16, #tpu.memory_space<vmem>>, vector<1x16x16x64xbf16>
    %39 = vector.shape_cast %38 : vector<1x16x16x64xbf16> to vector<256x64xbf16>
    %c0_33 = arith.constant 0 : index
    %c1_34 = arith.constant 1 : index
    %c7_35 = arith.constant 7 : index
    %c0_36 = arith.constant 0 : index
    %40 = vector.load %arg10[%c0_33, %c1_34, %c7_35, %c0_36] : memref<1x18x32x64xbf16, #tpu.memory_space<vmem>>, vector<1x16x16x64xbf16>
    %41 = vector.shape_cast %40 : vector<1x16x16x64xbf16> to vector<256x64xbf16>
    %c0_37 = arith.constant 0 : index
    %c1_38 = arith.constant 1 : index
    %c8_39 = arith.constant 8 : index
    %c0_40 = arith.constant 0 : index
    %42 = vector.load %arg10[%c0_37, %c1_38, %c8_39, %c0_40] : memref<1x18x32x64xbf16, #tpu.memory_space<vmem>>, vector<1x16x16x64xbf16>
    %43 = vector.shape_cast %42 : vector<1x16x16x64xbf16> to vector<256x64xbf16>
    %c0_41 = arith.constant 0 : index
    %c1_42 = arith.constant 1 : index
    %c9_43 = arith.constant 9 : index
    %c0_44 = arith.constant 0 : index
    %44 = vector.load %arg10[%c0_41, %c1_42, %c9_43, %c0_44] : memref<1x18x32x64xbf16, #tpu.memory_space<vmem>>, vector<1x16x16x64xbf16>
    %45 = vector.shape_cast %44 : vector<1x16x16x64xbf16> to vector<256x64xbf16>
    %c0_45 = arith.constant 0 : index
    %c2 = arith.constant 2 : index
    %c7_46 = arith.constant 7 : index
    %c0_47 = arith.constant 0 : index
    %46 = vector.load %arg10[%c0_45, %c2, %c7_46, %c0_47] : memref<1x18x32x64xbf16, #tpu.memory_space<vmem>>, vector<1x16x16x64xbf16>
    %47 = vector.shape_cast %46 : vector<1x16x16x64xbf16> to vector<256x64xbf16>
    %c0_48 = arith.constant 0 : index
    %c2_49 = arith.constant 2 : index
    %c8_50 = arith.constant 8 : index
    %c0_51 = arith.constant 0 : index
    %48 = vector.load %arg10[%c0_48, %c2_49, %c8_50, %c0_51] : memref<1x18x32x64xbf16, #tpu.memory_space<vmem>>, vector<1x16x16x64xbf16>
    %49 = vector.shape_cast %48 : vector<1x16x16x64xbf16> to vector<256x64xbf16>
    %c0_52 = arith.constant 0 : index
    %c2_53 = arith.constant 2 : index
    %c9_54 = arith.constant 9 : index
    %c0_55 = arith.constant 0 : index
    %50 = vector.load %arg10[%c0_52, %c2_53, %c9_54, %c0_55] : memref<1x18x32x64xbf16, #tpu.memory_space<vmem>>, vector<1x16x16x64xbf16>
    %51 = vector.shape_cast %50 : vector<1x16x16x64xbf16> to vector<256x64xbf16>
    %52 = tpu.concatenate %35, %37, %39, %41, %43, %45, %47, %49, %51 in 1 : vector<256x64xbf16>, vector<256x64xbf16>, vector<256x64xbf16>, vector<256x64xbf16>, vector<256x64xbf16>, vector<256x64xbf16>, vector<256x64xbf16>, vector<256x64xbf16>, vector<256x64xbf16> -> vector<256x576xbf16>
    %c0_56 = arith.constant 0 : index
    %c0_57 = arith.constant 0 : index
    %53 = vector.load %arg6[%c0_56, %c0_57] : memref<576x128xbf16, #tpu.memory_space<vmem>>, vector<576x128xbf16>
    %cst_58 = arith.constant dense<0.000000e+00> : vector<256x128xf32>
    %54 = tpu.matmul %52, %53, %cst_58 {dimension_numbers = #tpu.dot_dimension_numbers<[1], [0], [0], [1], [0, 0, 1, 1], [], []>} : vector<256x576xbf16>, vector<576x128xbf16>, vector<256x128xf32> -> vector<256x128xf32>
    %55 = vector.shape_cast %54 : vector<256x128xf32> to vector<1x256x128xf32>
    %56 = arith.truncf %55 : vector<1x256x128xf32> to vector<1x256x128xbf16>
    %c0_59 = arith.constant 0 : index
    %c0_60 = arith.constant 0 : index
    %c0_61 = arith.constant 0 : index
    %57 = vector.load %arg7[%c0_59, %c0_60, %c0_61] : memref<1x256x128xbf16, #tpu.memory_space<vmem>>, vector<1x256x128xbf16>
    tpu.vector_store %arg7[%c0_59, %c0_60, %c0_61], %56 {strides = array<i32>} : memref<1x256x128xbf16, #tpu.memory_space<vmem>>, vector<1x256x128xbf16>,
    %cst_62 = arith.constant dense<0.000000e+00> : vector<1x128xf32>
    %58 = vector.multi_reduction <add>, %55, %cst_62 [1] : vector<1x256x128xf32> to vector<1x128xf32>
    %59 = vector.shape_cast %58 : vector<1x128xf32> to vector<1x1x128xf32>
    %cst_63 = arith.constant 2.560000e+02 : f32
    %60 = vector.broadcast %cst_63 : f32 to vector<1x1x128xf32>
    %61 = arith.divf %59, %60 : vector<1x1x128xf32>
    %c0_64 = arith.constant 0 : index
    %c0_65 = arith.constant 0 : index
    %c0_66 = arith.constant 0 : index
    %62 = vector.load %arg8[%c0_64, %c0_65, %c0_66] : memref<1x1x128xf32, #tpu.memory_space<vmem>>, vector<1x1x128xf32>
    tpu.vector_store %arg8[%c0_64, %c0_65, %c0_66], %61 {strides = array<i32>} : memref<1x1x128xf32, #tpu.memory_space<vmem>>, vector<1x1x128xf32>,
    %63 = vector.broadcast %61 : vector<1x1x128xf32> to vector<1x256x128xf32>
    %64 = arith.subf %55, %63 : vector<1x256x128xf32>
    %65 = arith.mulf %64, %64 : vector<1x256x128xf32>
    %cst_67 = arith.constant dense<0.000000e+00> : vector<1x128xf32>
    %66 = vector.multi_reduction <add>, %65, %cst_67 [1] : vector<1x256x128xf32> to vector<1x128xf32>
    %67 = vector.shape_cast %66 : vector<1x128xf32> to vector<1x1x128xf32>
    %c0_68 = arith.constant 0 : index
    %c0_69 = arith.constant 0 : index
    %c0_70 = arith.constant 0 : index
    %68 = vector.load %arg9[%c0_68, %c0_69, %c0_70] : memref<1x1x128xf32, #tpu.memory_space<vmem>>, vector<1x1x128xf32>
    tpu.vector_store %arg9[%c0_68, %c0_69, %c0_70], %67 {strides = array<i32>} : memref<1x1x128xf32, #tpu.memory_space<vmem>>, vector<1x1x128xf32>,
    return
  }
  func.func @transform_0(%arg0: i32) -> (i32, i32, i32) {
    %c0_i32 = arith.constant 0 : i32
    %c0_i32_0 = arith.constant 0 : i32
    %c0_i32_1 = arith.constant 0 : i32
    return %arg0, %c0_i32, %c0_i32_0 : i32, i32, i32
  }
  func.func @transform_1(%arg0: i32) -> (i32, i32) {
    %c0_i32 = arith.constant 0 : i32
    %c0_i32_0 = arith.constant 0 : i32
    %c0_i32_1 = arith.constant 0 : i32
    return %c0_i32, %c0_i32_0 : i32, i32
  }
  func.func @transform_2(%arg0: i32) -> (i32, i32) {
    %c0_i32 = arith.constant 0 : i32
    %c0_i32_0 = arith.constant 0 : i32
    %c0_i32_1 = arith.constant 0 : i32
    return %c0_i32, %c0_i32_0 : i32, i32
  }
  func.func @transform_3(%arg0: i32) -> (i32, i32) {
    %c0_i32 = arith.constant 0 : i32
    %c0_i32_0 = arith.constant 0 : i32
    %c0_i32_1 = arith.constant 0 : i32
    return %c0_i32, %c0_i32_0 : i32, i32
  }
  func.func @transform_4(%arg0: i32) -> (i32, i32) {
    %c0_i32 = arith.constant 0 : i32
    %c0_i32_0 = arith.constant 0 : i32
    %c0_i32_1 = arith.constant 0 : i32
    return %c0_i32, %c0_i32_0 : i32, i32
  }
  func.func @transform_5(%arg0: i32) -> (i32, i32) {
    %c0_i32 = arith.constant 0 : i32
    %c0_i32_0 = arith.constant 0 : i32
    %c0_i32_1 = arith.constant 0 : i32
    return %c0_i32, %c0_i32_0 : i32, i32
  }
  func.func @transform_6(%arg0: i32) -> (i32, i32, i32) {
    %c0_i32 = arith.constant 0 : i32
    %c0_i32_0 = arith.constant 0 : i32
    %c0_i32_1 = arith.constant 0 : i32
    return %arg0, %c0_i32, %c0_i32_0 : i32, i32, i32
  }
  func.func @transform_7(%arg0: i32) -> (i32, i32, i32) {
    %c0_i32 = arith.constant 0 : i32
    %c0_i32_0 = arith.constant 0 : i32
    %c0_i32_1 = arith.constant 0 : i32
    return %arg0, %c0_i32, %c0_i32_0 : i32, i32, i32
  }
  func.func @transform_8(%arg0: i32) -> (i32, i32, i32) {
    %c0_i32 = arith.constant 0 : i32
    %c0_i32_0 = arith.constant 0 : i32
    %c0_i32_1 = arith.constant 0 : i32
    return %arg0, %c0_i32, %c0_i32_0 : i32, i32, i32
  }
}

module attributes {stable_mosaic.version = 11 : i64} {
  func.func @_se2_head_kernel(%arg0: i32, %arg1: memref<1x256x128xbf16, #tpu.memory_space<vmem>>, %arg2: memref<1x128xf32, #tpu.memory_space<vmem>>, %arg3: memref<1x128xf32, #tpu.memory_space<vmem>>, %arg4: memref<128x8xf32, #tpu.memory_space<vmem>>, %arg5: memref<8x128xf32, #tpu.memory_space<vmem>>, %arg6: memref<128x10xf32, #tpu.memory_space<vmem>>, %arg7: memref<1x10xf32, #tpu.memory_space<vmem>>, %arg8: memref<1x1x10xf32, #tpu.memory_space<vmem>>) attributes {dimension_semantics = [#tpu.dimension_semantics<parallel>], iteration_bounds = array<i64: 2>, scalar_prefetch = 0 : i64, scratch_operands = 0 : i64, tpu.core_type = #tpu.core_type<tc>, window_params = [{transform_indices = @transform_0, window_bounds = array<i64: 1, 256, 128>}, {pipeline_mode = #tpu.pipeline_mode<synchronous>, transform_indices = @transform_1, window_bounds = array<i64: 1, 128>}, {pipeline_mode = #tpu.pipeline_mode<synchronous>, transform_indices = @transform_2, window_bounds = array<i64: 1, 128>}, {pipeline_mode = #tpu.pipeline_mode<synchronous>, transform_indices = @transform_3, window_bounds = array<i64: 128, 8>}, {pipeline_mode = #tpu.pipeline_mode<synchronous>, transform_indices = @transform_4, window_bounds = array<i64: 8, 128>}, {pipeline_mode = #tpu.pipeline_mode<synchronous>, transform_indices = @transform_5, window_bounds = array<i64: 128, 10>}, {pipeline_mode = #tpu.pipeline_mode<synchronous>, transform_indices = @transform_6, window_bounds = array<i64: 1, 10>}, {transform_indices = @transform_7, window_bounds = array<i64: 1, 1, 10>}]} {
    %c0 = arith.constant 0 : index
    %c0_0 = arith.constant 0 : index
    %c0_1 = arith.constant 0 : index
    %0 = vector.load %arg1[%c0, %c0_0, %c0_1] : memref<1x256x128xbf16, #tpu.memory_space<vmem>>, vector<1x256x128xbf16>
    %1 = arith.extf %0 : vector<1x256x128xbf16> to vector<1x256x128xf32>
    %2 = vector.shape_cast %1 : vector<1x256x128xf32> to vector<256x128xf32>
    %c0_2 = arith.constant 0 : index
    %c0_3 = arith.constant 0 : index
    %3 = vector.load %arg2[%c0_2, %c0_3] : memref<1x128xf32, #tpu.memory_space<vmem>>, vector<1x128xf32>
    %4 = vector.broadcast %3 : vector<1x128xf32> to vector<256x128xf32>
    %5 = arith.mulf %2, %4 : vector<256x128xf32>
    %c0_4 = arith.constant 0 : index
    %c0_5 = arith.constant 0 : index
    %6 = vector.load %arg3[%c0_4, %c0_5] : memref<1x128xf32, #tpu.memory_space<vmem>>, vector<1x128xf32>
    %7 = vector.broadcast %6 : vector<1x128xf32> to vector<256x128xf32>
    %8 = arith.addf %5, %7 : vector<256x128xf32>
    %cst = arith.constant 0.000000e+00 : f32
    %9 = vector.broadcast %cst : f32 to vector<256x128xf32>
    %10 = arith.maximumf %8, %9 : vector<256x128xf32>
    %11 = vector.shape_cast %10 : vector<256x128xf32> to vector<1x256x128xf32>
    %cst_6 = arith.constant dense<0.000000e+00> : vector<1x128xf32>
    %12 = vector.multi_reduction <add>, %11, %cst_6 [1] : vector<1x256x128xf32> to vector<1x128xf32>
    %cst_7 = arith.constant 2.560000e+02 : f32
    %13 = vector.broadcast %cst_7 : f32 to vector<1x128xf32>
    %14 = arith.divf %12, %13 : vector<1x128xf32>
    %c0_8 = arith.constant 0 : index
    %c0_9 = arith.constant 0 : index
    %15 = vector.load %arg4[%c0_8, %c0_9] : memref<128x8xf32, #tpu.memory_space<vmem>>, vector<128x8xf32>
    %cst_10 = arith.constant dense<0.000000e+00> : vector<1x8xf32>
    %16 = tpu.matmul %14, %15, %cst_10 {dimension_numbers = #tpu.dot_dimension_numbers<[1], [0], [0], [1], [0, 0, 1, 1], [], []>} : vector<1x128xf32>, vector<128x8xf32>, vector<1x8xf32> -> vector<1x8xf32>
    %cst_11 = arith.constant 0.000000e+00 : f32
    %17 = vector.broadcast %cst_11 : f32 to vector<1x8xf32>
    %18 = arith.maximumf %16, %17 : vector<1x8xf32>
    %c0_12 = arith.constant 0 : index
    %c0_13 = arith.constant 0 : index
    %19 = vector.load %arg5[%c0_12, %c0_13] : memref<8x128xf32, #tpu.memory_space<vmem>>, vector<8x128xf32>
    %cst_14 = arith.constant dense<0.000000e+00> : vector<1x128xf32>
    %20 = tpu.matmul %18, %19, %cst_14 {dimension_numbers = #tpu.dot_dimension_numbers<[1], [0], [0], [1], [0, 0, 1, 1], [], []>} : vector<1x8xf32>, vector<8x128xf32>, vector<1x128xf32> -> vector<1x128xf32>
    %21 = arith.negf %20 : vector<1x128xf32>
    %22 = math.exp %21 : vector<1x128xf32>
    %cst_15 = arith.constant 1.000000e+00 : f32
    %23 = vector.broadcast %cst_15 : f32 to vector<1x128xf32>
    %24 = arith.addf %23, %22 : vector<1x128xf32>
    %25 = arith.divf %23, %24 : vector<1x128xf32>
    %26 = arith.mulf %14, %25 : vector<1x128xf32>
    %c0_16 = arith.constant 0 : index
    %c0_17 = arith.constant 0 : index
    %27 = vector.load %arg6[%c0_16, %c0_17] : memref<128x10xf32, #tpu.memory_space<vmem>>, vector<128x10xf32>
    %cst_18 = arith.constant dense<0.000000e+00> : vector<1x10xf32>
    %28 = tpu.matmul %26, %27, %cst_18 {dimension_numbers = #tpu.dot_dimension_numbers<[1], [0], [0], [1], [0, 0, 1, 1], [], []>} : vector<1x128xf32>, vector<128x10xf32>, vector<1x10xf32> -> vector<1x10xf32>
    %c0_19 = arith.constant 0 : index
    %c0_20 = arith.constant 0 : index
    %29 = vector.load %arg7[%c0_19, %c0_20] : memref<1x10xf32, #tpu.memory_space<vmem>>, vector<1x10xf32>
    %30 = arith.addf %28, %29 : vector<1x10xf32>
    %31 = vector.shape_cast %30 : vector<1x10xf32> to vector<1x1x10xf32>
    %c0_21 = arith.constant 0 : index
    %c0_22 = arith.constant 0 : index
    %c0_23 = arith.constant 0 : index
    %32 = vector.load %arg8[%c0_21, %c0_22, %c0_23] : memref<1x1x10xf32, #tpu.memory_space<vmem>>, vector<1x1x10xf32>
    tpu.vector_store %arg8[%c0_21, %c0_22, %c0_23], %31 {strides = array<i32>} : memref<1x1x10xf32, #tpu.memory_space<vmem>>, vector<1x1x10xf32>,
    return
  }
  func.func @transform_0(%arg0: i32) -> (i32, i32, i32) {
    %c0_i32 = arith.constant 0 : i32
    %c0_i32_0 = arith.constant 0 : i32
    %c0_i32_1 = arith.constant 0 : i32
    return %arg0, %c0_i32, %c0_i32_0 : i32, i32, i32
  }
  func.func @transform_1(%arg0: i32) -> (i32, i32) {
    %c0_i32 = arith.constant 0 : i32
    %c0_i32_0 = arith.constant 0 : i32
    %c0_i32_1 = arith.constant 0 : i32
    return %c0_i32, %c0_i32_0 : i32, i32
  }
  func.func @transform_2(%arg0: i32) -> (i32, i32) {
    %c0_i32 = arith.constant 0 : i32
    %c0_i32_0 = arith.constant 0 : i32
    %c0_i32_1 = arith.constant 0 : i32
    return %c0_i32, %c0_i32_0 : i32, i32
  }
  func.func @transform_3(%arg0: i32) -> (i32, i32) {
    %c0_i32 = arith.constant 0 : i32
    %c0_i32_0 = arith.constant 0 : i32
    %c0_i32_1 = arith.constant 0 : i32
    return %c0_i32, %c0_i32_0 : i32, i32
  }
  func.func @transform_4(%arg0: i32) -> (i32, i32) {
    %c0_i32 = arith.constant 0 : i32
    %c0_i32_0 = arith.constant 0 : i32
    %c0_i32_1 = arith.constant 0 : i32
    return %c0_i32, %c0_i32_0 : i32, i32
  }
  func.func @transform_5(%arg0: i32) -> (i32, i32) {
    %c0_i32 = arith.constant 0 : i32
    %c0_i32_0 = arith.constant 0 : i32
    %c0_i32_1 = arith.constant 0 : i32
    return %c0_i32, %c0_i32_0 : i32, i32
  }
  func.func @transform_6(%arg0: i32) -> (i32, i32) {
    %c0_i32 = arith.constant 0 : i32
    %c0_i32_0 = arith.constant 0 : i32
    %c0_i32_1 = arith.constant 0 : i32
    return %c0_i32, %c0_i32_0 : i32, i32
  }
  func.func @transform_7(%arg0: i32) -> (i32, i32, i32) {
    %c0_i32 = arith.constant 0 : i32
    %c0_i32_0 = arith.constant 0 : i32
    %c0_i32_1 = arith.constant 0 : i32
    return %arg0, %c0_i32, %c0_i32_0 : i32, i32, i32
  }
}

</mosaic_0001>

<llo_original>
// kernel: simple_cnn_with_se.3
$region0: #{simple_cnn_with_se.3}
  #allocation0 [shape = 'u32[]', space=smem, size = 0x4, offset = 0x4, fixed_abs, tag = 'smem constant byte address 0x4 - core index']
  #allocation1 [shape = 'u32[72,128]{1,0:T(1,128)}', space=vmem, size = 0x9000, scoped, tag = 'internal scratch']
  %s0 = inlined_call_operand.vmem [shape: bf16[2,256,27], index: 0, kind: input, shape index: {}]
  %s1 = inlined_call_operand.vmem [shape: bf16[27,64], index: 1, kind: input, shape index: {}]
  %s2 = inlined_call_operand.vmem [shape: bf16[2,256,64], index: 2, kind: output, shape index: {0}]
  %s3 = inlined_call_operand.vmem [shape: f32[2,1,64], index: 3, kind: output, shape index: {1}]
  %s4 = inlined_call_operand.vmem [shape: f32[2,1,64], index: 4, kind: output, shape index: {2}]
  %5 = xla_tuple %s2, %s3, %s4
  %s6 = sld [smem:[#allocation0]]
  $region57: #{simple_cnn_with_se.3} parent=0
    _
  %s8 = ssub.s32 1, %s6
  %s9 = scalar_select 0, %s8, %s6
  loop: start=0, step=1, limit=4
  $region2: #{simple_cnn_with_se.3} parent=0 // loop_pre_header
    _
  $region3: #{simple_cnn_with_se.3} parent=0 // loop_header
    %s11 = sphi 0, %s15
    %p12 = scmp.ge.s32.totalorder %s11, 4
    %s21 = sphi 0, %s23
    %s24 = sphi 0, %s21
    %s25 = sphi 0, %s24
    %s41 = sphi 0, %s25
    %s45 = sphi 0, %s45
    %s47 = sphi 0, %s45
    %s48 = sphi 0, %s47
    %s62 = sphi 0, %s48
    %s68 = sphi 0, %s70
    %s71 = sphi 0, %s68
    %s72 = sphi 0, %s71
    %s88 = sphi 0, %s72
    %s94 = sphi 0, %s96
    %s97 = sphi 0, %s94
    %s98 = sphi 0, %s97
    %s114 = sphi 0, %s98
    %s120 = sphi 0, %s122
    %s123 = sphi 0, %s120
    %s124 = sphi 0, %s123
    %s140 = sphi 0, %s124
  $region4: #{simple_cnn_with_se.3} parent=0 // loop_header_branch
    %14 = sbr.rel (%p12) target = $region8
  $region5: #{simple_cnn_with_se.3} parent=0 // loop_body
    %s16 = ssub.s32 %s11, 1
    %s17 = ssub.s32 %s11, 2
    %s18 = sadd.s32 %s11, 1
    %s19 = ssub.s32 %s11, %s18
    %p20 = scmp.eq.s32.totalorder %s19, 0
    %s22 = sadd.s32 %s21, 1
    %s23 = scalar_select %p20, %s21, %s22
    %p26 = pneg %p20
    %p27 = scmp.eq.s32.totalorder %s11, 1
    %p28 = por %p26, %p27
    %p29 = scmp.ne.s32.totalorder %s21, %s24
    %p30 = scmp.eq.s32.totalorder %s11, 0
    %p31 = por %p29, %p30
    %p32 = scmp.ne.s32.totalorder %s21, %s24
    %p33 = scmp.eq.s32.totalorder %s16, 1
    %p34 = por %p32, %p33
    %p35 = scmp.ne.s32.totalorder %s24, %s25
    %p36 = scmp.eq.s32.totalorder %s16, 0
    %p37 = por %p35, %p36
    %p38 = scmp.ne.s32.totalorder %s24, %s25
    %p39 = scmp.eq.s32.totalorder %s17, 1
    %p40 = por %p38, %p39
    %p42 = scmp.ne.s32.totalorder %s25, %s41
    %p43 = scmp.eq.s32.totalorder %s17, 0
    %p44 = por %p42, %p43
    %s46 = sadd.s32 %s45, 1
    %p49 = scmp.eq.s32.totalorder %s11, 1
    %p50 = scmp.ne.s32.totalorder %s45, %s47
    %p51 = scmp.eq.s32.totalorder %s11, 0
    %p52 = por %p50, %p51
    %p53 = scmp.ne.s32.totalorder %s45, %s47
    %p54 = scmp.eq.s32.totalorder %s16, 1
    %p55 = por %p53, %p54
    %p56 = scmp.ne.s32.totalorder %s47, %s48
    %p57 = scmp.eq.s32.totalorder %s16, 0
    %p58 = por %p56, %p57
    %p59 = scmp.ne.s32.totalorder %s47, %s48
    %p60 = scmp.eq.s32.totalorder %s17, 1
    %p61 = por %p59, %p60
    %p63 = scmp.ne.s32.totalorder %s48, %s62
    %p64 = scmp.eq.s32.totalorder %s17, 0
    %p65 = por %p63, %p64
    %s66 = ssub.s32 %s11, %s18
    %p67 = scmp.eq.s32.totalorder %s66, 0
    %s69 = sadd.s32 %s68, 1
    %s70 = scalar_select %p67, %s68, %s69
    %p73 = pneg %p67
    %p74 = scmp.eq.s32.totalorder %s11, 1
    %p75 = por %p73, %p74
    %p76 = scmp.ne.s32.totalorder %s68, %s71
    %p77 = scmp.eq.s32.totalorder %s11, 0
    %p78 = por %p76, %p77
    %p79 = scmp.ne.s32.totalorder %s68, %s71
    %p80 = scmp.eq.s32.totalorder %s16, 1
    %p81 = por %p79, %p80
    %p82 = scmp.ne.s32.totalorder %s71, %s72
    %p83 = scmp.eq.s32.totalorder %s16, 0
    %p84 = por %p82, %p83
    %p85 = scmp.ne.s32.totalorder %s71, %s72
    %p86 = scmp.eq.s32.totalorder %s17, 1
    %p87 = por %p85, %p86
    %p89 = scmp.ne.s32.totalorder %s72, %s88
    %p90 = scmp.eq.s32.totalorder %s17, 0
    %p91 = por %p89, %p90
    %s92 = ssub.s32 %s11, %s18
    %p93 = scmp.eq.s32.totalorder %s92, 0
    %s95 = sadd.s32 %s94, 1
    %s96 = scalar_select %p93, %s94, %s95
    %p99 = pneg %p93
    %p100 = scmp.eq.s32.totalorder %s11, 1
    %p101 = por %p99, %p100
    %p102 = scmp.ne.s32.totalorder %s94, %s97
    %p103 = scmp.eq.s32.totalorder %s11, 0
    %p104 = por %p102, %p103
    %p105 = scmp.ne.s32.totalorder %s94, %s97
    %p106 = scmp.eq.s32.totalorder %s16, 1
    %p107 = por %p105, %p106
    %p108 = scmp.ne.s32.totalorder %s97, %s98
    %p109 = scmp.eq.s32.totalorder %s16, 0
    %p110 = por %p108, %p109
    %p111 = scmp.ne.s32.totalorder %s97, %s98
    %p112 = scmp.eq.s32.totalorder %s17, 1
    %p113 = por %p111, %p112
    %p115 = scmp.ne.s32.totalorder %s98, %s114
    %p116 = scmp.eq.s32.totalorder %s17, 0
    %p117 = por %p115, %p116
    %s118 = ssub.s32 %s11, %s18
    %p119 = scmp.eq.s32.totalorder %s118, 0
    %s121 = sadd.s32 %s120, 1
    %s122 = scalar_select %p119, %s120, %s121
    %p125 = pneg %p119
    %p126 = scmp.eq.s32.totalorder %s11, 1
    %p127 = por %p125, %p126
    %p128 = scmp.ne.s32.totalorder %s120, %s123
    %p129 = scmp.eq.s32.totalorder %s11, 0
    %p130 = por %p128, %p129
    %p131 = scmp.ne.s32.totalorder %s120, %s123
    %p132 = scmp.eq.s32.totalorder %s16, 1
    %p133 = por %p131, %p132
    %p134 = scmp.ne.s32.totalorder %s123, %s124
    %p135 = scmp.eq.s32.totalorder %s16, 0
    %p136 = por %p134, %p135
    %p137 = scmp.ne.s32.totalorder %s123, %s124
    %p138 = scmp.eq.s32.totalorder %s17, 1
    %p139 = por %p137, %p138
    %p141 = scmp.ne.s32.totalorder %s124, %s140
    %p142 = scmp.eq.s32.totalorder %s17, 0
    %p143 = por %p141, %p142
    %p144 = scmp.le.s32.totalorder 1, %s11
    %p145 = scmp.lt.s32.totalorder %s11, 3
    %p146 = pnand %p144, %p145
    %p147 = pneg %p146
    // Predicated region
    $region9: #{simple_cnn_with_se.3} parent=5 // pred_check
      _
    $region10: #{simple_cnn_with_se.3} parent=5 // pred_check_branch
      %149 = sbr.rel (%p146) target = $region12
    $region11: #{simple_cnn_with_se.3} parent=5 // pred_region
      %s150 = ssub.s32 %s11, 1
      // Predicated region
      $region13: #{simple_cnn_with_se.3} parent=11 // pred_check
        %p151 = pneg %p58
      $region14: #{simple_cnn_with_se.3} parent=11 // pred_check_branch
        %153 = sbr.rel (%p151) target = $region16
      $region15: #{simple_cnn_with_se.3} parent=11 // pred_region
        _
      $region16: #{simple_cnn_with_se.3} parent=11 // pred_fallthru
        _
    $region12: #{simple_cnn_with_se.3} parent=5 // pred_fallthru
      _
    %p154 = scmp.lt.s32.totalorder %s11, 2
    // Predicated region
    $region17: #{simple_cnn_with_se.3} parent=5 // pred_check
      %p155 = pneg %p154
    $region18: #{simple_cnn_with_se.3} parent=5 // pred_check_branch
      %157 = sbr.rel (%p155) target = $region20
    $region19: #{simple_cnn_with_se.3} parent=5 // pred_region
      // Predicated region
      $region21: #{simple_cnn_with_se.3} parent=19 // pred_check
        %p158 = pneg %p31
      $region22: #{simple_cnn_with_se.3} parent=19 // pred_check_branch
        %160 = sbr.rel (%p158) target = $region24
      $region23: #{simple_cnn_with_se.3} parent=19 // pred_region
        %p161 = scmp.lt.s32.totalorder %s11, 1
        %s162 = scalar_select %p161, %s11, 1
        %s163 = smul.addr %s162, 32
        %s164 = smul.addr %s163, 4
        %s165 = scalar_lea.vmem %s0, %s164
      $region24: #{simple_cnn_with_se.3} parent=19 // pred_fallthru
        _
    $region20: #{simple_cnn_with_se.3} parent=5 // pred_fallthru
      _
    %p166 = scmp.le.s32.totalorder 1, %s11
    %p167 = scmp.lt.s32.totalorder %s11, 3
    %p168 = pnand %p166, %p167
    %p169 = pneg %p168
    // Predicated region
    $region25: #{simple_cnn_with_se.3} parent=5 // pred_check
      _
    $region26: #{simple_cnn_with_se.3} parent=5 // pred_check_branch
      %171 = sbr.rel (%p168) target = $region28
    $region27: #{simple_cnn_with_se.3} parent=5 // pred_region
      %s172 = ssub.s32 %s11, 1
      %p173 = scmp.lt.s32.totalorder %s16, 1
      %s174 = scalar_select %p173, %s16, 1
      %s175 = smul.addr %s174, 32
      %s176 = smul.addr %s175, 4
      %s177 = scalar_lea.vmem %s0, %s176
      %p178 = pneg %p37
      %p179 = pneg %p34
      %p180 = pneg %p58
      %p181 = pneg %p55
      %p182 = pneg %p84
      %p183 = pneg %p81
      %p184 = scmp.lt.s32.totalorder %s16, 1
      %s185 = scalar_select %p184, %s16, 1
      %s186 = smul.addr %s185, 32
      %s187 = smul.addr %s186, 4
      %s188 = scalar_lea.vmem %s2, %s187
      %p189 = pneg %p110
      %p190 = pneg %p107
      %p191 = scmp.lt.s32.totalorder %s16, 1
      %s192 = scalar_select %p191, %s16, 1
      %s193 = scalar_lea.vmem %s3, %s192
      %p194 = pneg %p136
      %p195 = pneg %p133
      %p196 = scmp.lt.s32.totalorder %s16, 1
      %s197 = scalar_select %p196, %s16, 1
      %s198 = scalar_lea.vmem %s4, %s197
      %p199 = scmp.lt.s32.totalorder %s16, 1
      %s200 = scalar_select %p199, %s16, 1
      %s201 = smul.addr %s200, 32
      %s202 = smul.addr %s201, 4
      %s203 = scalar_lea.vmem %s0, %s202
      %p204 = scmp.lt.s32.totalorder %s16, 1
      %s205 = scalar_select %p204, %s16, 1
      %s206 = smul.addr %s205, 32
      %s207 = smul.addr %s206, 4
      %s208 = scalar_lea.vmem %s2, %s207
      %p209 = scmp.lt.s32.totalorder %s16, 1
      %s210 = scalar_select %p209, %s16, 1
      %s211 = scalar_lea.vmem %s3, %s210
      %p212 = scmp.lt.s32.totalorder %s16, 1
      %s213 = scalar_select %p212, %s16, 1
      %s214 = scalar_lea.vmem %s4, %s213
      %v216 = vld [vmem:[%s203] sm:$0xf]
      %v217 = vld [vmem:[%s203 + $0x4] sm:$0xf]
      %v218 = vld [vmem:[%s203 + $0x8] sm:$0xf]
      %v219 = vld [vmem:[%s203 + $0xc] sm:$0xf]
      %v220 = vld [vmem:[%s203 + $0x10] sm:$0xf]
      %v221 = vld [vmem:[%s203 + $0x14] sm:$0xf]
      %v222 = vld [vmem:[%s203 + $0x18] sm:$0xf]
      %v223 = vld [vmem:[%s203 + $0x1c] sm:$0xf]
      %v224 = vld [vmem:[%s203 + $0x20] sm:$0xf]
      %v225 = vld [vmem:[%s203 + $0x24] sm:$0xf]
      %v226 = vld [vmem:[%s203 + $0x28] sm:$0xf]
      %v227 = vld [vmem:[%s203 + $0x2c] sm:$0xf]
      %v228 = vld [vmem:[%s203 + $0x30] sm:$0xf]
      %v229 = vld [vmem:[%s203 + $0x34] sm:$0xf]
      %v230 = vld [vmem:[%s203 + $0x38] sm:$0xf]
      %v231 = vld [vmem:[%s203 + $0x3c] sm:$0xf]
      %v232 = vld [vmem:[%s203 + $0x40] sm:$0xf]
      %v233 = vld [vmem:[%s203 + $0x44] sm:$0xf]
      %v234 = vld [vmem:[%s203 + $0x48] sm:$0xf]
      %v235 = vld [vmem:[%s203 + $0x4c] sm:$0xf]
      %v236 = vld [vmem:[%s203 + $0x50] sm:$0xf]
      %v237 = vld [vmem:[%s203 + $0x54] sm:$0xf]
      %v238 = vld [vmem:[%s203 + $0x58] sm:$0xf]
      %v239 = vld [vmem:[%s203 + $0x5c] sm:$0xf]
      %v240 = vld [vmem:[%s203 + $0x60] sm:$0xf]
      %v241 = vld [vmem:[%s203 + $0x64] sm:$0xf]
      %v242 = vld [vmem:[%s203 + $0x68] sm:$0xf]
      %v243 = vld [vmem:[%s203 + $0x6c] sm:$0xf]
      %v244 = vld [vmem:[%s203 + $0x70] sm:$0xf]
      %v245 = vld [vmem:[%s203 + $0x74] sm:$0xf]
      %v246 = vld [vmem:[%s203 + $0x78] sm:$0xf]
      %v247 = vld [vmem:[%s203 + $0x7c] sm:$0xf]
      %v248 = vld [vmem:[%s1] sm:$0xf]
      %v249 = vld [vmem:[%s1 + $0x4] sm:$0xf]
      %v250 = vld [vmem:[%s1 + $0x8] sm:$0xf]
      %v251 = vld [vmem:[%s1 + $0xc] sm:$0x3]
      %v284 = vunpack.c.l.b16 %v216
      %v285 = vunpack.c.l.b16 %v217
      %v286 = vunpack.c.l.b16 %v218
      %v287 = vunpack.c.l.b16 %v219
      %v288 = vunpack.c.l.b16 %v220
      %v289 = vunpack.c.l.b16 %v221
      %v290 = vunpack.c.l.b16 %v222
      %v291 = vunpack.c.l.b16 %v223
      %v292 = vunpack.c.l.b16 %v224
      %v293 = vunpack.c.l.b16 %v225
      %v294 = vunpack.c.l.b16 %v226
      %v295 = vunpack.c.l.b16 %v227
      %v296 = vunpack.c.l.b16 %v228
      %v297 = vunpack.c.l.b16 %v229
      %v298 = vunpack.c.l.b16 %v230
      %v299 = vunpack.c.l.b16 %v231
      %v300 = vunpack.c.l.b16 %v232
      %v301 = vunpack.c.l.b16 %v233
      %v302 = vunpack.c.l.b16 %v234
      %v303 = vunpack.c.l.b16 %v235
      %v304 = vunpack.c.l.b16 %v236
      %v305 = vunpack.c.l.b16 %v237
      %v306 = vunpack.c.l.b16 %v238
      %v307 = vunpack.c.l.b16 %v239
      %v308 = vunpack.c.l.b16 %v240
      %v309 = vunpack.c.l.b16 %v241
      %v310 = vunpack.c.l.b16 %v242
      %v311 = vunpack.c.l.b16 %v243
      %v312 = vunpack.c.l.b16 %v244
      %v313 = vunpack.c.l.b16 %v245
      %v314 = vunpack.c.l.b16 %v246
      %v315 = vunpack.c.l.b16 %v247
      %v316 = vpack.c.b16 %v285, %v284
      %v317 = vpack.c.b16 %v287, %v286
      %v318 = vpack.c.b16 %v289, %v288
      %v319 = vpack.c.b16 %v291, %v290
      %v320 = vpack.c.b16 %v293, %v292
      %v321 = vpack.c.b16 %v295, %v294
      %v322 = vpack.c.b16 %v297, %v296
      %v323 = vpack.c.b16 %v299, %v298
      %v324 = vpack.c.b16 %v301, %v300
      %v325 = vpack.c.b16 %v303, %v302
      %v326 = vpack.c.b16 %v305, %v304
      %v327 = vpack.c.b16 %v307, %v306
      %v328 = vpack.c.b16 %v309, %v308
      %v329 = vpack.c.b16 %v311, %v310
      %v330 = vpack.c.b16 %v313, %v312
      %v331 = vpack.c.b16 %v315, %v314
      %v336 = vunpack.c.l.b16 %v248
      %v337 = vunpack.c.l.b16 %v249
      %v338 = vunpack.c.l.b16 %v250
      %v339 = vunpack.c.l.b16 %v251
      %v340 = vpack.c.b16 %v337, %v336
      %v341 = vpack.c.b16 %v339, %v338
      %vm343 = vcmask 220160
      %v345 = vsel %vm343, %v316, 0
      %v348 = vsel %vm343, %v317, 0
      %v351 = vsel %vm343, %v318, 0
      %v354 = vsel %vm343, %v319, 0
      %v357 = vsel %vm343, %v320, 0
      %v360 = vsel %vm343, %v321, 0
      %v363 = vsel %vm343, %v322, 0
      %v366 = vsel %vm343, %v323, 0
      %v369 = vsel %vm343, %v324, 0
      %v372 = vsel %vm343, %v325, 0
      %v375 = vsel %vm343, %v326, 0
      %v378 = vsel %vm343, %v327, 0
      %v381 = vsel %vm343, %v328, 0
      %v384 = vsel %vm343, %v329, 0
      %v387 = vsel %vm343, %v330, 0
      %v390 = vsel %vm343, %v331, 0
      %vm392 = vcmask 1044480
      %vm393 = vcmask 1045504
      %v394 = vsel %vm392, 4294967295, 65535
      %v395 = vsel %vm393, %v394, 0
      %v397 = vand.u32 %v341, %v395
      %399 = vmatpush.bf16.msra.mxu0 0
      %400 = vmatpush.bf16.msra.mxu0 0
      %401 = vmatpush.bf16.msra.mxu0 0
      %402 = vmatpush.bf16.msra.mxu0 0
      %403 = vmatpush.bf16.msra.mxu0 0
      %404 = vmatpush.bf16.msra.mxu0 0
      %405 = vmatpush.bf16.msra.mxu0 %v397
      %406 = vmatpush.bf16.msra.mxu0 %v340
      %407 = vmatmul.bf16.gmra.mxu0 %v345
      %v408 = vpop.f32.mrf.mxu0
      %v409 = vadd.f32 0.0, %v408
      %v410 = vpop.f32.mrf.mxu0
      %v411 = vadd.f32 0.0, %v410
      %412 = vmatmul.bf16.gmra.mxu0 %v348
      %v413 = vpop.f32.mrf.mxu0
      %v414 = vadd.f32 0.0, %v413
      %v415 = vpop.f32.mrf.mxu0
      %v416 = vadd.f32 0.0, %v415
      %417 = vmatmul.bf16.gmra.mxu0 %v351
      %v418 = vpop.f32.mrf.mxu0
      %v419 = vadd.f32 0.0, %v418
      %v420 = vpop.f32.mrf.mxu0
      %v421 = vadd.f32 0.0, %v420
      %422 = vmatmul.bf16.gmra.mxu0 %v354
      %v423 = vpop.f32.mrf.mxu0
      %v424 = vadd.f32 0.0, %v423
      %v425 = vpop.f32.mrf.mxu0
      %v426 = vadd.f32 0.0, %v425
      %427 = vmatmul.bf16.gmra.mxu0 %v357
      %v428 = vpop.f32.mrf.mxu0
      %v429 = vadd.f32 0.0, %v428
      %v430 = vpop.f32.mrf.mxu0
      %v431 = vadd.f32 0.0, %v430
      %432 = vmatmul.bf16.gmra.mxu0 %v360
      %v433 = vpop.f32.mrf.mxu0
      %v434 = vadd.f32 0.0, %v433
      %v435 = vpop.f32.mrf.mxu0
      %v436 = vadd.f32 0.0, %v435
      %437 = vmatmul.bf16.gmra.mxu0 %v363
      %v438 = vpop.f32.mrf.mxu0
      %v439 = vadd.f32 0.0, %v438
      %v440 = vpop.f32.mrf.mxu0
      %v441 = vadd.f32 0.0, %v440
      %442 = vmatmul.bf16.gmra.mxu0 %v366
      %v443 = vpop.f32.mrf.mxu0
      %v444 = vadd.f32 0.0, %v443
      %v445 = vpop.f32.mrf.mxu0
      %v446 = vadd.f32 0.0, %v445
      %447 = vmatmul.bf16.gmra.mxu0 %v369
      %v448 = vpop.f32.mrf.mxu0
      %v449 = vadd.f32 0.0, %v448
      %v450 = vpop.f32.mrf.mxu0
      %v451 = vadd.f32 0.0, %v450
      %452 = vmatmul.bf16.gmra.mxu0 %v372
      %v453 = vpop.f32.mrf.mxu0
      %v454 = vadd.f32 0.0, %v453
      %v455 = vpop.f32.mrf.mxu0
      %v456 = vadd.f32 0.0, %v455
      %457 = vmatmul.bf16.gmra.mxu0 %v375
      %v458 = vpop.f32.mrf.mxu0
      %v459 = vadd.f32 0.0, %v458
      %v460 = vpop.f32.mrf.mxu0
      %v461 = vadd.f32 0.0, %v460
      %462 = vmatmul.bf16.gmra.mxu0 %v378
      %v463 = vpop.f32.mrf.mxu0
      %v464 = vadd.f32 0.0, %v463
      %v465 = vpop.f32.mrf.mxu0
      %v466 = vadd.f32 0.0, %v465
      %467 = vmatmul.bf16.gmra.mxu0 %v381
      %v468 = vpop.f32.mrf.mxu0
      %v469 = vadd.f32 0.0, %v468
      %v470 = vpop.f32.mrf.mxu0
      %v471 = vadd.f32 0.0, %v470
      %472 = vmatmul.bf16.gmra.mxu0 %v384
      %v473 = vpop.f32.mrf.mxu0
      %v474 = vadd.f32 0.0, %v473
      %v475 = vpop.f32.mrf.mxu0
      %v476 = vadd.f32 0.0, %v475
      %477 = vmatmul.bf16.gmra.mxu0 %v387
      %v478 = vpop.f32.mrf.mxu0
      %v479 = vadd.f32 0.0, %v478
      %v480 = vpop.f32.mrf.mxu0
      %v481 = vadd.f32 0.0, %v480
      %482 = vmatmul.bf16.gmra.mxu0 %v390
      %v483 = vpop.f32.mrf.mxu0
      %v484 = vadd.f32 0.0, %v483
      %v485 = vpop.f32.mrf.mxu0
      %v486 = vadd.f32 0.0, %v485
      %487 = vdwg.mxu0
      %v488 = vpack.c.bf16 %v409, %v409
      %v489 = vpack.c.bf16 %v411, %v411
      %v490 = vpack.c.bf16 %v414, %v414
      %v491 = vpack.c.bf16 %v416, %v416
      %v492 = vpack.c.bf16 %v419, %v419
      %v493 = vpack.c.bf16 %v421, %v421
      %v494 = vpack.c.bf16 %v424, %v424
      %v495 = vpack.c.bf16 %v426, %v426
      %v496 = vpack.c.bf16 %v429, %v429
      %v497 = vpack.c.bf16 %v431, %v431
      %v498 = vpack.c.bf16 %v434, %v434
      %v499 = vpack.c.bf16 %v436, %v436
      %v500 = vpack.c.bf16 %v439, %v439
      %v501 = vpack.c.bf16 %v441, %v441
      %v502 = vpack.c.bf16 %v444, %v444
      %v503 = vpack.c.bf16 %v446, %v446
      %v504 = vpack.c.bf16 %v449, %v449
      %v505 = vpack.c.bf16 %v451, %v451
      %v506 = vpack.c.bf16 %v454, %v454
      %v507 = vpack.c.bf16 %v456, %v456
      %v508 = vpack.c.bf16 %v459, %v459
      %v509 = vpack.c.bf16 %v461, %v461
      %v510 = vpack.c.bf16 %v464, %v464
      %v511 = vpack.c.bf16 %v466, %v466
      %v512 = vpack.c.bf16 %v469, %v469
      %v513 = vpack.c.bf16 %v471, %v471
      %v514 = vpack.c.bf16 %v474, %v474
      %v515 = vpack.c.bf16 %v476, %v476
      %v516 = vpack.c.bf16 %v479, %v479
      %v517 = vpack.c.bf16 %v481, %v481
      %v518 = vpack.c.bf16 %v484, %v484
      %v519 = vpack.c.bf16 %v486, %v486
      %vm520 = vcmask 519168
      %521 = vst.msk [vmem:[%s208] sm:$0xf] %vm520, %v488
      %522 = vst.msk [vmem:[%s208 + $0x4] sm:$0xf] %vm520, %v489
      %523 = vst.msk [vmem:[%s208 + $0x8] sm:$0xf] %vm520, %v490
      %524 = vst.msk [vmem:[%s208 + $0xc] sm:$0xf] %vm520, %v491
      %525 = vst.msk [vmem:[%s208 + $0x10] sm:$0xf] %vm520, %v492
      %526 = vst.msk [vmem:[%s208 + $0x14] sm:$0xf] %vm520, %v493
      %527 = vst.msk [vmem:[%s208 + $0x18] sm:$0xf] %vm520, %v494
      %528 = vst.msk [vmem:[%s208 + $0x1c] sm:$0xf] %vm520, %v495
      %529 = vst.msk [vmem:[%s208 + $0x20] sm:$0xf] %vm520, %v496
      %530 = vst.msk [vmem:[%s208 + $0x24] sm:$0xf] %vm520, %v497
      %531 = vst.msk [vmem:[%s208 + $0x28] sm:$0xf] %vm520, %v498
      %532 = vst.msk [vmem:[%s208 + $0x2c] sm:$0xf] %vm520, %v499
      %533 = vst.msk [vmem:[%s208 + $0x30] sm:$0xf] %vm520, %v500
      %534 = vst.msk [vmem:[%s208 + $0x34] sm:$0xf] %vm520, %v501
      %535 = vst.msk [vmem:[%s208 + $0x38] sm:$0xf] %vm520, %v502
      %536 = vst.msk [vmem:[%s208 + $0x3c] sm:$0xf] %vm520, %v503
      %537 = vst.msk [vmem:[%s208 + $0x40] sm:$0xf] %vm520, %v504
      %538 = vst.msk [vmem:[%s208 + $0x44] sm:$0xf] %vm520, %v505
      %539 = vst.msk [vmem:[%s208 + $0x48] sm:$0xf] %vm520, %v506
      %540 = vst.msk [vmem:[%s208 + $0x4c] sm:$0xf] %vm520, %v507
      %541 = vst.msk [vmem:[%s208 + $0x50] sm:$0xf] %vm520, %v508
      %542 = vst.msk [vmem:[%s208 + $0x54] sm:$0xf] %vm520, %v509
      %543 = vst.msk [vmem:[%s208 + $0x58] sm:$0xf] %vm520, %v510
      %544 = vst.msk [vmem:[%s208 + $0x5c] sm:$0xf] %vm520, %v511
      %545 = vst.msk [vmem:[%s208 + $0x60] sm:$0xf] %vm520, %v512
      %546 = vst.msk [vmem:[%s208 + $0x64] sm:$0xf] %vm520, %v513
      %547 = vst.msk [vmem:[%s208 + $0x68] sm:$0xf] %vm520, %v514
      %548 = vst.msk [vmem:[%s208 + $0x6c] sm:$0xf] %vm520, %v515
      %549 = vst.msk [vmem:[%s208 + $0x70] sm:$0xf] %vm520, %v516
      %550 = vst.msk [vmem:[%s208 + $0x74] sm:$0xf] %vm520, %v517
      %551 = vst.msk [vmem:[%s208 + $0x78] sm:$0xf] %vm520, %v518
      %552 = vst.msk [vmem:[%s208 + $0x7c] sm:$0xf] %vm520, %v519
      %vm553 = vcmask 523264
      %v554 = vsel %vm553, %v409, 0.0
      %v555 = vsel %vm553, %v411, 0.0
      %v556 = vadd.f32 %v554, %v555
      %v557 = vsel %vm553, %v414, 0.0
      %v558 = vadd.f32 %v556, %v557
      %v559 = vsel %vm553, %v416, 0.0
      %v560 = vadd.f32 %v558, %v559
      %v561 = vsel %vm553, %v419, 0.0
      %v562 = vadd.f32 %v560, %v561
      %v563 = vsel %vm553, %v421, 0.0
      %v564 = vadd.f32 %v562, %v563
      %v565 = vsel %vm553, %v424, 0.0
      %v566 = vadd.f32 %v564, %v565
      %v567 = vsel %vm553, %v426, 0.0
      %v568 = vadd.f32 %v566, %v567
      %v569 = vsel %vm553, %v429, 0.0
      %v570 = vadd.f32 %v568, %v569
      %v571 = vsel %vm553, %v431, 0.0
      %v572 = vadd.f32 %v570, %v571
      %v573 = vsel %vm553, %v434, 0.0
      %v574 = vadd.f32 %v572, %v573
      %v575 = vsel %vm553, %v436, 0.0
      %v576 = vadd.f32 %v574, %v575
      %v577 = vsel %vm553, %v439, 0.0
      %v578 = vadd.f32 %v576, %v577
      %v579 = vsel %vm553, %v441, 0.0
      %v580 = vadd.f32 %v578, %v579
      %v581 = vsel %vm553, %v444, 0.0
      %v582 = vadd.f32 %v580, %v581
      %v583 = vsel %vm553, %v446, 0.0
      %v584 = vadd.f32 %v582, %v583
      %v585 = vsel %vm553, %v449, 0.0
      %v586 = vadd.f32 %v584, %v585
      %v587 = vsel %vm553, %v451, 0.0
      %v588 = vadd.f32 %v586, %v587
      %v589 = vsel %vm553, %v454, 0.0
      %v590 = vadd.f32 %v588, %v589
      %v591 = vsel %vm553, %v456, 0.0
      %v592 = vadd.f32 %v590, %v591
      %v593 = vsel %vm553, %v459, 0.0
      %v594 = vadd.f32 %v592, %v593
      %v595 = vsel %vm553, %v461, 0.0
      %v596 = vadd.f32 %v594, %v595
      %v597 = vsel %vm553, %v464, 0.0
      %v598 = vadd.f32 %v596, %v597
      %v599 = vsel %vm553, %v466, 0.0
      %v600 = vadd.f32 %v598, %v599
      %v601 = vsel %vm553, %v469, 0.0
      %v602 = vadd.f32 %v600, %v601
      %v603 = vsel %vm553, %v471, 0.0
      %v604 = vadd.f32 %v602, %v603
      %v605 = vsel %vm553, %v474, 0.0
      %v606 = vadd.f32 %v604, %v605
      %v607 = vsel %vm553, %v476, 0.0
      %v608 = vadd.f32 %v606, %v607
      %v609 = vsel %vm553, %v479, 0.0
      %v610 = vadd.f32 %v608, %v609
      %v611 = vsel %vm553, %v481, 0.0
      %v612 = vadd.f32 %v610, %v611
      %v613 = vsel %vm553, %v484, 0.0
      %v614 = vadd.f32 %v612, %v613
      %v615 = vsel %vm553, %v486, 0.0
      %v616 = vadd.f32 %v614, %v615
      %v617 = vrot.slane %v616, 4
      %v618 = vadd.f32 %v616, %v617
      %v619 = vrot.slane %v618, 2
      %v620 = vadd.f32 %v618, %v619
      %v621 = vrot.slane %v620, 1
      %v622 = vadd.f32 %v620, %v621
      %v623 = vrcp.pop 256.0
      %v624 = vmul.f32 256.0, %v623
      %v625 = vsub.f32 1.0, %v624
      %v626 = vmul.f32 %v623, %v625
      %v627 = vadd.f32 %v623, %v626
      %vm628 = vweird.f32 %v623
      %v629 = vsel %vm628, %v623, %v627
      %v630 = vmul.f32 %v622, %v629
      %vm631 = vcmask 516096
      %632 = vst.msk [vmem:[%s211] sm:$0x1] %vm631, %v630
      %v633 = vsub.f32 %v409, %v630
      %v634 = vsub.f32 %v411, %v630
      %v635 = vsub.f32 %v414, %v630
      %v636 = vsub.f32 %v416, %v630
      %v637 = vsub.f32 %v419, %v630
      %v638 = vsub.f32 %v421, %v630
      %v639 = vsub.f32 %v424, %v630
      %v640 = vsub.f32 %v426, %v630
      %v641 = vsub.f32 %v429, %v630
      %v642 = vsub.f32 %v431, %v630
      %v643 = vsub.f32 %v434, %v630
      %v644 = vsub.f32 %v436, %v630
      %v645 = vsub.f32 %v439, %v630
      %v646 = vsub.f32 %v441, %v630
      %v647 = vsub.f32 %v444, %v630
      %v648 = vsub.f32 %v446, %v630
      %v649 = vsub.f32 %v449, %v630
      %v650 = vsub.f32 %v451, %v630
      %v651 = vsub.f32 %v454, %v630
      %v652 = vsub.f32 %v456, %v630
      %v653 = vsub.f32 %v459, %v630
      %v654 = vsub.f32 %v461, %v630
      %v655 = vsub.f32 %v464, %v630
      %v656 = vsub.f32 %v466, %v630
      %v657 = vsub.f32 %v469, %v630
      %v658 = vsub.f32 %v471, %v630
      %v659 = vsub.f32 %v474, %v630
      %v660 = vsub.f32 %v476, %v630
      %v661 = vsub.f32 %v479, %v630
      %v662 = vsub.f32 %v481, %v630
      %v663 = vsub.f32 %v484, %v630
      %v664 = vsub.f32 %v486, %v630
      %v665 = vmul.f32 %v633, %v633
      %v666 = vmul.f32 %v634, %v634
      %v667 = vmul.f32 %v635, %v635
      %v668 = vmul.f32 %v636, %v636
      %v669 = vmul.f32 %v637, %v637
      %v670 = vmul.f32 %v638, %v638
      %v671 = vmul.f32 %v639, %v639
      %v672 = vmul.f32 %v640, %v640
      %v673 = vmul.f32 %v641, %v641
      %v674 = vmul.f32 %v642, %v642
      %v675 = vmul.f32 %v643, %v643
      %v676 = vmul.f32 %v644, %v644
      %v677 = vmul.f32 %v645, %v645
      %v678 = vmul.f32 %v646, %v646
      %v679 = vmul.f32 %v647, %v647
      %v680 = vmul.f32 %v648, %v648
      %v681 = vmul.f32 %v649, %v649
      %v682 = vmul.f32 %v650, %v650
      %v683 = vmul.f32 %v651, %v651
      %v684 = vmul.f32 %v652, %v652
      %v685 = vmul.f32 %v653, %v653
      %v686 = vmul.f32 %v654, %v654
      %v687 = vmul.f32 %v655, %v655
      %v688 = vmul.f32 %v656, %v656
      %v689 = vmul.f32 %v657, %v657
      %v690 = vmul.f32 %v658, %v658
      %v691 = vmul.f32 %v659, %v659
      %v692 = vmul.f32 %v660, %v660
      %v693 = vmul.f32 %v661, %v661
      %v694 = vmul.f32 %v662, %v662
      %v695 = vmul.f32 %v663, %v663
      %v696 = vmul.f32 %v664, %v664
      %v697 = vsel %vm553, %v665, 0.0
      %v698 = vsel %vm553, %v666, 0.0
      %v699 = vadd.f32 %v697, %v698
      %v700 = vsel %vm553, %v667, 0.0
      %v701 = vadd.f32 %v699, %v700
      %v702 = vsel %vm553, %v668, 0.0
      %v703 = vadd.f32 %v701, %v702
      %v704 = vsel %vm553, %v669, 0.0
      %v705 = vadd.f32 %v703, %v704
      %v706 = vsel %vm553, %v670, 0.0
      %v707 = vadd.f32 %v705, %v706
      %v708 = vsel %vm553, %v671, 0.0
      %v709 = vadd.f32 %v707, %v708
      %v710 = vsel %vm553, %v672, 0.0
      %v711 = vadd.f32 %v709, %v710
      %v712 = vsel %vm553, %v673, 0.0
      %v713 = vadd.f32 %v711, %v712
      %v714 = vsel %vm553, %v674, 0.0
      %v715 = vadd.f32 %v713, %v714
      %v716 = vsel %vm553, %v675, 0.0
      %v717 = vadd.f32 %v715, %v716
      %v718 = vsel %vm553, %v676, 0.0
      %v719 = vadd.f32 %v717, %v718
      %v720 = vsel %vm553, %v677, 0.0
      %v721 = vadd.f32 %v719, %v720
      %v722 = vsel %vm553, %v678, 0.0
      %v723 = vadd.f32 %v721, %v722
      %v724 = vsel %vm553, %v679, 0.0
      %v725 = vadd.f32 %v723, %v724
      %v726 = vsel %vm553, %v680, 0.0
      %v727 = vadd.f32 %v725, %v726
      %v728 = vsel %vm553, %v681, 0.0
      %v729 = vadd.f32 %v727, %v728
      %v730 = vsel %vm553, %v682, 0.0
      %v731 = vadd.f32 %v729, %v730
      %v732 = vsel %vm553, %v683, 0.0
      %v733 = vadd.f32 %v731, %v732
      %v734 = vsel %vm553, %v684, 0.0
      %v735 = vadd.f32 %v733, %v734
      %v736 = vsel %vm553, %v685, 0.0
      %v737 = vadd.f32 %v735, %v736
      %v738 = vsel %vm553, %v686, 0.0
      %v739 = vadd.f32 %v737, %v738
      %v740 = vsel %vm553, %v687, 0.0
      %v741 = vadd.f32 %v739, %v740
      %v742 = vsel %vm553, %v688, 0.0
      %v743 = vadd.f32 %v741, %v742
      %v744 = vsel %vm553, %v689, 0.0
      %v745 = vadd.f32 %v743, %v744
      %v746 = vsel %vm553, %v690, 0.0
      %v747 = vadd.f32 %v745, %v746
      %v748 = vsel %vm553, %v691, 0.0
      %v749 = vadd.f32 %v747, %v748
      %v750 = vsel %vm553, %v692, 0.0
      %v751 = vadd.f32 %v749, %v750
      %v752 = vsel %vm553, %v693, 0.0
      %v753 = vadd.f32 %v751, %v752
      %v754 = vsel %vm553, %v694, 0.0
      %v755 = vadd.f32 %v753, %v754
      %v756 = vsel %vm553, %v695, 0.0
      %v757 = vadd.f32 %v755, %v756
      %v758 = vsel %vm553, %v696, 0.0
      %v759 = vadd.f32 %v757, %v758
      %v760 = vrot.slane %v759, 4
      %v761 = vadd.f32 %v759, %v760
      %v762 = vrot.slane %v761, 2
      %v763 = vadd.f32 %v761, %v762
      %v764 = vrot.slane %v763, 1
      %v765 = vadd.f32 %v763, %v764
      %766 = vst.msk [vmem:[%s214] sm:$0x1] %vm631, %v765
      %p767 = scmp.lt.s32.totalorder %s16, 1
      %s768 = scalar_select %p767, %s16, 1
      %s769 = smul.addr %s768, 32
      %s770 = smul.addr %s769, 4
      %s771 = scalar_lea.vmem %s2, %s770
      %p772 = scmp.lt.s32.totalorder %s16, 1
      %s773 = scalar_select %p772, %s16, 1
      %s774 = scalar_lea.vmem %s3, %s773
      %p775 = scmp.lt.s32.totalorder %s16, 1
      %s776 = scalar_select %p775, %s16, 1
      %s777 = scalar_lea.vmem %s4, %s776
      // Predicated region
      $region29: #{simple_cnn_with_se.3} parent=27 // pred_check
        %p778 = pneg %p81
      $region30: #{simple_cnn_with_se.3} parent=27 // pred_check_branch
        %780 = sbr.rel (%p778) target = $region32
      $region31: #{simple_cnn_with_se.3} parent=27 // pred_region
        _
      $region32: #{simple_cnn_with_se.3} parent=27 // pred_fallthru
        _
      // Predicated region
      $region33: #{simple_cnn_with_se.3} parent=27 // pred_check
        %p781 = pneg %p107
      $region34: #{simple_cnn_with_se.3} parent=27 // pred_check_branch
        %783 = sbr.rel (%p781) target = $region36
      $region35: #{simple_cnn_with_se.3} parent=27 // pred_region
        _
      $region36: #{simple_cnn_with_se.3} parent=27 // pred_fallthru
        _
      // Predicated region
      $region37: #{simple_cnn_with_se.3} parent=27 // pred_check
        %p784 = pneg %p133
      $region38: #{simple_cnn_with_se.3} parent=27 // pred_check_branch
        %786 = sbr.rel (%p784) target = $region40
      $region39: #{simple_cnn_with_se.3} parent=27 // pred_region
        _
      $region40: #{simple_cnn_with_se.3} parent=27 // pred_fallthru
        _
    $region28: #{simple_cnn_with_se.3} parent=5 // pred_fallthru
      _
    %p787 = scmp.le.s32.totalorder 2, %s11
    // Predicated region
    $region41: #{simple_cnn_with_se.3} parent=5 // pred_check
      %p788 = pneg %p787
    $region42: #{simple_cnn_with_se.3} parent=5 // pred_check_branch
      %790 = sbr.rel (%p788) target = $region44
    $region43: #{simple_cnn_with_se.3} parent=5 // pred_region
      %s791 = ssub.s32 %s11, 2
      // Predicated region
      $region45: #{simple_cnn_with_se.3} parent=43 // pred_check
        %p792 = pneg %p87
      $region46: #{simple_cnn_with_se.3} parent=43 // pred_check_branch
        %794 = sbr.rel (%p792) target = $region48
      $region47: #{simple_cnn_with_se.3} parent=43 // pred_region
        %p795 = scmp.lt.s32.totalorder %s17, 1
        %s796 = scalar_select %p795, %s17, 1
        %s797 = smul.addr %s796, 32
        %s798 = smul.addr %s797, 4
        %s799 = scalar_lea.vmem %s2, %s798
      $region48: #{simple_cnn_with_se.3} parent=43 // pred_fallthru
        _
      // Predicated region
      $region49: #{simple_cnn_with_se.3} parent=43 // pred_check
        %p800 = pneg %p113
      $region50: #{simple_cnn_with_se.3} parent=43 // pred_check_branch
        %802 = sbr.rel (%p800) target = $region52
      $region51: #{simple_cnn_with_se.3} parent=43 // pred_region
        %p803 = scmp.lt.s32.totalorder %s17, 1
        %s804 = scalar_select %p803, %s17, 1
        %s805 = scalar_lea.vmem %s3, %s804
      $region52: #{simple_cnn_with_se.3} parent=43 // pred_fallthru
        _
      // Predicated region
      $region53: #{simple_cnn_with_se.3} parent=43 // pred_check
        %p806 = pneg %p139
      $region54: #{simple_cnn_with_se.3} parent=43 // pred_check_branch
        %808 = sbr.rel (%p806) target = $region56
      $region55: #{simple_cnn_with_se.3} parent=43 // pred_region
        %p809 = scmp.lt.s32.totalorder %s17, 1
        %s810 = scalar_select %p809, %s17, 1
        %s811 = scalar_lea.vmem %s4, %s810
      $region56: #{simple_cnn_with_se.3} parent=43 // pred_fallthru
        _
    $region44: #{simple_cnn_with_se.3} parent=5 // pred_fallthru
      _
  $region6: #{simple_cnn_with_se.3} parent=0 // loop_footer
    %s15 = sadd.s32 1, %s11
  $region7: #{simple_cnn_with_se.3} parent=0 // loop_footer_branch
    %10 = sbr.rel target = $region3
  $region8: #{simple_cnn_with_se.3} parent=0 // loop_exit
    _

// kernel: simple_cnn_with_se.5
$region0: #{simple_cnn_with_se.5}
  #allocation0 [shape = 'u32[]', space=smem, size = 0x4, offset = 0x4, fixed_abs, tag = 'smem constant byte address 0x4 - core index']
  #allocation1 [shape = 'u32[72,128]{1,0:T(1,128)}', space=vmem, size = 0x9000, scoped, tag = 'internal scratch']
  %s0 = inlined_call_operand.vmem [shape: bf16[2,256,128], index: 0, kind: input, shape index: {}]
  %s1 = inlined_call_operand.vmem [shape: f32[1,128], index: 1, kind: input, shape index: {}]
  %s2 = inlined_call_operand.vmem [shape: f32[1,128], index: 2, kind: input, shape index: {}]
  %s3 = inlined_call_operand.vmem [shape: f32[128,8], index: 3, kind: input, shape index: {}]
  %s4 = inlined_call_operand.vmem [shape: f32[8,128], index: 4, kind: input, shape index: {}]
  %s5 = inlined_call_operand.vmem [shape: f32[128,10], index: 5, kind: input, shape index: {}]
  %s6 = inlined_call_operand.vmem [shape: f32[1,10], index: 6, kind: input, shape index: {}]
  %s7 = inlined_call_operand.hbm [shape: f32[2,1,10], index: 7, kind: output, shape index: {}]
  %s8 = sld [smem:[#allocation0]]
  $region61: #{simple_cnn_with_se.5} parent=0
    _
  %s10 = ssub.s32 1, %s8
  %s11 = scalar_select 0, %s10, %s8
  $region1: #{simple_cnn_with_se.5} parent=0
    #allocation2 [shape = 'u8[1024]{0}', space=vmem, size = 0x400, scoped, tag = 'output window, operand 0']
    #allocation3 [shape = 's32[2]{0}', space=sflag, size = 0x8, scoped, tag = 'scoped memory for simple_cnn_with_se.5']
    %12 = vsyncpa [#allocation3], 0
    %s13 = scalar_lea.sflag [#allocation3], 1
    %14 = vsyncpa %s13, 0
    loop: start=0, step=1, limit=4
    $region2: #{simple_cnn_with_se.5} parent=1 // loop_pre_header
      _
    $region3: #{simple_cnn_with_se.5} parent=1 // loop_header
      %s16 = sphi 0, %s20
      %p17 = scmp.ge.s32.totalorder %s16, 4
      %s26 = sphi 0, %s28
      %s29 = sphi 0, %s26
      %s30 = sphi 0, %s29
      %s46 = sphi 0, %s30
      %s50 = sphi 0, %s50
      %s52 = sphi 0, %s50
      %s53 = sphi 0, %s52
      %s67 = sphi 0, %s53
      %s71 = sphi 0, %s71
      %s73 = sphi 0, %s71
      %s74 = sphi 0, %s73
      %s88 = sphi 0, %s74
      %s92 = sphi 0, %s92
      %s94 = sphi 0, %s92
      %s95 = sphi 0, %s94
      %s109 = sphi 0, %s95
      %s113 = sphi 0, %s113
      %s115 = sphi 0, %s113
      %s116 = sphi 0, %s115
      %s130 = sphi 0, %s116
      %s134 = sphi 0, %s134
      %s136 = sphi 0, %s134
      %s137 = sphi 0, %s136
      %s151 = sphi 0, %s137
      %s155 = sphi 0, %s155
      %s157 = sphi 0, %s155
      %s158 = sphi 0, %s157
      %s172 = sphi 0, %s158
      %s178 = sphi 0, %s180
      %s181 = sphi 0, %s178
      %s182 = sphi 0, %s181
      %s198 = sphi 0, %s182
    $region4: #{simple_cnn_with_se.5} parent=1 // loop_header_branch
      %19 = sbr.rel (%p17) target = $region8
    $region5: #{simple_cnn_with_se.5} parent=1 // loop_body
      %s21 = ssub.s32 %s16, 1
      %s22 = ssub.s32 %s16, 2
      %s23 = sadd.s32 %s16, 1
      %s24 = ssub.s32 %s16, %s23
      %p25 = scmp.eq.s32.totalorder %s24, 0
      %s27 = sadd.s32 %s26, 1
      %s28 = scalar_select %p25, %s26, %s27
      %p31 = pneg %p25
      %p32 = scmp.eq.s32.totalorder %s16, 1
      %p33 = por %p31, %p32
      %p34 = scmp.ne.s32.totalorder %s26, %s29
      %p35 = scmp.eq.s32.totalorder %s16, 0
      %p36 = por %p34, %p35
      %p37 = scmp.ne.s32.totalorder %s26, %s29
      %p38 = scmp.eq.s32.totalorder %s21, 1
      %p39 = por %p37, %p38
      %p40 = scmp.ne.s32.totalorder %s29, %s30
      %p41 = scmp.eq.s32.totalorder %s21, 0
      %p42 = por %p40, %p41
      %p43 = scmp.ne.s32.totalorder %s29, %s30
      %p44 = scmp.eq.s32.totalorder %s22, 1
      %p45 = por %p43, %p44
      %p47 = scmp.ne.s32.totalorder %s30, %s46
      %p48 = scmp.eq.s32.totalorder %s22, 0
      %p49 = por %p47, %p48
      %s51 = sadd.s32 %s50, 1
      %p54 = scmp.eq.s32.totalorder %s16, 1
      %p55 = scmp.ne.s32.totalorder %s50, %s52
      %p56 = scmp.eq.s32.totalorder %s16, 0
      %p57 = por %p55, %p56
      %p58 = scmp.ne.s32.totalorder %s50, %s52
      %p59 = scmp.eq.s32.totalorder %s21, 1
      %p60 = por %p58, %p59
      %p61 = scmp.ne.s32.totalorder %s52, %s53
      %p62 = scmp.eq.s32.totalorder %s21, 0
      %p63 = por %p61, %p62
      %p64 = scmp.ne.s32.totalorder %s52, %s53
      %p65 = scmp.eq.s32.totalorder %s22, 1
      %p66 = por %p64, %p65
      %p68 = scmp.ne.s32.totalorder %s53, %s67
      %p69 = scmp.eq.s32.totalorder %s22, 0
      %p70 = por %p68, %p69
      %s72 = sadd.s32 %s71, 1
      %p75 = scmp.eq.s32.totalorder %s16, 1
      %p76 = scmp.ne.s32.totalorder %s71, %s73
      %p77 = scmp.eq.s32.totalorder %s16, 0
      %p78 = por %p76, %p77
      %p79 = scmp.ne.s32.totalorder %s71, %s73
      %p80 = scmp.eq.s32.totalorder %s21, 1
      %p81 = por %p79, %p80
      %p82 = scmp.ne.s32.totalorder %s73, %s74
      %p83 = scmp.eq.s32.totalorder %s21, 0
      %p84 = por %p82, %p83
      %p85 = scmp.ne.s32.totalorder %s73, %s74
      %p86 = scmp.eq.s32.totalorder %s22, 1
      %p87 = por %p85, %p86
      %p89 = scmp.ne.s32.totalorder %s74, %s88
      %p90 = scmp.eq.s32.totalorder %s22, 0
      %p91 = por %p89, %p90
      %s93 = sadd.s32 %s92, 1
      %p96 = scmp.eq.s32.totalorder %s16, 1
      %p97 = scmp.ne.s32.totalorder %s92, %s94
      %p98 = scmp.eq.s32.totalorder %s16, 0
      %p99 = por %p97, %p98
      %p100 = scmp.ne.s32.totalorder %s92, %s94
      %p101 = scmp.eq.s32.totalorder %s21, 1
      %p102 = por %p100, %p101
      %p103 = scmp.ne.s32.totalorder %s94, %s95
      %p104 = scmp.eq.s32.totalorder %s21, 0
      %p105 = por %p103, %p104
      %p106 = scmp.ne.s32.totalorder %s94, %s95
      %p107 = scmp.eq.s32.totalorder %s22, 1
      %p108 = por %p106, %p107
      %p110 = scmp.ne.s32.totalorder %s95, %s109
      %p111 = scmp.eq.s32.totalorder %s22, 0
      %p112 = por %p110, %p111
      %s114 = sadd.s32 %s113, 1
      %p117 = scmp.eq.s32.totalorder %s16, 1
      %p118 = scmp.ne.s32.totalorder %s113, %s115
      %p119 = scmp.eq.s32.totalorder %s16, 0
      %p120 = por %p118, %p119
      %p121 = scmp.ne.s32.totalorder %s113, %s115
      %p122 = scmp.eq.s32.totalorder %s21, 1
      %p123 = por %p121, %p122
      %p124 = scmp.ne.s32.totalorder %s115, %s116
      %p125 = scmp.eq.s32.totalorder %s21, 0
      %p126 = por %p124, %p125
      %p127 = scmp.ne.s32.totalorder %s115, %s116
      %p128 = scmp.eq.s32.totalorder %s22, 1
      %p129 = por %p127, %p128
      %p131 = scmp.ne.s32.totalorder %s116, %s130
      %p132 = scmp.eq.s32.totalorder %s22, 0
      %p133 = por %p131, %p132
      %s135 = sadd.s32 %s134, 1
      %p138 = scmp.eq.s32.totalorder %s16, 1
      %p139 = scmp.ne.s32.totalorder %s134, %s136
      %p140 = scmp.eq.s32.totalorder %s16, 0
      %p141 = por %p139, %p140
      %p142 = scmp.ne.s32.totalorder %s134, %s136
      %p143 = scmp.eq.s32.totalorder %s21, 1
      %p144 = por %p142, %p143
      %p145 = scmp.ne.s32.totalorder %s136, %s137
      %p146 = scmp.eq.s32.totalorder %s21, 0
      %p147 = por %p145, %p146
      %p148 = scmp.ne.s32.totalorder %s136, %s137
      %p149 = scmp.eq.s32.totalorder %s22, 1
      %p150 = por %p148, %p149
      %p152 = scmp.ne.s32.totalorder %s137, %s151
      %p153 = scmp.eq.s32.totalorder %s22, 0
      %p154 = por %p152, %p153
      %s156 = sadd.s32 %s155, 1
      %p159 = scmp.eq.s32.totalorder %s16, 1
      %p160 = scmp.ne.s32.totalorder %s155, %s157
      %p161 = scmp.eq.s32.totalorder %s16, 0
      %p162 = por %p160, %p161
      %p163 = scmp.ne.s32.totalorder %s155, %s157
      %p164 = scmp.eq.s32.totalorder %s21, 1
      %p165 = por %p163, %p164
      %p166 = scmp.ne.s32.totalorder %s157, %s158
      %p167 = scmp.eq.s32.totalorder %s21, 0
      %p168 = por %p166, %p167
      %p169 = scmp.ne.s32.totalorder %s157, %s158
      %p170 = scmp.eq.s32.totalorder %s22, 1
      %p171 = por %p169, %p170
      %p173 = scmp.ne.s32.totalorder %s158, %s172
      %p174 = scmp.eq.s32.totalorder %s22, 0
      %p175 = por %p173, %p174
      %s176 = ssub.s32 %s16, %s23
      %p177 = scmp.eq.s32.totalorder %s176, 0
      %s179 = sadd.s32 %s178, 1
      %s180 = scalar_select %p177, %s178, %s179
      %p183 = pneg %p177
      %p184 = scmp.eq.s32.totalorder %s16, 1
      %p185 = por %p183, %p184
      %p186 = scmp.ne.s32.totalorder %s178, %s181
      %p187 = scmp.eq.s32.totalorder %s16, 0
      %p188 = por %p186, %p187
      %p189 = scmp.ne.s32.totalorder %s178, %s181
      %p190 = scmp.eq.s32.totalorder %s21, 1
      %p191 = por %p189, %p190
      %p192 = scmp.ne.s32.totalorder %s181, %s182
      %p193 = scmp.eq.s32.totalorder %s21, 0
      %p194 = por %p192, %p193
      %p195 = scmp.ne.s32.totalorder %s181, %s182
      %p196 = scmp.eq.s32.totalorder %s22, 1
      %p197 = por %p195, %p196
      %p199 = scmp.ne.s32.totalorder %s182, %s198
      %p200 = scmp.eq.s32.totalorder %s22, 0
      %p201 = por %p199, %p200
      %p202 = scmp.le.s32.totalorder 1, %s16
      %p203 = scmp.lt.s32.totalorder %s16, 3
      %p204 = pnand %p202, %p203
      %p205 = pneg %p204
      // Predicated region
      $region9: #{simple_cnn_with_se.5} parent=5 // pred_check
        _
      $region10: #{simple_cnn_with_se.5} parent=5 // pred_check_branch
        %207 = sbr.rel (%p204) target = $region12
      $region11: #{simple_cnn_with_se.5} parent=5 // pred_region
        %s208 = ssub.s32 %s16, 1
        // Predicated region
        $region13: #{simple_cnn_with_se.5} parent=11 // pred_check
          %p209 = pneg %p63
        $region14: #{simple_cnn_with_se.5} parent=11 // pred_check_branch
          %211 = sbr.rel (%p209) target = $region16
        $region15: #{simple_cnn_with_se.5} parent=11 // pred_region
          _
        $region16: #{simple_cnn_with_se.5} parent=11 // pred_fallthru
          _
        // Predicated region
        $region17: #{simple_cnn_with_se.5} parent=11 // pred_check
          %p212 = pneg %p84
        $region18: #{simple_cnn_with_se.5} parent=11 // pred_check_branch
          %214 = sbr.rel (%p212) target = $region20
        $region19: #{simple_cnn_with_se.5} parent=11 // pred_region
          _
        $region20: #{simple_cnn_with_se.5} parent=11 // pred_fallthru
          _
        // Predicated region
        $region21: #{simple_cnn_with_se.5} parent=11 // pred_check
          %p215 = pneg %p105
        $region22: #{simple_cnn_with_se.5} parent=11 // pred_check_branch
          %217 = sbr.rel (%p215) target = $region24
        $region23: #{simple_cnn_with_se.5} parent=11 // pred_region
          _
        $region24: #{simple_cnn_with_se.5} parent=11 // pred_fallthru
          _
        // Predicated region
        $region25: #{simple_cnn_with_se.5} parent=11 // pred_check
          %p218 = pneg %p126
        $region26: #{simple_cnn_with_se.5} parent=11 // pred_check_branch
          %220 = sbr.rel (%p218) target = $region28
        $region27: #{simple_cnn_with_se.5} parent=11 // pred_region
          _
        $region28: #{simple_cnn_with_se.5} parent=11 // pred_fallthru
          _
        // Predicated region
        $region29: #{simple_cnn_with_se.5} parent=11 // pred_check
          %p221 = pneg %p147
        $region30: #{simple_cnn_with_se.5} parent=11 // pred_check_branch
          %223 = sbr.rel (%p221) target = $region32
        $region31: #{simple_cnn_with_se.5} parent=11 // pred_region
          _
        $region32: #{simple_cnn_with_se.5} parent=11 // pred_fallthru
          _
        // Predicated region
        $region33: #{simple_cnn_with_se.5} parent=11 // pred_check
          %p224 = pneg %p168
        $region34: #{simple_cnn_with_se.5} parent=11 // pred_check_branch
          %226 = sbr.rel (%p224) target = $region36
        $region35: #{simple_cnn_with_se.5} parent=11 // pred_region
          _
        $region36: #{simple_cnn_with_se.5} parent=11 // pred_fallthru
          _
      $region12: #{simple_cnn_with_se.5} parent=5 // pred_fallthru
        _
      %p227 = scmp.lt.s32.totalorder %s16, 2
      // Predicated region
      $region37: #{simple_cnn_with_se.5} parent=5 // pred_check
        %p228 = pneg %p227
      $region38: #{simple_cnn_with_se.5} parent=5 // pred_check_branch
        %230 = sbr.rel (%p228) target = $region40
      $region39: #{simple_cnn_with_se.5} parent=5 // pred_region
        // Predicated region
        $region41: #{simple_cnn_with_se.5} parent=39 // pred_check
          %p231 = pneg %p36
        $region42: #{simple_cnn_with_se.5} parent=39 // pred_check_branch
          %233 = sbr.rel (%p231) target = $region44
        $region43: #{simple_cnn_with_se.5} parent=39 // pred_region
          %p234 = scmp.lt.s32.totalorder %s16, 1
          %s235 = scalar_select %p234, %s16, 1
          %s236 = smul.addr %s235, 32
          %s237 = smul.addr %s236, 4
          %s238 = scalar_lea.vmem %s0, %s237
        $region44: #{simple_cnn_with_se.5} parent=39 // pred_fallthru
          _
      $region40: #{simple_cnn_with_se.5} parent=5 // pred_fallthru
        _
      %p239 = scmp.le.s32.totalorder 1, %s16
      %p240 = scmp.lt.s32.totalorder %s16, 3
      %p241 = pnand %p239, %p240
      %p242 = pneg %p241
      // Predicated region
      $region45: #{simple_cnn_with_se.5} parent=5 // pred_check
        _
      $region46: #{simple_cnn_with_se.5} parent=5 // pred_check_branch
        %244 = sbr.rel (%p241) target = $region48
      $region47: #{simple_cnn_with_se.5} parent=5 // pred_region
        %s245 = ssub.s32 %s16, 1
        %p246 = scmp.lt.s32.totalorder %s21, 1
        %s247 = scalar_select %p246, %s21, 1
        %s248 = smul.addr %s247, 32
        %s249 = smul.addr %s248, 4
        %s250 = scalar_lea.vmem %s0, %s249
        %p251 = pneg %p42
        %p252 = pneg %p39
        %p253 = pneg %p63
        %p254 = pneg %p60
        %p255 = pneg %p84
        %p256 = pneg %p81
        %p257 = pneg %p105
        %p258 = pneg %p102
        %p259 = pneg %p126
        %p260 = pneg %p123
        %p261 = pneg %p147
        %p262 = pneg %p144
        %p263 = pneg %p168
        %p264 = pneg %p165
        %p265 = pneg %p194
        %p266 = pneg %p191
        %s267 = sand.u32 %s181, 1
        %s268 = scalar_lea.sflag [#allocation3], %s267
        %s269 = sand.u32 %s181, 1
        %s270 = scalar_lea.vmem [#allocation2], %s269
        %p271 = scmp.lt.s32.totalorder %s21, 1
        %s272 = scalar_select %p271, %s21, 1
        %s273 = smul.addr %s272, 32
        %s274 = smul.addr %s273, 4
        %s275 = scalar_lea.vmem %s0, %s274
        %v276 = vld [vmem:[%s275] sm:$0xf]
        %v277 = vld [vmem:[%s275 + $0x4] sm:$0xf]
        %v278 = vld [vmem:[%s275 + $0x8] sm:$0xf]
        %v279 = vld [vmem:[%s275 + $0xc] sm:$0xf]
        %v280 = vld [vmem:[%s275 + $0x10] sm:$0xf]
        %v281 = vld [vmem:[%s275 + $0x14] sm:$0xf]
        %v282 = vld [vmem:[%s275 + $0x18] sm:$0xf]
        %v283 = vld [vmem:[%s275 + $0x1c] sm:$0xf]
        %v284 = vld [vmem:[%s275 + $0x20] sm:$0xf]
        %v285 = vld [vmem:[%s275 + $0x24] sm:$0xf]
        %v286 = vld [vmem:[%s275 + $0x28] sm:$0xf]
        %v287 = vld [vmem:[%s275 + $0x2c] sm:$0xf]
        %v288 = vld [vmem:[%s275 + $0x30] sm:$0xf]
        %v289 = vld [vmem:[%s275 + $0x34] sm:$0xf]
        %v290 = vld [vmem:[%s275 + $0x38] sm:$0xf]
        %v291 = vld [vmem:[%s275 + $0x3c] sm:$0xf]
        %v292 = vld [vmem:[%s275 + $0x40] sm:$0xf]
        %v293 = vld [vmem:[%s275 + $0x44] sm:$0xf]
        %v294 = vld [vmem:[%s275 + $0x48] sm:$0xf]
        %v295 = vld [vmem:[%s275 + $0x4c] sm:$0xf]
        %v296 = vld [vmem:[%s275 + $0x50] sm:$0xf]
        %v297 = vld [vmem:[%s275 + $0x54] sm:$0xf]
        %v298 = vld [vmem:[%s275 + $0x58] sm:$0xf]
        %v299 = vld [vmem:[%s275 + $0x5c] sm:$0xf]
        %v300 = vld [vmem:[%s275 + $0x60] sm:$0xf]
        %v301 = vld [vmem:[%s275 + $0x64] sm:$0xf]
        %v302 = vld [vmem:[%s275 + $0x68] sm:$0xf]
        %v303 = vld [vmem:[%s275 + $0x6c] sm:$0xf]
        %v304 = vld [vmem:[%s275 + $0x70] sm:$0xf]
        %v305 = vld [vmem:[%s275 + $0x74] sm:$0xf]
        %v306 = vld [vmem:[%s275 + $0x78] sm:$0xf]
        %v307 = vld [vmem:[%s275 + $0x7c] sm:$0xf]
        %v308 = vunpack.c.l.bf16 %v276
        %v309 = vunpack.c.l.bf16 %v277
        %v310 = vunpack.c.l.bf16 %v278
        %v311 = vunpack.c.l.bf16 %v279
        %v312 = vunpack.c.l.bf16 %v280
        %v313 = vunpack.c.l.bf16 %v281
        %v314 = vunpack.c.l.bf16 %v282
        %v315 = vunpack.c.l.bf16 %v283
        %v316 = vunpack.c.l.bf16 %v284
        %v317 = vunpack.c.l.bf16 %v285
        %v318 = vunpack.c.l.bf16 %v286
        %v319 = vunpack.c.l.bf16 %v287
        %v320 = vunpack.c.l.bf16 %v288
        %v321 = vunpack.c.l.bf16 %v289
        %v322 = vunpack.c.l.bf16 %v290
        %v323 = vunpack.c.l.bf16 %v291
        %v324 = vunpack.c.l.bf16 %v292
        %v325 = vunpack.c.l.bf16 %v293
        %v326 = vunpack.c.l.bf16 %v294
        %v327 = vunpack.c.l.bf16 %v295
        %v328 = vunpack.c.l.bf16 %v296
        %v329 = vunpack.c.l.bf16 %v297
        %v330 = vunpack.c.l.bf16 %v298
        %v331 = vunpack.c.l.bf16 %v299
        %v332 = vunpack.c.l.bf16 %v300
        %v333 = vunpack.c.l.bf16 %v301
        %v334 = vunpack.c.l.bf16 %v302
        %v335 = vunpack.c.l.bf16 %v303
        %v336 = vunpack.c.l.bf16 %v304
        %v337 = vunpack.c.l.bf16 %v305
        %v338 = vunpack.c.l.bf16 %v306
        %v339 = vunpack.c.l.bf16 %v307
        %v340 = vld [vmem:[%s1] sm:$0x1]
        %v342 = vperm.slane %v340, 0
        %v344 = vmul.f32 %v308, %v342
        %v345 = vmul.f32 %v309, %v342
        %v346 = vmul.f32 %v310, %v342
        %v347 = vmul.f32 %v311, %v342
        %v348 = vmul.f32 %v312, %v342
        %v349 = vmul.f32 %v313, %v342
        %v350 = vmul.f32 %v314, %v342
        %v351 = vmul.f32 %v315, %v342
        %v352 = vmul.f32 %v316, %v342
        %v353 = vmul.f32 %v317, %v342
        %v354 = vmul.f32 %v318, %v342
        %v355 = vmul.f32 %v319, %v342
        %v356 = vmul.f32 %v320, %v342
        %v357 = vmul.f32 %v321, %v342
        %v358 = vmul.f32 %v322, %v342
        %v359 = vmul.f32 %v323, %v342
        %v360 = vmul.f32 %v324, %v342
        %v361 = vmul.f32 %v325, %v342
        %v362 = vmul.f32 %v326, %v342
        %v363 = vmul.f32 %v327, %v342
        %v364 = vmul.f32 %v328, %v342
        %v365 = vmul.f32 %v329, %v342
        %v366 = vmul.f32 %v330, %v342
        %v367 = vmul.f32 %v331, %v342
        %v368 = vmul.f32 %v332, %v342
        %v369 = vmul.f32 %v333, %v342
        %v370 = vmul.f32 %v334, %v342
        %v371 = vmul.f32 %v335, %v342
        %v372 = vmul.f32 %v336, %v342
        %v373 = vmul.f32 %v337, %v342
        %v374 = vmul.f32 %v338, %v342
        %v375 = vmul.f32 %v339, %v342
        %v376 = vld [vmem:[%s2] sm:$0x1]
        %v378 = vperm.slane %v376, 0
        %v380 = vadd.f32 %v344, %v378
        %v381 = vadd.f32 %v345, %v378
        %v382 = vadd.f32 %v346, %v378
        %v383 = vadd.f32 %v347, %v378
        %v384 = vadd.f32 %v348, %v378
        %v385 = vadd.f32 %v349, %v378
        %v386 = vadd.f32 %v350, %v378
        %v387 = vadd.f32 %v351, %v378
        %v388 = vadd.f32 %v352, %v378
        %v389 = vadd.f32 %v353, %v378
        %v390 = vadd.f32 %v354, %v378
        %v391 = vadd.f32 %v355, %v378
        %v392 = vadd.f32 %v356, %v378
        %v393 = vadd.f32 %v357, %v378
        %v394 = vadd.f32 %v358, %v378
        %v395 = vadd.f32 %v359, %v378
        %v396 = vadd.f32 %v360, %v378
        %v397 = vadd.f32 %v361, %v378
        %v398 = vadd.f32 %v362, %v378
        %v399 = vadd.f32 %v363, %v378
        %v400 = vadd.f32 %v364, %v378
        %v401 = vadd.f32 %v365, %v378
        %v402 = vadd.f32 %v366, %v378
        %v403 = vadd.f32 %v367, %v378
        %v404 = vadd.f32 %v368, %v378
        %v405 = vadd.f32 %v369, %v378
        %v406 = vadd.f32 %v370, %v378
        %v407 = vadd.f32 %v371, %v378
        %v408 = vadd.f32 %v372, %v378
        %v409 = vadd.f32 %v373, %v378
        %v410 = vadd.f32 %v374, %v378
        %v411 = vadd.f32 %v375, %v378
        %v412 = vmax.f32 %v380, 0.0
        %v413 = vmax.f32 %v381, 0.0
        %v414 = vmax.f32 %v382, 0.0
        %v415 = vmax.f32 %v383, 0.0
        %v416 = vmax.f32 %v384, 0.0
        %v417 = vmax.f32 %v385, 0.0
        %v418 = vmax.f32 %v386, 0.0
        %v419 = vmax.f32 %v387, 0.0
        %v420 = vmax.f32 %v388, 0.0
        %v421 = vmax.f32 %v389, 0.0
        %v422 = vmax.f32 %v390, 0.0
        %v423 = vmax.f32 %v391, 0.0
        %v424 = vmax.f32 %v392, 0.0
        %v425 = vmax.f32 %v393, 0.0
        %v426 = vmax.f32 %v394, 0.0
        %v427 = vmax.f32 %v395, 0.0
        %v428 = vmax.f32 %v396, 0.0
        %v429 = vmax.f32 %v397, 0.0
        %v430 = vmax.f32 %v398, 0.0
        %v431 = vmax.f32 %v399, 0.0
        %v432 = vmax.f32 %v400, 0.0
        %v433 = vmax.f32 %v401, 0.0
        %v434 = vmax.f32 %v402, 0.0
        %v435 = vmax.f32 %v403, 0.0
        %v436 = vmax.f32 %v404, 0.0
        %v437 = vmax.f32 %v405, 0.0
        %v438 = vmax.f32 %v406, 0.0
        %v439 = vmax.f32 %v407, 0.0
        %v440 = vmax.f32 %v408, 0.0
        %v441 = vmax.f32 %v409, 0.0
        %v442 = vmax.f32 %v410, 0.0
        %v443 = vmax.f32 %v411, 0.0
        %v444 = vadd.f32 %v412, %v413
        %v445 = vadd.f32 %v444, %v414
        %v446 = vadd.f32 %v445, %v415
        %v447 = vadd.f32 %v446, %v416
        %v448 = vadd.f32 %v447, %v417
        %v449 = vadd.f32 %v448, %v418
        %v450 = vadd.f32 %v449, %v419
        %v451 = vadd.f32 %v450, %v420
        %v452 = vadd.f32 %v451, %v421
        %v453 = vadd.f32 %v452, %v422
        %v454 = vadd.f32 %v453, %v423
        %v455 = vadd.f32 %v454, %v424
        %v456 = vadd.f32 %v455, %v425
        %v457 = vadd.f32 %v456, %v426
        %v458 = vadd.f32 %v457, %v427
        %v459 = vadd.f32 %v458, %v428
        %v460 = vadd.f32 %v459, %v429
        %v461 = vadd.f32 %v460, %v430
        %v462 = vadd.f32 %v461, %v431
        %v463 = vadd.f32 %v462, %v432
        %v464 = vadd.f32 %v463, %v433
        %v465 = vadd.f32 %v464, %v434
        %v466 = vadd.f32 %v465, %v435
        %v467 = vadd.f32 %v466, %v436
        %v468 = vadd.f32 %v467, %v437
        %v469 = vadd.f32 %v468, %v438
        %v470 = vadd.f32 %v469, %v439
        %v471 = vadd.f32 %v470, %v440
        %v472 = vadd.f32 %v471, %v441
        %v473 = vadd.f32 %v472, %v442
        %v474 = vadd.f32 %v473, %v443
        %v475 = vrot.slane %v474, 4
        %v476 = vadd.f32 %v474, %v475
        %v477 = vrot.slane %v476, 2
        %v478 = vadd.f32 %v476, %v477
        %v479 = vrot.slane %v478, 1
        %v480 = vadd.f32 %v478, %v479
        %v481 = vrcp.pop 256.0
        %v482 = vmul.f32 256.0, %v481
        %v483 = vsub.f32 1.0, %v482
        %v484 = vmul.f32 %v481, %v483
        %v485 = vadd.f32 %v481, %v484
        %vm486 = vweird.f32 %v481
        %v487 = vsel %vm486, %v481, %v485
        %v488 = vmul.f32 %v480, %v487
        %v489 = vld [vmem:[%s3] sm:$0xff]
        %v490 = vld [vmem:[%s3 + $0x8] sm:$0xff]
        %v491 = vld [vmem:[%s3 + $0x10] sm:$0xff]
        %v492 = vld [vmem:[%s3 + $0x18] sm:$0xff]
        %v493 = vld [vmem:[%s3 + $0x20] sm:$0xff]
        %v494 = vld [vmem:[%s3 + $0x28] sm:$0xff]
        %v495 = vld [vmem:[%s3 + $0x30] sm:$0xff]
        %v496 = vld [vmem:[%s3 + $0x38] sm:$0xff]
        %v497 = vld [vmem:[%s3 + $0x40] sm:$0xff]
        %v498 = vld [vmem:[%s3 + $0x48] sm:$0xff]
        %v499 = vld [vmem:[%s3 + $0x50] sm:$0xff]
        %v500 = vld [vmem:[%s3 + $0x58] sm:$0xff]
        %v501 = vld [vmem:[%s3 + $0x60] sm:$0xff]
        %v502 = vld [vmem:[%s3 + $0x68] sm:$0xff]
        %v503 = vld [vmem:[%s3 + $0x70] sm:$0xff]
        %v504 = vld [vmem:[%s3 + $0x78] sm:$0xff]
        %505 = vmatpush.msra.mxu0 %v504
        %506 = vmatpush.msra.mxu0 %v503
        %507 = vmatpush.msra.mxu0 %v502
        %508 = vmatpush.msra.mxu0 %v501
        %509 = vmatpush.msra.mxu0 %v500
        %510 = vmatpush.msra.mxu0 %v499
        %511 = vmatpush.msra.mxu0 %v498
        %512 = vmatpush.msra.mxu0 %v497
        %513 = vmatpush.msra.mxu0 %v496
        %514 = vmatpush.msra.mxu0 %v495
        %515 = vmatpush.msra.mxu0 %v494
        %516 = vmatpush.msra.mxu0 %v493
        %517 = vmatpush.msra.mxu0 %v492
        %518 = vmatpush.msra.mxu0 %v491
        %519 = vmatpush.msra.mxu0 %v490
        %520 = vmatpush.msra.mxu0 %v489
        %521 = vmatmul.f32.gmra.mxu0 %v488
        %v522 = vpop.f32.mrf.mxu0
        %v523 = vadd.f32 0.0, %v522
        %524 = vdwg.mxu0
        %v525 = vmax.f32 %v523, 0.0
        %v526 = vld [vmem:[%s4] sm:$0xff]
        %vm527 = vcmask 64512
        %v529 = vsel %vm527, %v525, 0
        %531 = vmatpush.msra.mxu0 0.0
        %532 = vmatpush.msra.mxu0 0.0
        %533 = vmatpush.msra.mxu0 0.0
        %534 = vmatpush.msra.mxu0 0.0
        %535 = vmatpush.msra.mxu0 0.0
        %536 = vmatpush.msra.mxu0 0.0
        %537 = vmatpush.msra.mxu0 0.0
        %538 = vmatpush.msra.mxu0 0.0
        %539 = vmatpush.msra.mxu0 0.0
        %540 = vmatpush.msra.mxu0 0.0
        %541 = vmatpush.msra.mxu0 0.0
        %542 = vmatpush.msra.mxu0 0.0
        %543 = vmatpush.msra.mxu0 0.0
        %544 = vmatpush.msra.mxu0 0.0
        %545 = vmatpush.msra.mxu0 0.0
        %546 = vmatpush.msra.mxu0 %v526
        %547 = vmatmul.f32.gmra.mxu0 %v529
        %v548 = vpop.f32.mrf.mxu0
        %v549 = vadd.f32 0.0, %v548
        %550 = vdwg.mxu0
        %v551 = vxor.u32 %v549, 2147483648
        %v552 = vmul.f32 %v551, 1.442695
        %v553 = vpow.pop %v552
        %v554 = vadd.f32 %v553, 1.0
        %v555 = vrcp.pop %v554
        %v556 = vmul.f32 %v554, %v555
        %v557 = vsub.f32 1.0, %v556
        %v558 = vmul.f32 %v555, %v557
        %v559 = vadd.f32 %v555, %v558
        %vm560 = vweird.f32 %v554
        %vm561 = vweird.f32 %v555
        %vm562 = vmor %vm560, %vm561
        %v563 = vsel %vm562, %v555, %v559
        %v564 = vand.u32 2147483647, %v554
        %vm565 = vcmp.eq.f32.partialorder %v564, 8.507059e+37
        %v566 = vand.u32 %v554, 2147483648
        %v567 = vor.u32 1.1754944e-38, %v566
        %v568 = vsel %vm565, %v567, %v563
        %v569 = vmul.f32 1.0, %v568
        %v570 = vmul.f32 %v488, %v569
        %v571 = vld [vmem:[%s5] sm:$0xff]
        %v572 = vld [vmem:[%s5 + $0x8] sm:$0xff]
        %v573 = vld [vmem:[%s5 + $0x10] sm:$0xff]
        %v574 = vld [vmem:[%s5 + $0x18] sm:$0xff]
        %v575 = vld [vmem:[%s5 + $0x20] sm:$0xff]
        %v576 = vld [vmem:[%s5 + $0x28] sm:$0xff]
        %v577 = vld [vmem:[%s5 + $0x30] sm:$0xff]
        %v578 = vld [vmem:[%s5 + $0x38] sm:$0xff]
        %v579 = vld [vmem:[%s5 + $0x40] sm:$0xff]
        %v580 = vld [vmem:[%s5 + $0x48] sm:$0xff]
        %v581 = vld [vmem:[%s5 + $0x50] sm:$0xff]
        %v582 = vld [vmem:[%s5 + $0x58] sm:$0xff]
        %v583 = vld [vmem:[%s5 + $0x60] sm:$0xff]
        %v584 = vld [vmem:[%s5 + $0x68] sm:$0xff]
        %v585 = vld [vmem:[%s5 + $0x70] sm:$0xff]
        %v586 = vld [vmem:[%s5 + $0x78] sm:$0xff]
        %v587 = vld [vmem:[%s6] sm:$0x1]
        %588 = vmatpush.msra.mxu0 %v586
        %589 = vmatpush.msra.mxu0 %v585
        %590 = vmatpush.msra.mxu0 %v584
        %591 = vmatpush.msra.mxu0 %v583
        %592 = vmatpush.msra.mxu0 %v582
        %593 = vmatpush.msra.mxu0 %v581
        %594 = vmatpush.msra.mxu0 %v580
        %595 = vmatpush.msra.mxu0 %v579
        %596 = vmatpush.msra.mxu0 %v578
        %597 = vmatpush.msra.mxu0 %v577
        %598 = vmatpush.msra.mxu0 %v576
        %599 = vmatpush.msra.mxu0 %v575
        %600 = vmatpush.msra.mxu0 %v574
        %601 = vmatpush.msra.mxu0 %v573
        %602 = vmatpush.msra.mxu0 %v572
        %603 = vmatpush.msra.mxu0 %v571
        %604 = vmatmul.f32.gmra.mxu0 %v570
        %v605 = vpop.f32.mrf.mxu0
        %v606 = vadd.f32 %v587, %v605
        %607 = vdwg.mxu0
        %vm608 = vcmask 73728
        %609 = vst.msk [vmem:[%s270] sm:$0x1] %vm608, %v606
        %s610 = sand.u32 %s181, 1
        %s611 = scalar_lea.sflag [#allocation3], %s610
        %s612 = sand.u32 %s181, 1
        %s613 = scalar_lea.vmem [#allocation2], %s612
        // Predicated region
        $region49: #{simple_cnn_with_se.5} parent=47 // pred_check
          %p614 = pneg %p191
        $region50: #{simple_cnn_with_se.5} parent=47 // pred_check_branch
          %616 = sbr.rel (%p614) target = $region52
        $region51: #{simple_cnn_with_se.5} parent=47 // pred_region
          %618 = vsyncadd %s611, 0
          %s619 = scalar_lea.hbm %s7, %s21
          %s621 = sshll.u32 %s613, 4
          %s622 = int_to_ptr.vmem [resolvable:$true] %s621
          %s623 = sshll.u32 %s619, 4
          %s624 = int_to_ptr.hbm [resolvable:$true] %s623
          %626 = dma.vmem_to_hbm [thread:$0]  %s622, 16, %s624, %s611
        $region52: #{simple_cnn_with_se.5} parent=47 // pred_fallthru
          _
      $region48: #{simple_cnn_with_se.5} parent=5 // pred_fallthru
        _
      %p627 = scmp.le.s32.totalorder 2, %s16
      // Predicated region
      $region53: #{simple_cnn_with_se.5} parent=5 // pred_check
        %p628 = pneg %p627
      $region54: #{simple_cnn_with_se.5} parent=5 // pred_check_branch
        %630 = sbr.rel (%p628) target = $region56
      $region55: #{simple_cnn_with_se.5} parent=5 // pred_region
        %s631 = ssub.s32 %s16, 2
        // Predicated region
        $region57: #{simple_cnn_with_se.5} parent=55 // pred_check
          %p632 = pneg %p197
        $region58: #{simple_cnn_with_se.5} parent=55 // pred_check_branch
          %634 = sbr.rel (%p632) target = $region60
        $region59: #{simple_cnn_with_se.5} parent=55 // pred_region
          %s635 = sand.u32 %s182, 1
          %s636 = scalar_lea.sflag [#allocation3], %s635
          %s637 = sand.u32 %s182, 1
          %s638 = scalar_lea.vmem [#allocation2], %s637
          %640 = dma.done %s636, 16
        $region60: #{simple_cnn_with_se.5} parent=55 // pred_fallthru
          _
      $region56: #{simple_cnn_with_se.5} parent=5 // pred_fallthru
        _
    $region6: #{simple_cnn_with_se.5} parent=1 // loop_footer
      %s20 = sadd.s32 1, %s16
    $region7: #{simple_cnn_with_se.5} parent=1 // loop_footer_branch
      %15 = sbr.rel target = $region3
    $region8: #{simple_cnn_with_se.5} parent=1 // loop_exit
      _
    %641 = vsyncpa [#allocation3], 1
    %s642 = scalar_lea.sflag [#allocation3], 1
    %643 = vsyncpa %s642, 1

// kernel: simple_cnn_with_se.4
$region0: #{simple_cnn_with_se.4}
  #allocation0 [shape = 'u32[]', space=smem, size = 0x4, offset = 0x4, fixed_abs, tag = 'smem constant byte address 0x4 - core index']
  #allocation1 [shape = 'u32[72,128]{1,0:T(1,128)}', space=vmem, size = 0x9000, scoped, tag = 'internal scratch']
  #allocation2 [shape = 'bf16[1,18,32,64]{3,2,1,0:T(8,128)(2,1)}', space=vmem, size = 0x24000, scoped, tag = 'scratch operand']
  %s0 = inlined_call_operand.vmem [shape: bf16[2,256,64], index: 0, kind: input, shape index: {}]
  %s1 = inlined_call_operand.vmem [shape: f32[1,64], index: 1, kind: input, shape index: {}]
  %s2 = inlined_call_operand.vmem [shape: f32[1,64], index: 2, kind: input, shape index: {}]
  %s3 = inlined_call_operand.vmem [shape: f32[64,4], index: 3, kind: input, shape index: {}]
  %s4 = inlined_call_operand.vmem [shape: f32[4,64], index: 4, kind: input, shape index: {}]
  %s5 = inlined_call_operand.vmem [shape: bf16[576,128], index: 5, kind: input, shape index: {}]
  %s6 = inlined_call_operand.vmem [shape: bf16[2,256,128], index: 6, kind: output, shape index: {0}]
  %s7 = inlined_call_operand.vmem [shape: f32[2,1,128], index: 7, kind: output, shape index: {1}]
  %s8 = inlined_call_operand.vmem [shape: f32[2,1,128], index: 8, kind: output, shape index: {2}]
  %9 = xla_tuple %s6, %s7, %s8
  %s10 = sld [smem:[#allocation0]]
  $region73: #{simple_cnn_with_se.4} parent=0
    _
  %s12 = ssub.s32 1, %s10
  %s13 = scalar_select 0, %s12, %s10
  loop: start=0, step=1, limit=4
  $region2: #{simple_cnn_with_se.4} parent=0 // loop_pre_header
    _
  $region3: #{simple_cnn_with_se.4} parent=0 // loop_header
    %s15 = sphi 0, %s19
    %p16 = scmp.ge.s32.totalorder %s15, 4
    %s25 = sphi 0, %s27
    %s28 = sphi 0, %s25
    %s29 = sphi 0, %s28
    %s45 = sphi 0, %s29
    %s49 = sphi 0, %s49
    %s51 = sphi 0, %s49
    %s52 = sphi 0, %s51
    %s66 = sphi 0, %s52
    %s70 = sphi 0, %s70
    %s72 = sphi 0, %s70
    %s73 = sphi 0, %s72
    %s87 = sphi 0, %s73
    %s91 = sphi 0, %s91
    %s93 = sphi 0, %s91
    %s94 = sphi 0, %s93
    %s108 = sphi 0, %s94
    %s112 = sphi 0, %s112
    %s114 = sphi 0, %s112
    %s115 = sphi 0, %s114
    %s129 = sphi 0, %s115
    %s133 = sphi 0, %s133
    %s135 = sphi 0, %s133
    %s136 = sphi 0, %s135
    %s150 = sphi 0, %s136
    %s156 = sphi 0, %s158
    %s159 = sphi 0, %s156
    %s160 = sphi 0, %s159
    %s176 = sphi 0, %s160
    %s182 = sphi 0, %s184
    %s185 = sphi 0, %s182
    %s186 = sphi 0, %s185
    %s202 = sphi 0, %s186
    %s208 = sphi 0, %s210
    %s211 = sphi 0, %s208
    %s212 = sphi 0, %s211
    %s228 = sphi 0, %s212
  $region4: #{simple_cnn_with_se.4} parent=0 // loop_header_branch
    %18 = sbr.rel (%p16) target = $region8
  $region5: #{simple_cnn_with_se.4} parent=0 // loop_body
    %s20 = ssub.s32 %s15, 1
    %s21 = ssub.s32 %s15, 2
    %s22 = sadd.s32 %s15, 1
    %s23 = ssub.s32 %s15, %s22
    %p24 = scmp.eq.s32.totalorder %s23, 0
    %s26 = sadd.s32 %s25, 1
    %s27 = scalar_select %p24, %s25, %s26
    %p30 = pneg %p24
    %p31 = scmp.eq.s32.totalorder %s15, 1
    %p32 = por %p30, %p31
    %p33 = scmp.ne.s32.totalorder %s25, %s28
    %p34 = scmp.eq.s32.totalorder %s15, 0
    %p35 = por %p33, %p34
    %p36 = scmp.ne.s32.totalorder %s25, %s28
    %p37 = scmp.eq.s32.totalorder %s20, 1
    %p38 = por %p36, %p37
    %p39 = scmp.ne.s32.totalorder %s28, %s29
    %p40 = scmp.eq.s32.totalorder %s20, 0
    %p41 = por %p39, %p40
    %p42 = scmp.ne.s32.totalorder %s28, %s29
    %p43 = scmp.eq.s32.totalorder %s21, 1
    %p44 = por %p42, %p43
    %p46 = scmp.ne.s32.totalorder %s29, %s45
    %p47 = scmp.eq.s32.totalorder %s21, 0
    %p48 = por %p46, %p47
    %s50 = sadd.s32 %s49, 1
    %p53 = scmp.eq.s32.totalorder %s15, 1
    %p54 = scmp.ne.s32.totalorder %s49, %s51
    %p55 = scmp.eq.s32.totalorder %s15, 0
    %p56 = por %p54, %p55
    %p57 = scmp.ne.s32.totalorder %s49, %s51
    %p58 = scmp.eq.s32.totalorder %s20, 1
    %p59 = por %p57, %p58
    %p60 = scmp.ne.s32.totalorder %s51, %s52
    %p61 = scmp.eq.s32.totalorder %s20, 0
    %p62 = por %p60, %p61
    %p63 = scmp.ne.s32.totalorder %s51, %s52
    %p64 = scmp.eq.s32.totalorder %s21, 1
    %p65 = por %p63, %p64
    %p67 = scmp.ne.s32.totalorder %s52, %s66
    %p68 = scmp.eq.s32.totalorder %s21, 0
    %p69 = por %p67, %p68
    %s71 = sadd.s32 %s70, 1
    %p74 = scmp.eq.s32.totalorder %s15, 1
    %p75 = scmp.ne.s32.totalorder %s70, %s72
    %p76 = scmp.eq.s32.totalorder %s15, 0
    %p77 = por %p75, %p76
    %p78 = scmp.ne.s32.totalorder %s70, %s72
    %p79 = scmp.eq.s32.totalorder %s20, 1
    %p80 = por %p78, %p79
    %p81 = scmp.ne.s32.totalorder %s72, %s73
    %p82 = scmp.eq.s32.totalorder %s20, 0
    %p83 = por %p81, %p82
    %p84 = scmp.ne.s32.totalorder %s72, %s73
    %p85 = scmp.eq.s32.totalorder %s21, 1
    %p86 = por %p84, %p85
    %p88 = scmp.ne.s32.totalorder %s73, %s87
    %p89 = scmp.eq.s32.totalorder %s21, 0
    %p90 = por %p88, %p89
    %s92 = sadd.s32 %s91, 1
    %p95 = scmp.eq.s32.totalorder %s15, 1
    %p96 = scmp.ne.s32.totalorder %s91, %s93
    %p97 = scmp.eq.s32.totalorder %s15, 0
    %p98 = por %p96, %p97
    %p99 = scmp.ne.s32.totalorder %s91, %s93
    %p100 = scmp.eq.s32.totalorder %s20, 1
    %p101 = por %p99, %p100
    %p102 = scmp.ne.s32.totalorder %s93, %s94
    %p103 = scmp.eq.s32.totalorder %s20, 0
    %p104 = por %p102, %p103
    %p105 = scmp.ne.s32.totalorder %s93, %s94
    %p106 = scmp.eq.s32.totalorder %s21, 1
    %p107 = por %p105, %p106
    %p109 = scmp.ne.s32.totalorder %s94, %s108
    %p110 = scmp.eq.s32.totalorder %s21, 0
    %p111 = por %p109, %p110
    %s113 = sadd.s32 %s112, 1
    %p116 = scmp.eq.s32.totalorder %s15, 1
    %p117 = scmp.ne.s32.totalorder %s112, %s114
    %p118 = scmp.eq.s32.totalorder %s15, 0
    %p119 = por %p117, %p118
    %p120 = scmp.ne.s32.totalorder %s112, %s114
    %p121 = scmp.eq.s32.totalorder %s20, 1
    %p122 = por %p120, %p121
    %p123 = scmp.ne.s32.totalorder %s114, %s115
    %p124 = scmp.eq.s32.totalorder %s20, 0
    %p125 = por %p123, %p124
    %p126 = scmp.ne.s32.totalorder %s114, %s115
    %p127 = scmp.eq.s32.totalorder %s21, 1
    %p128 = por %p126, %p127
    %p130 = scmp.ne.s32.totalorder %s115, %s129
    %p131 = scmp.eq.s32.totalorder %s21, 0
    %p132 = por %p130, %p131
    %s134 = sadd.s32 %s133, 1
    %p137 = scmp.eq.s32.totalorder %s15, 1
    %p138 = scmp.ne.s32.totalorder %s133, %s135
    %p139 = scmp.eq.s32.totalorder %s15, 0
    %p140 = por %p138, %p139
    %p141 = scmp.ne.s32.totalorder %s133, %s135
    %p142 = scmp.eq.s32.totalorder %s20, 1
    %p143 = por %p141, %p142
    %p144 = scmp.ne.s32.totalorder %s135, %s136
    %p145 = scmp.eq.s32.totalorder %s20, 0
    %p146 = por %p144, %p145
    %p147 = scmp.ne.s32.totalorder %s135, %s136
    %p148 = scmp.eq.s32.totalorder %s21, 1
    %p149 = por %p147, %p148
    %p151 = scmp.ne.s32.totalorder %s136, %s150
    %p152 = scmp.eq.s32.totalorder %s21, 0
    %p153 = por %p151, %p152
    %s154 = ssub.s32 %s15, %s22
    %p155 = scmp.eq.s32.totalorder %s154, 0
    %s157 = sadd.s32 %s156, 1
    %s158 = scalar_select %p155, %s156, %s157
    %p161 = pneg %p155
    %p162 = scmp.eq.s32.totalorder %s15, 1
    %p163 = por %p161, %p162
    %p164 = scmp.ne.s32.totalorder %s156, %s159
    %p165 = scmp.eq.s32.totalorder %s15, 0
    %p166 = por %p164, %p165
    %p167 = scmp.ne.s32.totalorder %s156, %s159
    %p168 = scmp.eq.s32.totalorder %s20, 1
    %p169 = por %p167, %p168
    %p170 = scmp.ne.s32.totalorder %s159, %s160
    %p171 = scmp.eq.s32.totalorder %s20, 0
    %p172 = por %p170, %p171
    %p173 = scmp.ne.s32.totalorder %s159, %s160
    %p174 = scmp.eq.s32.totalorder %s21, 1
    %p175 = por %p173, %p174
    %p177 = scmp.ne.s32.totalorder %s160, %s176
    %p178 = scmp.eq.s32.totalorder %s21, 0
    %p179 = por %p177, %p178
    %s180 = ssub.s32 %s15, %s22
    %p181 = scmp.eq.s32.totalorder %s180, 0
    %s183 = sadd.s32 %s182, 1
    %s184 = scalar_select %p181, %s182, %s183
    %p187 = pneg %p181
    %p188 = scmp.eq.s32.totalorder %s15, 1
    %p189 = por %p187, %p188
    %p190 = scmp.ne.s32.totalorder %s182, %s185
    %p191 = scmp.eq.s32.totalorder %s15, 0
    %p192 = por %p190, %p191
    %p193 = scmp.ne.s32.totalorder %s182, %s185
    %p194 = scmp.eq.s32.totalorder %s20, 1
    %p195 = por %p193, %p194
    %p196 = scmp.ne.s32.totalorder %s185, %s186
    %p197 = scmp.eq.s32.totalorder %s20, 0
    %p198 = por %p196, %p197
    %p199 = scmp.ne.s32.totalorder %s185, %s186
    %p200 = scmp.eq.s32.totalorder %s21, 1
    %p201 = por %p199, %p200
    %p203 = scmp.ne.s32.totalorder %s186, %s202
    %p204 = scmp.eq.s32.totalorder %s21, 0
    %p205 = por %p203, %p204
    %s206 = ssub.s32 %s15, %s22
    %p207 = scmp.eq.s32.totalorder %s206, 0
    %s209 = sadd.s32 %s208, 1
    %s210 = scalar_select %p207, %s208, %s209
    %p213 = pneg %p207
    %p214 = scmp.eq.s32.totalorder %s15, 1
    %p215 = por %p213, %p214
    %p216 = scmp.ne.s32.totalorder %s208, %s211
    %p217 = scmp.eq.s32.totalorder %s15, 0
    %p218 = por %p216, %p217
    %p219 = scmp.ne.s32.totalorder %s208, %s211
    %p220 = scmp.eq.s32.totalorder %s20, 1
    %p221 = por %p219, %p220
    %p222 = scmp.ne.s32.totalorder %s211, %s212
    %p223 = scmp.eq.s32.totalorder %s20, 0
    %p224 = por %p222, %p223
    %p225 = scmp.ne.s32.totalorder %s211, %s212
    %p226 = scmp.eq.s32.totalorder %s21, 1
    %p227 = por %p225, %p226
    %p229 = scmp.ne.s32.totalorder %s212, %s228
    %p230 = scmp.eq.s32.totalorder %s21, 0
    %p231 = por %p229, %p230
    %p232 = scmp.le.s32.totalorder 1, %s15
    %p233 = scmp.lt.s32.totalorder %s15, 3
    %p234 = pnand %p232, %p233
    %p235 = pneg %p234
    // Predicated region
    $region9: #{simple_cnn_with_se.4} parent=5 // pred_check
      _
    $region10: #{simple_cnn_with_se.4} parent=5 // pred_check_branch
      %237 = sbr.rel (%p234) target = $region12
    $region11: #{simple_cnn_with_se.4} parent=5 // pred_region
      %s238 = ssub.s32 %s15, 1
      // Predicated region
      $region13: #{simple_cnn_with_se.4} parent=11 // pred_check
        %p239 = pneg %p62
      $region14: #{simple_cnn_with_se.4} parent=11 // pred_check_branch
        %241 = sbr.rel (%p239) target = $region16
      $region15: #{simple_cnn_with_se.4} parent=11 // pred_region
        _
      $region16: #{simple_cnn_with_se.4} parent=11 // pred_fallthru
        _
      // Predicated region
      $region17: #{simple_cnn_with_se.4} parent=11 // pred_check
        %p242 = pneg %p83
      $region18: #{simple_cnn_with_se.4} parent=11 // pred_check_branch
        %244 = sbr.rel (%p242) target = $region20
      $region19: #{simple_cnn_with_se.4} parent=11 // pred_region
        _
      $region20: #{simple_cnn_with_se.4} parent=11 // pred_fallthru
        _
      // Predicated region
      $region21: #{simple_cnn_with_se.4} parent=11 // pred_check
        %p245 = pneg %p104
      $region22: #{simple_cnn_with_se.4} parent=11 // pred_check_branch
        %247 = sbr.rel (%p245) target = $region24
      $region23: #{simple_cnn_with_se.4} parent=11 // pred_region
        _
      $region24: #{simple_cnn_with_se.4} parent=11 // pred_fallthru
        _
      // Predicated region
      $region25: #{simple_cnn_with_se.4} parent=11 // pred_check
        %p248 = pneg %p125
      $region26: #{simple_cnn_with_se.4} parent=11 // pred_check_branch
        %250 = sbr.rel (%p248) target = $region28
      $region27: #{simple_cnn_with_se.4} parent=11 // pred_region
        _
      $region28: #{simple_cnn_with_se.4} parent=11 // pred_fallthru
        _
      // Predicated region
      $region29: #{simple_cnn_with_se.4} parent=11 // pred_check
        %p251 = pneg %p146
      $region30: #{simple_cnn_with_se.4} parent=11 // pred_check_branch
        %253 = sbr.rel (%p251) target = $region32
      $region31: #{simple_cnn_with_se.4} parent=11 // pred_region
        _
      $region32: #{simple_cnn_with_se.4} parent=11 // pred_fallthru
        _
    $region12: #{simple_cnn_with_se.4} parent=5 // pred_fallthru
      _
    %p254 = scmp.lt.s32.totalorder %s15, 2
    // Predicated region
    $region33: #{simple_cnn_with_se.4} parent=5 // pred_check
      %p255 = pneg %p254
    $region34: #{simple_cnn_with_se.4} parent=5 // pred_check_branch
      %257 = sbr.rel (%p255) target = $region36
    $region35: #{simple_cnn_with_se.4} parent=5 // pred_region
      // Predicated region
      $region37: #{simple_cnn_with_se.4} parent=35 // pred_check
        %p258 = pneg %p35
      $region38: #{simple_cnn_with_se.4} parent=35 // pred_check_branch
        %260 = sbr.rel (%p258) target = $region40
      $region39: #{simple_cnn_with_se.4} parent=35 // pred_region
        %p261 = scmp.lt.s32.totalorder %s15, 1
        %s262 = scalar_select %p261, %s15, 1
        %s263 = smul.addr %s262, 32
        %s264 = smul.addr %s263, 4
        %s265 = scalar_lea.vmem %s0, %s264
      $region40: #{simple_cnn_with_se.4} parent=35 // pred_fallthru
        _
    $region36: #{simple_cnn_with_se.4} parent=5 // pred_fallthru
      _
    %p266 = scmp.le.s32.totalorder 1, %s15
    %p267 = scmp.lt.s32.totalorder %s15, 3
    %p268 = pnand %p266, %p267
    %p269 = pneg %p268
    // Predicated region
    $region41: #{simple_cnn_with_se.4} parent=5 // pred_check
      _
    $region42: #{simple_cnn_with_se.4} parent=5 // pred_check_branch
      %271 = sbr.rel (%p268) target = $region44
    $region43: #{simple_cnn_with_se.4} parent=5 // pred_region
      %s272 = ssub.s32 %s15, 1
      %p273 = scmp.lt.s32.totalorder %s20, 1
      %s274 = scalar_select %p273, %s20, 1
      %s275 = smul.addr %s274, 32
      %s276 = smul.addr %s275, 4
      %s277 = scalar_lea.vmem %s0, %s276
      %p278 = pneg %p41
      %p279 = pneg %p38
      %p280 = pneg %p62
      %p281 = pneg %p59
      %p282 = pneg %p83
      %p283 = pneg %p80
      %p284 = pneg %p104
      %p285 = pneg %p101
      %p286 = pneg %p125
      %p287 = pneg %p122
      %p288 = pneg %p146
      %p289 = pneg %p143
      %p290 = pneg %p172
      %p291 = pneg %p169
      %p292 = scmp.lt.s32.totalorder %s20, 1
      %s293 = scalar_select %p292, %s20, 1
      %s294 = smul.addr %s293, 32
      %s295 = smul.addr %s294, 4
      %s296 = scalar_lea.vmem %s6, %s295
      %p297 = pneg %p198
      %p298 = pneg %p195
      %p299 = scmp.lt.s32.totalorder %s20, 1
      %s300 = scalar_select %p299, %s20, 1
      %s301 = scalar_lea.vmem %s7, %s300
      %p302 = pneg %p224
      %p303 = pneg %p221
      %p304 = scmp.lt.s32.totalorder %s20, 1
      %s305 = scalar_select %p304, %s20, 1
      %s306 = scalar_lea.vmem %s8, %s305
      %p307 = scmp.lt.s32.totalorder %s20, 1
      %s308 = scalar_select %p307, %s20, 1
      %s309 = smul.addr %s308, 32
      %s310 = smul.addr %s309, 4
      %s311 = scalar_lea.vmem %s0, %s310
      %p312 = scmp.lt.s32.totalorder %s20, 1
      %s313 = scalar_select %p312, %s20, 1
      %s314 = smul.addr %s313, 32
      %s315 = smul.addr %s314, 4
      %s316 = scalar_lea.vmem %s6, %s315
      %p317 = scmp.lt.s32.totalorder %s20, 1
      %s318 = scalar_select %p317, %s20, 1
      %s319 = scalar_lea.vmem %s7, %s318
      %p320 = scmp.lt.s32.totalorder %s20, 1
      %s321 = scalar_select %p320, %s20, 1
      %s322 = scalar_lea.vmem %s8, %s321
      %v324 = vld [vmem:[%s311] sm:$0xf]
      %v325 = vld [vmem:[%s311 + $0x4] sm:$0xf]
      %v326 = vld [vmem:[%s311 + $0x8] sm:$0xf]
      %v327 = vld [vmem:[%s311 + $0xc] sm:$0xf]
      %v328 = vld [vmem:[%s311 + $0x10] sm:$0xf]
      %v329 = vld [vmem:[%s311 + $0x14] sm:$0xf]
      %v330 = vld [vmem:[%s311 + $0x18] sm:$0xf]
      %v331 = vld [vmem:[%s311 + $0x1c] sm:$0xf]
      %v332 = vld [vmem:[%s311 + $0x20] sm:$0xf]
      %v333 = vld [vmem:[%s311 + $0x24] sm:$0xf]
      %v334 = vld [vmem:[%s311 + $0x28] sm:$0xf]
      %v335 = vld [vmem:[%s311 + $0x2c] sm:$0xf]
      %v336 = vld [vmem:[%s311 + $0x30] sm:$0xf]
      %v337 = vld [vmem:[%s311 + $0x34] sm:$0xf]
      %v338 = vld [vmem:[%s311 + $0x38] sm:$0xf]
      %v339 = vld [vmem:[%s311 + $0x3c] sm:$0xf]
      %v340 = vld [vmem:[%s311 + $0x40] sm:$0xf]
      %v341 = vld [vmem:[%s311 + $0x44] sm:$0xf]
      %v342 = vld [vmem:[%s311 + $0x48] sm:$0xf]
      %v343 = vld [vmem:[%s311 + $0x4c] sm:$0xf]
      %v344 = vld [vmem:[%s311 + $0x50] sm:$0xf]
      %v345 = vld [vmem:[%s311 + $0x54] sm:$0xf]
      %v346 = vld [vmem:[%s311 + $0x58] sm:$0xf]
      %v347 = vld [vmem:[%s311 + $0x5c] sm:$0xf]
      %v348 = vld [vmem:[%s311 + $0x60] sm:$0xf]
      %v349 = vld [vmem:[%s311 + $0x64] sm:$0xf]
      %v350 = vld [vmem:[%s311 + $0x68] sm:$0xf]
      %v351 = vld [vmem:[%s311 + $0x6c] sm:$0xf]
      %v352 = vld [vmem:[%s311 + $0x70] sm:$0xf]
      %v353 = vld [vmem:[%s311 + $0x74] sm:$0xf]
      %v354 = vld [vmem:[%s311 + $0x78] sm:$0xf]
      %v355 = vld [vmem:[%s311 + $0x7c] sm:$0xf]
      %v356 = vunpack.c.l.bf16 %v324
      %v357 = vunpack.c.l.bf16 %v325
      %v358 = vunpack.c.l.bf16 %v326
      %v359 = vunpack.c.l.bf16 %v327
      %v360 = vunpack.c.l.bf16 %v328
      %v361 = vunpack.c.l.bf16 %v329
      %v362 = vunpack.c.l.bf16 %v330
      %v363 = vunpack.c.l.bf16 %v331
      %v364 = vunpack.c.l.bf16 %v332
      %v365 = vunpack.c.l.bf16 %v333
      %v366 = vunpack.c.l.bf16 %v334
      %v367 = vunpack.c.l.bf16 %v335
      %v368 = vunpack.c.l.bf16 %v336
      %v369 = vunpack.c.l.bf16 %v337
      %v370 = vunpack.c.l.bf16 %v338
      %v371 = vunpack.c.l.bf16 %v339
      %v372 = vunpack.c.l.bf16 %v340
      %v373 = vunpack.c.l.bf16 %v341
      %v374 = vunpack.c.l.bf16 %v342
      %v375 = vunpack.c.l.bf16 %v343
      %v376 = vunpack.c.l.bf16 %v344
      %v377 = vunpack.c.l.bf16 %v345
      %v378 = vunpack.c.l.bf16 %v346
      %v379 = vunpack.c.l.bf16 %v347
      %v380 = vunpack.c.l.bf16 %v348
      %v381 = vunpack.c.l.bf16 %v349
      %v382 = vunpack.c.l.bf16 %v350
      %v383 = vunpack.c.l.bf16 %v351
      %v384 = vunpack.c.l.bf16 %v352
      %v385 = vunpack.c.l.bf16 %v353
      %v386 = vunpack.c.l.bf16 %v354
      %v387 = vunpack.c.l.bf16 %v355
      %v388 = vld [vmem:[%s1] sm:$0x1]
      %v390 = vperm.slane %v388, 0
      %v392 = vmul.f32 %v356, %v390
      %v393 = vmul.f32 %v357, %v390
      %v394 = vmul.f32 %v358, %v390
      %v395 = vmul.f32 %v359, %v390
      %v396 = vmul.f32 %v360, %v390
      %v397 = vmul.f32 %v361, %v390
      %v398 = vmul.f32 %v362, %v390
      %v399 = vmul.f32 %v363, %v390
      %v400 = vmul.f32 %v364, %v390
      %v401 = vmul.f32 %v365, %v390
      %v402 = vmul.f32 %v366, %v390
      %v403 = vmul.f32 %v367, %v390
      %v404 = vmul.f32 %v368, %v390
      %v405 = vmul.f32 %v369, %v390
      %v406 = vmul.f32 %v370, %v390
      %v407 = vmul.f32 %v371, %v390
      %v408 = vmul.f32 %v372, %v390
      %v409 = vmul.f32 %v373, %v390
      %v410 = vmul.f32 %v374, %v390
      %v411 = vmul.f32 %v375, %v390
      %v412 = vmul.f32 %v376, %v390
      %v413 = vmul.f32 %v377, %v390
      %v414 = vmul.f32 %v378, %v390
      %v415 = vmul.f32 %v379, %v390
      %v416 = vmul.f32 %v380, %v390
      %v417 = vmul.f32 %v381, %v390
      %v418 = vmul.f32 %v382, %v390
      %v419 = vmul.f32 %v383, %v390
      %v420 = vmul.f32 %v384, %v390
      %v421 = vmul.f32 %v385, %v390
      %v422 = vmul.f32 %v386, %v390
      %v423 = vmul.f32 %v387, %v390
      %v424 = vld [vmem:[%s2] sm:$0x1]
      %v426 = vperm.slane %v424, 0
      %v428 = vadd.f32 %v392, %v426
      %v429 = vadd.f32 %v393, %v426
      %v430 = vadd.f32 %v394, %v426
      %v431 = vadd.f32 %v395, %v426
      %v432 = vadd.f32 %v396, %v426
      %v433 = vadd.f32 %v397, %v426
      %v434 = vadd.f32 %v398, %v426
      %v435 = vadd.f32 %v399, %v426
      %v436 = vadd.f32 %v400, %v426
      %v437 = vadd.f32 %v401, %v426
      %v438 = vadd.f32 %v402, %v426
      %v439 = vadd.f32 %v403, %v426
      %v440 = vadd.f32 %v404, %v426
      %v441 = vadd.f32 %v405, %v426
      %v442 = vadd.f32 %v406, %v426
      %v443 = vadd.f32 %v407, %v426
      %v444 = vadd.f32 %v408, %v426
      %v445 = vadd.f32 %v409, %v426
      %v446 = vadd.f32 %v410, %v426
      %v447 = vadd.f32 %v411, %v426
      %v448 = vadd.f32 %v412, %v426
      %v449 = vadd.f32 %v413, %v426
      %v450 = vadd.f32 %v414, %v426
      %v451 = vadd.f32 %v415, %v426
      %v452 = vadd.f32 %v416, %v426
      %v453 = vadd.f32 %v417, %v426
      %v454 = vadd.f32 %v418, %v426
      %v455 = vadd.f32 %v419, %v426
      %v456 = vadd.f32 %v420, %v426
      %v457 = vadd.f32 %v421, %v426
      %v458 = vadd.f32 %v422, %v426
      %v459 = vadd.f32 %v423, %v426
      %v460 = vmax.f32 %v428, 0.0
      %v461 = vmax.f32 %v429, 0.0
      %v462 = vmax.f32 %v430, 0.0
      %v463 = vmax.f32 %v431, 0.0
      %v464 = vmax.f32 %v432, 0.0
      %v465 = vmax.f32 %v433, 0.0
      %v466 = vmax.f32 %v434, 0.0
      %v467 = vmax.f32 %v435, 0.0
      %v468 = vmax.f32 %v436, 0.0
      %v469 = vmax.f32 %v437, 0.0
      %v470 = vmax.f32 %v438, 0.0
      %v471 = vmax.f32 %v439, 0.0
      %v472 = vmax.f32 %v440, 0.0
      %v473 = vmax.f32 %v441, 0.0
      %v474 = vmax.f32 %v442, 0.0
      %v475 = vmax.f32 %v443, 0.0
      %v476 = vmax.f32 %v444, 0.0
      %v477 = vmax.f32 %v445, 0.0
      %v478 = vmax.f32 %v446, 0.0
      %v479 = vmax.f32 %v447, 0.0
      %v480 = vmax.f32 %v448, 0.0
      %v481 = vmax.f32 %v449, 0.0
      %v482 = vmax.f32 %v450, 0.0
      %v483 = vmax.f32 %v451, 0.0
      %v484 = vmax.f32 %v452, 0.0
      %v485 = vmax.f32 %v453, 0.0
      %v486 = vmax.f32 %v454, 0.0
      %v487 = vmax.f32 %v455, 0.0
      %v488 = vmax.f32 %v456, 0.0
      %v489 = vmax.f32 %v457, 0.0
      %v490 = vmax.f32 %v458, 0.0
      %v491 = vmax.f32 %v459, 0.0
      %vm492 = vcmask 523264
      %v493 = vsel %vm492, %v460, 0.0
      %v494 = vsel %vm492, %v461, 0.0
      %v495 = vadd.f32 %v493, %v494
      %v496 = vsel %vm492, %v462, 0.0
      %v497 = vadd.f32 %v495, %v496
      %v498 = vsel %vm492, %v463, 0.0
      %v499 = vadd.f32 %v497, %v498
      %v500 = vsel %vm492, %v464, 0.0
      %v501 = vadd.f32 %v499, %v500
      %v502 = vsel %vm492, %v465, 0.0
      %v503 = vadd.f32 %v501, %v502
      %v504 = vsel %vm492, %v466, 0.0
      %v505 = vadd.f32 %v503, %v504
      %v506 = vsel %vm492, %v467, 0.0
      %v507 = vadd.f32 %v505, %v506
      %v508 = vsel %vm492, %v468, 0.0
      %v509 = vadd.f32 %v507, %v508
      %v510 = vsel %vm492, %v469, 0.0
      %v511 = vadd.f32 %v509, %v510
      %v512 = vsel %vm492, %v470, 0.0
      %v513 = vadd.f32 %v511, %v512
      %v514 = vsel %vm492, %v471, 0.0
      %v515 = vadd.f32 %v513, %v514
      %v516 = vsel %vm492, %v472, 0.0
      %v517 = vadd.f32 %v515, %v516
      %v518 = vsel %vm492, %v473, 0.0
      %v519 = vadd.f32 %v517, %v518
      %v520 = vsel %vm492, %v474, 0.0
      %v521 = vadd.f32 %v519, %v520
      %v522 = vsel %vm492, %v475, 0.0
      %v523 = vadd.f32 %v521, %v522
      %v524 = vsel %vm492, %v476, 0.0
      %v525 = vadd.f32 %v523, %v524
      %v526 = vsel %vm492, %v477, 0.0
      %v527 = vadd.f32 %v525, %v526
      %v528 = vsel %vm492, %v478, 0.0
      %v529 = vadd.f32 %v527, %v528
      %v530 = vsel %vm492, %v479, 0.0
      %v531 = vadd.f32 %v529, %v530
      %v532 = vsel %vm492, %v480, 0.0
      %v533 = vadd.f32 %v531, %v532
      %v534 = vsel %vm492, %v481, 0.0
      %v535 = vadd.f32 %v533, %v534
      %v536 = vsel %vm492, %v482, 0.0
      %v537 = vadd.f32 %v535, %v536
      %v538 = vsel %vm492, %v483, 0.0
      %v539 = vadd.f32 %v537, %v538
      %v540 = vsel %vm492, %v484, 0.0
      %v541 = vadd.f32 %v539, %v540
      %v542 = vsel %vm492, %v485, 0.0
      %v543 = vadd.f32 %v541, %v542
      %v544 = vsel %vm492, %v486, 0.0
      %v545 = vadd.f32 %v543, %v544
      %v546 = vsel %vm492, %v487, 0.0
      %v547 = vadd.f32 %v545, %v546
      %v548 = vsel %vm492, %v488, 0.0
      %v549 = vadd.f32 %v547, %v548
      %v550 = vsel %vm492, %v489, 0.0
      %v551 = vadd.f32 %v549, %v550
      %v552 = vsel %vm492, %v490, 0.0
      %v553 = vadd.f32 %v551, %v552
      %v554 = vsel %vm492, %v491, 0.0
      %v555 = vadd.f32 %v553, %v554
      %v556 = vrot.slane %v555, 4
      %v557 = vadd.f32 %v555, %v556
      %v558 = vrot.slane %v557, 2
      %v559 = vadd.f32 %v557, %v558
      %v560 = vrot.slane %v559, 1
      %v561 = vadd.f32 %v559, %v560
      %v562 = vrcp.pop 256.0
      %v563 = vmul.f32 256.0, %v562
      %v564 = vsub.f32 1.0, %v563
      %v565 = vmul.f32 %v562, %v564
      %v566 = vadd.f32 %v562, %v565
      %vm567 = vweird.f32 %v562
      %v568 = vsel %vm567, %v562, %v566
      %v569 = vmul.f32 %v561, %v568
      %v570 = vld [vmem:[%s3] sm:$0xff]
      %v571 = vld [vmem:[%s3 + $0x8] sm:$0xff]
      %v572 = vld [vmem:[%s3 + $0x10] sm:$0xff]
      %v573 = vld [vmem:[%s3 + $0x18] sm:$0xff]
      %v574 = vld [vmem:[%s3 + $0x20] sm:$0xff]
      %v575 = vld [vmem:[%s3 + $0x28] sm:$0xff]
      %v576 = vld [vmem:[%s3 + $0x30] sm:$0xff]
      %v577 = vld [vmem:[%s3 + $0x38] sm:$0xff]
      %v579 = vsel %vm492, %v569, 0
      %581 = vmatpush.msra.mxu0 0.0
      %582 = vmatpush.msra.mxu0 0.0
      %583 = vmatpush.msra.mxu0 0.0
      %584 = vmatpush.msra.mxu0 0.0
      %585 = vmatpush.msra.mxu0 0.0
      %586 = vmatpush.msra.mxu0 0.0
      %587 = vmatpush.msra.mxu0 0.0
      %588 = vmatpush.msra.mxu0 0.0
      %589 = vmatpush.msra.mxu0 %v577
      %590 = vmatpush.msra.mxu0 %v576
      %591 = vmatpush.msra.mxu0 %v575
      %592 = vmatpush.msra.mxu0 %v574
      %593 = vmatpush.msra.mxu0 %v573
      %594 = vmatpush.msra.mxu0 %v572
      %595 = vmatpush.msra.mxu0 %v571
      %596 = vmatpush.msra.mxu0 %v570
      %597 = vmatmul.f32.gmra.mxu0 %v579
      %v598 = vpop.f32.mrf.mxu0
      %v599 = vadd.f32 0.0, %v598
      %600 = vdwg.mxu0
      %v601 = vmax.f32 %v599, 0.0
      %v602 = vld [vmem:[%s4] sm:$0xf]
      %vm603 = vcmask 31744
      %v605 = vsel %vm603, %v601, 0
      %vm607 = vcmask 1043456
      %v609 = vsel %vm607, %v602, 0
      %611 = vmatpush.msra.mxu0 0.0
      %612 = vmatpush.msra.mxu0 0.0
      %613 = vmatpush.msra.mxu0 0.0
      %614 = vmatpush.msra.mxu0 0.0
      %615 = vmatpush.msra.mxu0 0.0
      %616 = vmatpush.msra.mxu0 0.0
      %617 = vmatpush.msra.mxu0 0.0
      %618 = vmatpush.msra.mxu0 0.0
      %619 = vmatpush.msra.mxu0 0.0
      %620 = vmatpush.msra.mxu0 0.0
      %621 = vmatpush.msra.mxu0 0.0
      %622 = vmatpush.msra.mxu0 0.0
      %623 = vmatpush.msra.mxu0 0.0
      %624 = vmatpush.msra.mxu0 0.0
      %625 = vmatpush.msra.mxu0 0.0
      %626 = vmatpush.msra.mxu0 %v609
      %627 = vmatmul.f32.gmra.mxu0 %v605
      %v628 = vpop.f32.mrf.mxu0
      %v629 = vadd.f32 0.0, %v628
      %630 = vdwg.mxu0
      %v631 = vxor.u32 %v629, 2147483648
      %v632 = vmul.f32 %v631, 1.442695
      %v633 = vpow.pop %v632
      %v634 = vadd.f32 %v633, 1.0
      %v635 = vrcp.pop %v634
      %v636 = vmul.f32 %v634, %v635
      %v637 = vsub.f32 1.0, %v636
      %v638 = vmul.f32 %v635, %v637
      %v639 = vadd.f32 %v635, %v638
      %vm640 = vweird.f32 %v634
      %vm641 = vweird.f32 %v635
      %vm642 = vmor %vm640, %vm641
      %v643 = vsel %vm642, %v635, %v639
      %v644 = vand.u32 2147483647, %v634
      %vm645 = vcmp.eq.f32.partialorder %v644, 8.507059e+37
      %v646 = vand.u32 %v634, 2147483648
      %v647 = vor.u32 1.1754944e-38, %v646
      %v648 = vsel %vm645, %v647, %v643
      %v649 = vmul.f32 1.0, %v648
      %v650 = vperm.slane %v649, 0
      %v651 = vmul.f32 %v460, %v650
      %v652 = vmul.f32 %v461, %v650
      %v653 = vmul.f32 %v462, %v650
      %v654 = vmul.f32 %v463, %v650
      %v655 = vmul.f32 %v464, %v650
      %v656 = vmul.f32 %v465, %v650
      %v657 = vmul.f32 %v466, %v650
      %v658 = vmul.f32 %v467, %v650
      %v659 = vmul.f32 %v468, %v650
      %v660 = vmul.f32 %v469, %v650
      %v661 = vmul.f32 %v470, %v650
      %v662 = vmul.f32 %v471, %v650
      %v663 = vmul.f32 %v472, %v650
      %v664 = vmul.f32 %v473, %v650
      %v665 = vmul.f32 %v474, %v650
      %v666 = vmul.f32 %v475, %v650
      %v667 = vmul.f32 %v476, %v650
      %v668 = vmul.f32 %v477, %v650
      %v669 = vmul.f32 %v478, %v650
      %v670 = vmul.f32 %v479, %v650
      %v671 = vmul.f32 %v480, %v650
      %v672 = vmul.f32 %v481, %v650
      %v673 = vmul.f32 %v482, %v650
      %v674 = vmul.f32 %v483, %v650
      %v675 = vmul.f32 %v484, %v650
      %v676 = vmul.f32 %v485, %v650
      %v677 = vmul.f32 %v486, %v650
      %v678 = vmul.f32 %v487, %v650
      %v679 = vmul.f32 %v488, %v650
      %v680 = vmul.f32 %v489, %v650
      %v681 = vmul.f32 %v490, %v650
      %v682 = vmul.f32 %v491, %v650
      %v683 = vpack.c.bf16 %v651, %v651
      %v684 = vpack.c.bf16 %v652, %v652
      %v685 = vpack.c.bf16 %v653, %v653
      %v686 = vpack.c.bf16 %v654, %v654
      %v687 = vpack.c.bf16 %v655, %v655
      %v688 = vpack.c.bf16 %v656, %v656
      %v689 = vpack.c.bf16 %v657, %v657
      %v690 = vpack.c.bf16 %v658, %v658
      %v691 = vpack.c.bf16 %v659, %v659
      %v692 = vpack.c.bf16 %v660, %v660
      %v693 = vpack.c.bf16 %v661, %v661
      %v694 = vpack.c.bf16 %v662, %v662
      %v695 = vpack.c.bf16 %v663, %v663
      %v696 = vpack.c.bf16 %v664, %v664
      %v697 = vpack.c.bf16 %v665, %v665
      %v698 = vpack.c.bf16 %v666, %v666
      %v699 = vpack.c.bf16 %v667, %v667
      %v700 = vpack.c.bf16 %v668, %v668
      %v701 = vpack.c.bf16 %v669, %v669
      %v702 = vpack.c.bf16 %v670, %v670
      %v703 = vpack.c.bf16 %v671, %v671
      %v704 = vpack.c.bf16 %v672, %v672
      %v705 = vpack.c.bf16 %v673, %v673
      %v706 = vpack.c.bf16 %v674, %v674
      %v707 = vpack.c.bf16 %v675, %v675
      %v708 = vpack.c.bf16 %v676, %v676
      %v709 = vpack.c.bf16 %v677, %v677
      %v710 = vpack.c.bf16 %v678, %v678
      %v711 = vpack.c.bf16 %v679, %v679
      %v712 = vpack.c.bf16 %v680, %v680
      %v713 = vpack.c.bf16 %v681, %v681
      %v714 = vpack.c.bf16 %v682, %v682
      %vm715 = vcmask 519168
      %716 = vst.msk [vmem:[#allocation2] sm:$0xf] %vm715, 0
      %717 = vst.msk [vmem:[#allocation2 + $0x4] sm:$0xf] %vm715, 0
      %718 = vst.msk [vmem:[#allocation2 + $0x8] sm:$0xf] %vm715, 0
      %719 = vst.msk [vmem:[#allocation2 + $0xc] sm:$0xf] %vm715, 0
      %720 = vst.msk [vmem:[#allocation2 + $0x10] sm:$0xf] %vm715, 0
      %721 = vst.msk [vmem:[#allocation2 + $0x14] sm:$0xf] %vm715, 0
      %722 = vst.msk [vmem:[#allocation2 + $0x18] sm:$0xf] %vm715, 0
      %723 = vst.msk [vmem:[#allocation2 + $0x1c] sm:$0xf] %vm715, 0
      %724 = vst.msk [vmem:[#allocation2 + $0x20] sm:$0xf] %vm715, 0
      %725 = vst.msk [vmem:[#allocation2 + $0x24] sm:$0xf] %vm715, 0
      %726 = vst.msk [vmem:[#allocation2 + $0x28] sm:$0xf] %vm715, 0
      %727 = vst.msk [vmem:[#allocation2 + $0x2c] sm:$0xf] %vm715, 0
      %728 = vst.msk [vmem:[#allocation2 + $0x30] sm:$0xf] %vm715, 0
      %729 = vst.msk [vmem:[#allocation2 + $0x34] sm:$0xf] %vm715, 0
      %730 = vst.msk [vmem:[#allocation2 + $0x38] sm:$0xf] %vm715, 0
      %731 = vst.msk [vmem:[#allocation2 + $0x3c] sm:$0xf] %vm715, 0
      %732 = vst.msk [vmem:[#allocation2 + $0x40] sm:$0xf] %vm715, 0
      %733 = vst.msk [vmem:[#allocation2 + $0x44] sm:$0xf] %vm715, 0
      %734 = vst.msk [vmem:[#allocation2 + $0x48] sm:$0xf] %vm715, 0
      %735 = vst.msk [vmem:[#allocation2 + $0x4c] sm:$0xf] %vm715, 0
      %736 = vst.msk [vmem:[#allocation2 + $0x50] sm:$0xf] %vm715, 0
      %737 = vst.msk [vmem:[#allocation2 + $0x54] sm:$0xf] %vm715, 0
      %738 = vst.msk [vmem:[#allocation2 + $0x58] sm:$0xf] %vm715, 0
      %739 = vst.msk [vmem:[#allocation2 + $0x5c] sm:$0xf] %vm715, 0
      %740 = vst.msk [vmem:[#allocation2 + $0x60] sm:$0xf] %vm715, 0
      %741 = vst.msk [vmem:[#allocation2 + $0x64] sm:$0xf] %vm715, 0
      %742 = vst.msk [vmem:[#allocation2 + $0x68] sm:$0xf] %vm715, 0
      %743 = vst.msk [vmem:[#allocation2 + $0x6c] sm:$0xf] %vm715, 0
      %744 = vst.msk [vmem:[#allocation2 + $0x70] sm:$0xf] %vm715, 0
      %745 = vst.msk [vmem:[#allocation2 + $0x74] sm:$0xf] %vm715, 0
      %746 = vst.msk [vmem:[#allocation2 + $0x78] sm:$0xf] %vm715, 0
      %747 = vst.msk [vmem:[#allocation2 + $0x7c] sm:$0xf] %vm715, 0
      %748 = vst.msk [vmem:[#allocation2 + $0x80] sm:$0xf] %vm715, 0
      %749 = vst.msk [vmem:[#allocation2 + $0x84] sm:$0xf] %vm715, 0
      %750 = vst.msk [vmem:[#allocation2 + $0x88] sm:$0xf] %vm715, 0
      %751 = vst.msk [vmem:[#allocation2 + $0x8c] sm:$0xf] %vm715, 0
      %752 = vst.msk [vmem:[#allocation2 + $0x90] sm:$0xf] %vm715, 0
      %753 = vst.msk [vmem:[#allocation2 + $0x94] sm:$0xf] %vm715, 0
      %754 = vst.msk [vmem:[#allocation2 + $0x98] sm:$0xf] %vm715, 0
      %755 = vst.msk [vmem:[#allocation2 + $0x9c] sm:$0xf] %vm715, 0
      %756 = vst.msk [vmem:[#allocation2 + $0xa0] sm:$0xf] %vm715, 0
      %757 = vst.msk [vmem:[#allocation2 + $0xa4] sm:$0xf] %vm715, 0
      %758 = vst.msk [vmem:[#allocation2 + $0xa8] sm:$0xf] %vm715, 0
      %759 = vst.msk [vmem:[#allocation2 + $0xac] sm:$0xf] %vm715, 0
      %760 = vst.msk [vmem:[#allocation2 + $0xb0] sm:$0xf] %vm715, 0
      %761 = vst.msk [vmem:[#allocation2 + $0xb4] sm:$0xf] %vm715, 0
      %762 = vst.msk [vmem:[#allocation2 + $0xb8] sm:$0xf] %vm715, 0
      %763 = vst.msk [vmem:[#allocation2 + $0xbc] sm:$0xf] %vm715, 0
      %764 = vst.msk [vmem:[#allocation2 + $0xc0] sm:$0xf] %vm715, 0
      %765 = vst.msk [vmem:[#allocation2 + $0xc4] sm:$0xf] %vm715, 0
      %766 = vst.msk [vmem:[#allocation2 + $0xc8] sm:$0xf] %vm715, 0
      %767 = vst.msk [vmem:[#allocation2 + $0xcc] sm:$0xf] %vm715, 0
      %768 = vst.msk [vmem:[#allocation2 + $0xd0] sm:$0xf] %vm715, 0
      %769 = vst.msk [vmem:[#allocation2 + $0xd4] sm:$0xf] %vm715, 0
      %770 = vst.msk [vmem:[#allocation2 + $0xd8] sm:$0xf] %vm715, 0
      %771 = vst.msk [vmem:[#allocation2 + $0xdc] sm:$0xf] %vm715, 0
      %772 = vst.msk [vmem:[#allocation2 + $0xe0] sm:$0xf] %vm715, 0
      %773 = vst.msk [vmem:[#allocation2 + $0xe4] sm:$0xf] %vm715, 0
      %774 = vst.msk [vmem:[#allocation2 + $0xe8] sm:$0xf] %vm715, 0
      %775 = vst.msk [vmem:[#allocation2 + $0xec] sm:$0xf] %vm715, 0
      %776 = vst.msk [vmem:[#allocation2 + $0xf0] sm:$0xf] %vm715, 0
      %777 = vst.msk [vmem:[#allocation2 + $0xf4] sm:$0xf] %vm715, 0
      %778 = vst.msk [vmem:[#allocation2 + $0xf8] sm:$0xf] %vm715, 0
      %779 = vst.msk [vmem:[#allocation2 + $0xfc] sm:$0xf] %vm715, 0
      %780 = vst.msk [vmem:[#allocation2 + $0x100] sm:$0xf] %vm715, 0
      %781 = vst.msk [vmem:[#allocation2 + $0x104] sm:$0xf] %vm715, 0
      %782 = vst.msk [vmem:[#allocation2 + $0x108] sm:$0xf] %vm715, 0
      %783 = vst.msk [vmem:[#allocation2 + $0x10c] sm:$0xf] %vm715, 0
      %784 = vst.msk [vmem:[#allocation2 + $0x110] sm:$0xf] %vm715, 0
      %785 = vst.msk [vmem:[#allocation2 + $0x114] sm:$0xf] %vm715, 0
      %786 = vst.msk [vmem:[#allocation2 + $0x118] sm:$0xf] %vm715, 0
      %787 = vst.msk [vmem:[#allocation2 + $0x11c] sm:$0xf] %vm715, 0
      %s788 = scalar_lea.vmem [#allocation2], 16
      %789 = vst.msk [vmem:[%s788 + $0x4] sm:$0xf] %vm715, %v683
      %790 = vst.msk [vmem:[%s788 + $0x8] sm:$0xf] %vm715, %v684
      %791 = vst.msk [vmem:[%s788 + $0x14] sm:$0xf] %vm715, %v685
      %792 = vst.msk [vmem:[%s788 + $0x18] sm:$0xf] %vm715, %v686
      %793 = vst.msk [vmem:[%s788 + $0x24] sm:$0xf] %vm715, %v687
      %794 = vst.msk [vmem:[%s788 + $0x28] sm:$0xf] %vm715, %v688
      %795 = vst.msk [vmem:[%s788 + $0x34] sm:$0xf] %vm715, %v689
      %796 = vst.msk [vmem:[%s788 + $0x38] sm:$0xf] %vm715, %v690
      %797 = vst.msk [vmem:[%s788 + $0x44] sm:$0xf] %vm715, %v691
      %798 = vst.msk [vmem:[%s788 + $0x48] sm:$0xf] %vm715, %v692
      %799 = vst.msk [vmem:[%s788 + $0x54] sm:$0xf] %vm715, %v693
      %800 = vst.msk [vmem:[%s788 + $0x58] sm:$0xf] %vm715, %v694
      %801 = vst.msk [vmem:[%s788 + $0x64] sm:$0xf] %vm715, %v695
      %802 = vst.msk [vmem:[%s788 + $0x68] sm:$0xf] %vm715, %v696
      %803 = vst.msk [vmem:[%s788 + $0x74] sm:$0xf] %vm715, %v697
      %804 = vst.msk [vmem:[%s788 + $0x78] sm:$0xf] %vm715, %v698
      %805 = vst.msk [vmem:[%s788 + $0x84] sm:$0xf] %vm715, %v699
      %806 = vst.msk [vmem:[%s788 + $0x88] sm:$0xf] %vm715, %v700
      %807 = vst.msk [vmem:[%s788 + $0x94] sm:$0xf] %vm715, %v701
      %808 = vst.msk [vmem:[%s788 + $0x98] sm:$0xf] %vm715, %v702
      %809 = vst.msk [vmem:[%s788 + $0xa4] sm:$0xf] %vm715, %v703
      %810 = vst.msk [vmem:[%s788 + $0xa8] sm:$0xf] %vm715, %v704
      %811 = vst.msk [vmem:[%s788 + $0xb4] sm:$0xf] %vm715, %v705
      %812 = vst.msk [vmem:[%s788 + $0xb8] sm:$0xf] %vm715, %v706
      %813 = vst.msk [vmem:[%s788 + $0xc4] sm:$0xf] %vm715, %v707
      %814 = vst.msk [vmem:[%s788 + $0xc8] sm:$0xf] %vm715, %v708
      %815 = vst.msk [vmem:[%s788 + $0xd4] sm:$0xf] %vm715, %v709
      %816 = vst.msk [vmem:[%s788 + $0xd8] sm:$0xf] %vm715, %v710
      %817 = vst.msk [vmem:[%s788 + $0xe4] sm:$0xf] %vm715, %v711
      %818 = vst.msk [vmem:[%s788 + $0xe8] sm:$0xf] %vm715, %v712
      %819 = vst.msk [vmem:[%s788 + $0xf4] sm:$0xf] %vm715, %v713
      %820 = vst.msk [vmem:[%s788 + $0xf8] sm:$0xf] %vm715, %v714
      %v821 = vld [vmem:[#allocation2] sm:$0x8]
      %v822 = vld [vmem:[#allocation2 + $0x4] sm:$0xf]
      %v823 = vld [vmem:[#allocation2 + $0x8] sm:$0xf]
      %v824 = vld [vmem:[#allocation2 + $0x10] sm:$0x8]
      %v825 = vld [vmem:[#allocation2 + $0x14] sm:$0xf]
      %v826 = vld [vmem:[#allocation2 + $0x18] sm:$0xf]
      %v827 = vld [vmem:[#allocation2 + $0x20] sm:$0x8]
      %v828 = vld [vmem:[#allocation2 + $0x24] sm:$0xf]
      %v829 = vld [vmem:[#allocation2 + $0x28] sm:$0xf]
      %v830 = vld [vmem:[#allocation2 + $0x30] sm:$0x8]
      %v831 = vld [vmem:[#allocation2 + $0x34] sm:$0xf]
      %v832 = vld [vmem:[#allocation2 + $0x38] sm:$0xf]
      %v833 = vld [vmem:[#allocation2 + $0x40] sm:$0x8]
      %v834 = vld [vmem:[#allocation2 + $0x44] sm:$0xf]
      %v835 = vld [vmem:[#allocation2 + $0x48] sm:$0xf]
      %v836 = vld [vmem:[#allocation2 + $0x50] sm:$0x8]
      %v837 = vld [vmem:[#allocation2 + $0x54] sm:$0xf]
      %v838 = vld [vmem:[#allocation2 + $0x58] sm:$0xf]
      %v839 = vld [vmem:[#allocation2 + $0x60] sm:$0x8]
      %v840 = vld [vmem:[#allocation2 + $0x64] sm:$0xf]
      %v841 = vld [vmem:[#allocation2 + $0x68] sm:$0xf]
      %v842 = vld [vmem:[#allocation2 + $0x70] sm:$0x8]
      %v843 = vld [vmem:[#allocation2 + $0x74] sm:$0xf]
      %v844 = vld [vmem:[#allocation2 + $0x78] sm:$0xf]
      %v845 = vld [vmem:[#allocation2 + $0x80] sm:$0x8]
      %v846 = vld [vmem:[#allocation2 + $0x84] sm:$0xf]
      %v847 = vld [vmem:[#allocation2 + $0x88] sm:$0xf]
      %v848 = vld [vmem:[#allocation2 + $0x90] sm:$0x8]
      %v849 = vld [vmem:[#allocation2 + $0x94] sm:$0xf]
      %v850 = vld [vmem:[#allocation2 + $0x98] sm:$0xf]
      %v851 = vld [vmem:[#allocation2 + $0xa0] sm:$0x8]
      %v852 = vld [vmem:[#allocation2 + $0xa4] sm:$0xf]
      %v853 = vld [vmem:[#allocation2 + $0xa8] sm:$0xf]
      %v854 = vld [vmem:[#allocation2 + $0xb0] sm:$0x8]
      %v855 = vld [vmem:[#allocation2 + $0xb4] sm:$0xf]
      %v856 = vld [vmem:[#allocation2 + $0xb8] sm:$0xf]
      %v857 = vld [vmem:[#allocation2 + $0xc0] sm:$0x8]
      %v858 = vld [vmem:[#allocation2 + $0xc4] sm:$0xf]
      %v859 = vld [vmem:[#allocation2 + $0xc8] sm:$0xf]
      %v860 = vld [vmem:[#allocation2 + $0xd0] sm:$0x8]
      %v861 = vld [vmem:[#allocation2 + $0xd4] sm:$0xf]
      %v862 = vld [vmem:[#allocation2 + $0xd8] sm:$0xf]
      %v863 = vld [vmem:[#allocation2 + $0xe0] sm:$0x8]
      %v864 = vld [vmem:[#allocation2 + $0xe4] sm:$0xf]
      %v865 = vld [vmem:[#allocation2 + $0xe8] sm:$0xf]
      %v866 = vld [vmem:[#allocation2 + $0xf0] sm:$0x8]
      %v867 = vld [vmem:[#allocation2 + $0xf4] sm:$0xf]
      %v868 = vld [vmem:[#allocation2 + $0xf8] sm:$0xf]
      %vm869 = vsmask.f32 256
      %vm870 = vsmask.f32 4368
      %vm871 = vmor %vm869, %vm870
      %v873 = vshrl.u32 %v821, 16
      %v875 = vrot.slane %v873, 7
      %v876 = vrot.slane %v875, 4
      %v878 = vshrl.u32 %v822, 16
      %v880 = vrot.slane %v878, 7
      %v881 = vshll.u32 %v822, 16
      %v883 = vor.u32 %v880, %v881
      %v884 = vsel %vm871, %v876, %v883
      %v885 = vrot.slane %v880, 4
      %v887 = vshrl.u32 %v823, 16
      %v889 = vrot.slane %v887, 7
      %v890 = vshll.u32 %v823, 16
      %v892 = vor.u32 %v889, %v890
      %v893 = vsel %vm871, %v885, %v892
      %v895 = vshrl.u32 %v824, 16
      %v897 = vrot.slane %v895, 7
      %v898 = vrot.slane %v897, 4
      %v900 = vshrl.u32 %v825, 16
      %v902 = vrot.slane %v900, 7
      %v903 = vshll.u32 %v825, 16
      %v905 = vor.u32 %v902, %v903
      %v906 = vsel %vm871, %v898, %v905
      %v907 = vrot.slane %v902, 4
      %v909 = vshrl.u32 %v826, 16
      %v911 = vrot.slane %v909, 7
      %v912 = vshll.u32 %v826, 16
      %v914 = vor.u32 %v911, %v912
      %v915 = vsel %vm871, %v907, %v914
      %v917 = vshrl.u32 %v827, 16
      %v919 = vrot.slane %v917, 7
      %v920 = vrot.slane %v919, 4
      %v922 = vshrl.u32 %v828, 16
      %v924 = vrot.slane %v922, 7
      %v925 = vshll.u32 %v828, 16
      %v927 = vor.u32 %v924, %v925
      %v928 = vsel %vm871, %v920, %v927
      %v929 = vrot.slane %v924, 4
      %v931 = vshrl.u32 %v829, 16
      %v933 = vrot.slane %v931, 7
      %v934 = vshll.u32 %v829, 16
      %v936 = vor.u32 %v933, %v934
      %v937 = vsel %vm871, %v929, %v936
      %v939 = vshrl.u32 %v830, 16
      %v941 = vrot.slane %v939, 7
      %v942 = vrot.slane %v941, 4
      %v944 = vshrl.u32 %v831, 16
      %v946 = vrot.slane %v944, 7
      %v947 = vshll.u32 %v831, 16
      %v949 = vor.u32 %v946, %v947
      %v950 = vsel %vm871, %v942, %v949
      %v951 = vrot.slane %v946, 4
      %v953 = vshrl.u32 %v832, 16
      %v955 = vrot.slane %v953, 7
      %v956 = vshll.u32 %v832, 16
      %v958 = vor.u32 %v955, %v956
      %v959 = vsel %vm871, %v951, %v958
      %v961 = vshrl.u32 %v833, 16
      %v963 = vrot.slane %v961, 7
      %v964 = vrot.slane %v963, 4
      %v966 = vshrl.u32 %v834, 16
      %v968 = vrot.slane %v966, 7
      %v969 = vshll.u32 %v834, 16
      %v971 = vor.u32 %v968, %v969
      %v972 = vsel %vm871, %v964, %v971
      %v973 = vrot.slane %v968, 4
      %v975 = vshrl.u32 %v835, 16
      %v977 = vrot.slane %v975, 7
      %v978 = vshll.u32 %v835, 16
      %v980 = vor.u32 %v977, %v978
      %v981 = vsel %vm871, %v973, %v980
      %v983 = vshrl.u32 %v836, 16
      %v985 = vrot.slane %v983, 7
      %v986 = vrot.slane %v985, 4
      %v988 = vshrl.u32 %v837, 16
      %v990 = vrot.slane %v988, 7
      %v991 = vshll.u32 %v837, 16
      %v993 = vor.u32 %v990, %v991
      %v994 = vsel %vm871, %v986, %v993
      %v995 = vrot.slane %v990, 4
      %v997 = vshrl.u32 %v838, 16
      %v999 = vrot.slane %v997, 7
      %v1000 = vshll.u32 %v838, 16
      %v1002 = vor.u32 %v999, %v1000
      %v1003 = vsel %vm871, %v995, %v1002
      %v1005 = vshrl.u32 %v839, 16
      %v1007 = vrot.slane %v1005, 7
      %v1008 = vrot.slane %v1007, 4
      %v1010 = vshrl.u32 %v840, 16
      %v1012 = vrot.slane %v1010, 7
      %v1013 = vshll.u32 %v840, 16
      %v1015 = vor.u32 %v1012, %v1013
      %v1016 = vsel %vm871, %v1008, %v1015
      %v1017 = vrot.slane %v1012, 4
      %v1019 = vshrl.u32 %v841, 16
      %v1021 = vrot.slane %v1019, 7
      %v1022 = vshll.u32 %v841, 16
      %v1024 = vor.u32 %v1021, %v1022
      %v1025 = vsel %vm871, %v1017, %v1024
      %v1027 = vshrl.u32 %v842, 16
      %v1029 = vrot.slane %v1027, 7
      %v1030 = vrot.slane %v1029, 4
      %v1032 = vshrl.u32 %v843, 16
      %v1034 = vrot.slane %v1032, 7
      %v1035 = vshll.u32 %v843, 16
      %v1037 = vor.u32 %v1034, %v1035
      %v1038 = vsel %vm871, %v1030, %v1037
      %v1039 = vrot.slane %v1034, 4
      %v1041 = vshrl.u32 %v844, 16
      %v1043 = vrot.slane %v1041, 7
      %v1044 = vshll.u32 %v844, 16
      %v1046 = vor.u32 %v1043, %v1044
      %v1047 = vsel %vm871, %v1039, %v1046
      %v1049 = vshrl.u32 %v845, 16
      %v1051 = vrot.slane %v1049, 7
      %v1052 = vrot.slane %v1051, 4
      %v1054 = vshrl.u32 %v846, 16
      %v1056 = vrot.slane %v1054, 7
      %v1057 = vshll.u32 %v846, 16
      %v1059 = vor.u32 %v1056, %v1057
      %v1060 = vsel %vm871, %v1052, %v1059
      %v1061 = vrot.slane %v1056, 4
      %v1063 = vshrl.u32 %v847, 16
      %v1065 = vrot.slane %v1063, 7
      %v1066 = vshll.u32 %v847, 16
      %v1068 = vor.u32 %v1065, %v1066
      %v1069 = vsel %vm871, %v1061, %v1068
      %v1071 = vshrl.u32 %v848, 16
      %v1073 = vrot.slane %v1071, 7
      %v1074 = vrot.slane %v1073, 4
      %v1076 = vshrl.u32 %v849, 16
      %v1078 = vrot.slane %v1076, 7
      %v1079 = vshll.u32 %v849, 16
      %v1081 = vor.u32 %v1078, %v1079
      %v1082 = vsel %vm871, %v1074, %v1081
      %v1083 = vrot.slane %v1078, 4
      %v1085 = vshrl.u32 %v850, 16
      %v1087 = vrot.slane %v1085, 7
      %v1088 = vshll.u32 %v850, 16
      %v1090 = vor.u32 %v1087, %v1088
      %v1091 = vsel %vm871, %v1083, %v1090
      %v1093 = vshrl.u32 %v851, 16
      %v1095 = vrot.slane %v1093, 7
      %v1096 = vrot.slane %v1095, 4
      %v1098 = vshrl.u32 %v852, 16
      %v1100 = vrot.slane %v1098, 7
      %v1101 = vshll.u32 %v852, 16
      %v1103 = vor.u32 %v1100, %v1101
      %v1104 = vsel %vm871, %v1096, %v1103
      %v1105 = vrot.slane %v1100, 4
      %v1107 = vshrl.u32 %v853, 16
      %v1109 = vrot.slane %v1107, 7
      %v1110 = vshll.u32 %v853, 16
      %v1112 = vor.u32 %v1109, %v1110
      %v1113 = vsel %vm871, %v1105, %v1112
      %v1115 = vshrl.u32 %v854, 16
      %v1117 = vrot.slane %v1115, 7
      %v1118 = vrot.slane %v1117, 4
      %v1120 = vshrl.u32 %v855, 16
      %v1122 = vrot.slane %v1120, 7
      %v1123 = vshll.u32 %v855, 16
      %v1125 = vor.u32 %v1122, %v1123
      %v1126 = vsel %vm871, %v1118, %v1125
      %v1127 = vrot.slane %v1122, 4
      %v1129 = vshrl.u32 %v856, 16
      %v1131 = vrot.slane %v1129, 7
      %v1132 = vshll.u32 %v856, 16
      %v1134 = vor.u32 %v1131, %v1132
      %v1135 = vsel %vm871, %v1127, %v1134
      %v1137 = vshrl.u32 %v857, 16
      %v1139 = vrot.slane %v1137, 7
      %v1140 = vrot.slane %v1139, 4
      %v1142 = vshrl.u32 %v858, 16
      %v1144 = vrot.slane %v1142, 7
      %v1145 = vshll.u32 %v858, 16
      %v1147 = vor.u32 %v1144, %v1145
      %v1148 = vsel %vm871, %v1140, %v1147
      %v1149 = vrot.slane %v1144, 4
      %v1151 = vshrl.u32 %v859, 16
      %v1153 = vrot.slane %v1151, 7
      %v1154 = vshll.u32 %v859, 16
      %v1156 = vor.u32 %v1153, %v1154
      %v1157 = vsel %vm871, %v1149, %v1156
      %v1159 = vshrl.u32 %v860, 16
      %v1161 = vrot.slane %v1159, 7
      %v1162 = vrot.slane %v1161, 4
      %v1164 = vshrl.u32 %v861, 16
      %v1166 = vrot.slane %v1164, 7
      %v1167 = vshll.u32 %v861, 16
      %v1169 = vor.u32 %v1166, %v1167
      %v1170 = vsel %vm871, %v1162, %v1169
      %v1171 = vrot.slane %v1166, 4
      %v1173 = vshrl.u32 %v862, 16
      %v1175 = vrot.slane %v1173, 7
      %v1176 = vshll.u32 %v862, 16
      %v1178 = vor.u32 %v1175, %v1176
      %v1179 = vsel %vm871, %v1171, %v1178
      %v1181 = vshrl.u32 %v863, 16
      %v1183 = vrot.slane %v1181, 7
      %v1184 = vrot.slane %v1183, 4
      %v1186 = vshrl.u32 %v864, 16
      %v1188 = vrot.slane %v1186, 7
      %v1189 = vshll.u32 %v864, 16
      %v1191 = vor.u32 %v1188, %v1189
      %v1192 = vsel %vm871, %v1184, %v1191
      %v1193 = vrot.slane %v1188, 4
      %v1195 = vshrl.u32 %v865, 16
      %v1197 = vrot.slane %v1195, 7
      %v1198 = vshll.u32 %v865, 16
      %v1200 = vor.u32 %v1197, %v1198
      %v1201 = vsel %vm871, %v1193, %v1200
      %v1203 = vshrl.u32 %v866, 16
      %v1205 = vrot.slane %v1203, 7
      %v1206 = vrot.slane %v1205, 4
      %v1208 = vshrl.u32 %v867, 16
      %v1210 = vrot.slane %v1208, 7
      %v1211 = vshll.u32 %v867, 16
      %v1213 = vor.u32 %v1210, %v1211
      %v1214 = vsel %vm871, %v1206, %v1213
      %v1215 = vrot.slane %v1210, 4
      %v1217 = vshrl.u32 %v868, 16
      %v1219 = vrot.slane %v1217, 7
      %v1220 = vshll.u32 %v868, 16
      %v1222 = vor.u32 %v1219, %v1220
      %v1223 = vsel %vm871, %v1215, %v1222
      %v1224 = vld [vmem:[#allocation2 + $0xc] sm:$0x1]
      %v1225 = vld [vmem:[#allocation2 + $0x1c] sm:$0x1]
      %v1226 = vld [vmem:[#allocation2 + $0x2c] sm:$0x1]
      %v1227 = vld [vmem:[#allocation2 + $0x3c] sm:$0x1]
      %v1228 = vld [vmem:[#allocation2 + $0x4c] sm:$0x1]
      %v1229 = vld [vmem:[#allocation2 + $0x5c] sm:$0x1]
      %v1230 = vld [vmem:[#allocation2 + $0x6c] sm:$0x1]
      %v1231 = vld [vmem:[#allocation2 + $0x7c] sm:$0x1]
      %v1232 = vld [vmem:[#allocation2 + $0x8c] sm:$0x1]
      %v1233 = vld [vmem:[#allocation2 + $0x9c] sm:$0x1]
      %v1234 = vld [vmem:[#allocation2 + $0xac] sm:$0x1]
      %v1235 = vld [vmem:[#allocation2 + $0xbc] sm:$0x1]
      %v1236 = vld [vmem:[#allocation2 + $0xcc] sm:$0x1]
      %v1237 = vld [vmem:[#allocation2 + $0xdc] sm:$0x1]
      %v1238 = vld [vmem:[#allocation2 + $0xec] sm:$0x1]
      %v1239 = vld [vmem:[#allocation2 + $0xfc] sm:$0x1]
      %vm1240 = vsmask.f32 3328
      %vm1241 = vsmask.f32 7440
      %vm1242 = vmor %vm1240, %vm1241
      %v1243 = vrot.slane %v878, 4
      %v1244 = vrot.slane %v881, 5
      %v1245 = vor.u32 %v1243, %v1244
      %v1246 = vrot.slane %v1245, 4
      %v1247 = vrot.slane %v890, 5
      %v1248 = vsel %vm1242, %v1246, %v1247
      %v1249 = vrot.slane %v887, 4
      %v1250 = vor.u32 %v1249, %v1247
      %v1251 = vrot.slane %v1250, 4
      %v1253 = vshll.u32 %v1224, 16
      %v1255 = vrot.slane %v1253, 5
      %v1256 = vsel %vm1242, %v1251, %v1255
      %v1257 = vrot.slane %v900, 4
      %v1258 = vrot.slane %v903, 5
      %v1259 = vor.u32 %v1257, %v1258
      %v1260 = vrot.slane %v1259, 4
      %v1261 = vrot.slane %v912, 5
      %v1262 = vsel %vm1242, %v1260, %v1261
      %v1263 = vrot.slane %v909, 4
      %v1264 = vor.u32 %v1263, %v1261
      %v1265 = vrot.slane %v1264, 4
      %v1267 = vshll.u32 %v1225, 16
      %v1269 = vrot.slane %v1267, 5
      %v1270 = vsel %vm1242, %v1265, %v1269
      %v1271 = vrot.slane %v922, 4
      %v1272 = vrot.slane %v925, 5
      %v1273 = vor.u32 %v1271, %v1272
      %v1274 = vrot.slane %v1273, 4
      %v1275 = vrot.slane %v934, 5
      %v1276 = vsel %vm1242, %v1274, %v1275
      %v1277 = vrot.slane %v931, 4
      %v1278 = vor.u32 %v1277, %v1275
      %v1279 = vrot.slane %v1278, 4
      %v1281 = vshll.u32 %v1226, 16
      %v1283 = vrot.slane %v1281, 5
      %v1284 = vsel %vm1242, %v1279, %v1283
      %v1285 = vrot.slane %v944, 4
      %v1286 = vrot.slane %v947, 5
      %v1287 = vor.u32 %v1285, %v1286
      %v1288 = vrot.slane %v1287, 4
      %v1289 = vrot.slane %v956, 5
      %v1290 = vsel %vm1242, %v1288, %v1289
      %v1291 = vrot.slane %v953, 4
      %v1292 = vor.u32 %v1291, %v1289
      %v1293 = vrot.slane %v1292, 4
      %v1295 = vshll.u32 %v1227, 16
      %v1297 = vrot.slane %v1295, 5
      %v1298 = vsel %vm1242, %v1293, %v1297
      %v1299 = vrot.slane %v966, 4
      %v1300 = vrot.slane %v969, 5
      %v1301 = vor.u32 %v1299, %v1300
      %v1302 = vrot.slane %v1301, 4
      %v1303 = vrot.slane %v978, 5
      %v1304 = vsel %vm1242, %v1302, %v1303
      %v1305 = vrot.slane %v975, 4
      %v1306 = vor.u32 %v1305, %v1303
      %v1307 = vrot.slane %v1306, 4
      %v1309 = vshll.u32 %v1228, 16
      %v1311 = vrot.slane %v1309, 5
      %v1312 = vsel %vm1242, %v1307, %v1311
      %v1313 = vrot.slane %v988, 4
      %v1314 = vrot.slane %v991, 5
      %v1315 = vor.u32 %v1313, %v1314
      %v1316 = vrot.slane %v1315, 4
      %v1317 = vrot.slane %v1000, 5
      %v1318 = vsel %vm1242, %v1316, %v1317
      %v1319 = vrot.slane %v997, 4
      %v1320 = vor.u32 %v1319, %v1317
      %v1321 = vrot.slane %v1320, 4
      %v1323 = vshll.u32 %v1229, 16
      %v1325 = vrot.slane %v1323, 5
      %v1326 = vsel %vm1242, %v1321, %v1325
      %v1327 = vrot.slane %v1010, 4
      %v1328 = vrot.slane %v1013, 5
      %v1329 = vor.u32 %v1327, %v1328
      %v1330 = vrot.slane %v1329, 4
      %v1331 = vrot.slane %v1022, 5
      %v1332 = vsel %vm1242, %v1330, %v1331
      %v1333 = vrot.slane %v1019, 4
      %v1334 = vor.u32 %v1333, %v1331
      %v1335 = vrot.slane %v1334, 4
      %v1337 = vshll.u32 %v1230, 16
      %v1339 = vrot.slane %v1337, 5
      %v1340 = vsel %vm1242, %v1335, %v1339
      %v1341 = vrot.slane %v1032, 4
      %v1342 = vrot.slane %v1035, 5
      %v1343 = vor.u32 %v1341, %v1342
      %v1344 = vrot.slane %v1343, 4
      %v1345 = vrot.slane %v1044, 5
      %v1346 = vsel %vm1242, %v1344, %v1345
      %v1347 = vrot.slane %v1041, 4
      %v1348 = vor.u32 %v1347, %v1345
      %v1349 = vrot.slane %v1348, 4
      %v1351 = vshll.u32 %v1231, 16
      %v1353 = vrot.slane %v1351, 5
      %v1354 = vsel %vm1242, %v1349, %v1353
      %v1355 = vrot.slane %v1054, 4
      %v1356 = vrot.slane %v1057, 5
      %v1357 = vor.u32 %v1355, %v1356
      %v1358 = vrot.slane %v1357, 4
      %v1359 = vrot.slane %v1066, 5
      %v1360 = vsel %vm1242, %v1358, %v1359
      %v1361 = vrot.slane %v1063, 4
      %v1362 = vor.u32 %v1361, %v1359
      %v1363 = vrot.slane %v1362, 4
      %v1365 = vshll.u32 %v1232, 16
      %v1367 = vrot.slane %v1365, 5
      %v1368 = vsel %vm1242, %v1363, %v1367
      %v1369 = vrot.slane %v1076, 4
      %v1370 = vrot.slane %v1079, 5
      %v1371 = vor.u32 %v1369, %v1370
      %v1372 = vrot.slane %v1371, 4
      %v1373 = vrot.slane %v1088, 5
      %v1374 = vsel %vm1242, %v1372, %v1373
      %v1375 = vrot.slane %v1085, 4
      %v1376 = vor.u32 %v1375, %v1373
      %v1377 = vrot.slane %v1376, 4
      %v1379 = vshll.u32 %v1233, 16
      %v1381 = vrot.slane %v1379, 5
      %v1382 = vsel %vm1242, %v1377, %v1381
      %v1383 = vrot.slane %v1098, 4
      %v1384 = vrot.slane %v1101, 5
      %v1385 = vor.u32 %v1383, %v1384
      %v1386 = vrot.slane %v1385, 4
      %v1387 = vrot.slane %v1110, 5
      %v1388 = vsel %vm1242, %v1386, %v1387
      %v1389 = vrot.slane %v1107, 4
      %v1390 = vor.u32 %v1389, %v1387
      %v1391 = vrot.slane %v1390, 4
      %v1393 = vshll.u32 %v1234, 16
      %v1395 = vrot.slane %v1393, 5
      %v1396 = vsel %vm1242, %v1391, %v1395
      %v1397 = vrot.slane %v1120, 4
      %v1398 = vrot.slane %v1123, 5
      %v1399 = vor.u32 %v1397, %v1398
      %v1400 = vrot.slane %v1399, 4
      %v1401 = vrot.slane %v1132, 5
      %v1402 = vsel %vm1242, %v1400, %v1401
      %v1403 = vrot.slane %v1129, 4
      %v1404 = vor.u32 %v1403, %v1401
      %v1405 = vrot.slane %v1404, 4
      %v1407 = vshll.u32 %v1235, 16
      %v1409 = vrot.slane %v1407, 5
      %v1410 = vsel %vm1242, %v1405, %v1409
      %v1411 = vrot.slane %v1142, 4
      %v1412 = vrot.slane %v1145, 5
      %v1413 = vor.u32 %v1411, %v1412
      %v1414 = vrot.slane %v1413, 4
      %v1415 = vrot.slane %v1154, 5
      %v1416 = vsel %vm1242, %v1414, %v1415
      %v1417 = vrot.slane %v1151, 4
      %v1418 = vor.u32 %v1417, %v1415
      %v1419 = vrot.slane %v1418, 4
      %v1421 = vshll.u32 %v1236, 16
      %v1423 = vrot.slane %v1421, 5
      %v1424 = vsel %vm1242, %v1419, %v1423
      %v1425 = vrot.slane %v1164, 4
      %v1426 = vrot.slane %v1167, 5
      %v1427 = vor.u32 %v1425, %v1426
      %v1428 = vrot.slane %v1427, 4
      %v1429 = vrot.slane %v1176, 5
      %v1430 = vsel %vm1242, %v1428, %v1429
      %v1431 = vrot.slane %v1173, 4
      %v1432 = vor.u32 %v1431, %v1429
      %v1433 = vrot.slane %v1432, 4
      %v1435 = vshll.u32 %v1237, 16
      %v1437 = vrot.slane %v1435, 5
      %v1438 = vsel %vm1242, %v1433, %v1437
      %v1439 = vrot.slane %v1186, 4
      %v1440 = vrot.slane %v1189, 5
      %v1441 = vor.u32 %v1439, %v1440
      %v1442 = vrot.slane %v1441, 4
      %v1443 = vrot.slane %v1198, 5
      %v1444 = vsel %vm1242, %v1442, %v1443
      %v1445 = vrot.slane %v1195, 4
      %v1446 = vor.u32 %v1445, %v1443
      %v1447 = vrot.slane %v1446, 4
      %v1449 = vshll.u32 %v1238, 16
      %v1451 = vrot.slane %v1449, 5
      %v1452 = vsel %vm1242, %v1447, %v1451
      %v1453 = vrot.slane %v1208, 4
      %v1454 = vrot.slane %v1211, 5
      %v1455 = vor.u32 %v1453, %v1454
      %v1456 = vrot.slane %v1455, 4
      %v1457 = vrot.slane %v1220, 5
      %v1458 = vsel %vm1242, %v1456, %v1457
      %v1459 = vrot.slane %v1217, 4
      %v1460 = vor.u32 %v1459, %v1457
      %v1461 = vrot.slane %v1460, 4
      %v1463 = vshll.u32 %v1239, 16
      %v1465 = vrot.slane %v1463, 5
      %v1466 = vsel %vm1242, %v1461, %v1465
      %v1467 = vld [vmem:[%s788] sm:$0x8]
      %v1468 = vld [vmem:[%s788 + $0x4] sm:$0xf]
      %v1469 = vld [vmem:[%s788 + $0x8] sm:$0xf]
      %v1470 = vld [vmem:[%s788 + $0x10] sm:$0x8]
      %v1471 = vld [vmem:[%s788 + $0x14] sm:$0xf]
      %v1472 = vld [vmem:[%s788 + $0x18] sm:$0xf]
      %v1473 = vld [vmem:[%s788 + $0x20] sm:$0x8]
      %v1474 = vld [vmem:[%s788 + $0x24] sm:$0xf]
      %v1475 = vld [vmem:[%s788 + $0x28] sm:$0xf]
      %v1476 = vld [vmem:[%s788 + $0x30] sm:$0x8]
      %v1477 = vld [vmem:[%s788 + $0x34] sm:$0xf]
      %v1478 = vld [vmem:[%s788 + $0x38] sm:$0xf]
      %v1479 = vld [vmem:[%s788 + $0x40] sm:$0x8]
      %v1480 = vld [vmem:[%s788 + $0x44] sm:$0xf]
      %v1481 = vld [vmem:[%s788 + $0x48] sm:$0xf]
      %v1482 = vld [vmem:[%s788 + $0x50] sm:$0x8]
      %v1483 = vld [vmem:[%s788 + $0x54] sm:$0xf]
      %v1484 = vld [vmem:[%s788 + $0x58] sm:$0xf]
      %v1485 = vld [vmem:[%s788 + $0x60] sm:$0x8]
      %v1486 = vld [vmem:[%s788 + $0x64] sm:$0xf]
      %v1487 = vld [vmem:[%s788 + $0x68] sm:$0xf]
      %v1488 = vld [vmem:[%s788 + $0x70] sm:$0x8]
      %v1489 = vld [vmem:[%s788 + $0x74] sm:$0xf]
      %v1490 = vld [vmem:[%s788 + $0x78] sm:$0xf]
      %v1491 = vld [vmem:[%s788 + $0x80] sm:$0x8]
      %v1492 = vld [vmem:[%s788 + $0x84] sm:$0xf]
      %v1493 = vld [vmem:[%s788 + $0x88] sm:$0xf]
      %v1494 = vld [vmem:[%s788 + $0x90] sm:$0x8]
      %v1495 = vld [vmem:[%s788 + $0x94] sm:$0xf]
      %v1496 = vld [vmem:[%s788 + $0x98] sm:$0xf]
      %v1497 = vld [vmem:[%s788 + $0xa0] sm:$0x8]
      %v1498 = vld [vmem:[%s788 + $0xa4] sm:$0xf]
      %v1499 = vld [vmem:[%s788 + $0xa8] sm:$0xf]
      %v1500 = vld [vmem:[%s788 + $0xb0] sm:$0x8]
      %v1501 = vld [vmem:[%s788 + $0xb4] sm:$0xf]
      %v1502 = vld [vmem:[%s788 + $0xb8] sm:$0xf]
      %v1503 = vld [vmem:[%s788 + $0xc0] sm:$0x8]
      %v1504 = vld [vmem:[%s788 + $0xc4] sm:$0xf]
      %v1505 = vld [vmem:[%s788 + $0xc8] sm:$0xf]
      %v1506 = vld [vmem:[%s788 + $0xd0] sm:$0x8]
      %v1507 = vld [vmem:[%s788 + $0xd4] sm:$0xf]
      %v1508 = vld [vmem:[%s788 + $0xd8] sm:$0xf]
      %v1509 = vld [vmem:[%s788 + $0xe0] sm:$0x8]
      %v1510 = vld [vmem:[%s788 + $0xe4] sm:$0xf]
      %v1511 = vld [vmem:[%s788 + $0xe8] sm:$0xf]
      %v1512 = vld [vmem:[%s788 + $0xf0] sm:$0x8]
      %v1513 = vld [vmem:[%s788 + $0xf4] sm:$0xf]
      %v1514 = vld [vmem:[%s788 + $0xf8] sm:$0xf]
      %v1516 = vshrl.u32 %v1467, 16
      %v1518 = vrot.slane %v1516, 7
      %v1519 = vrot.slane %v1518, 4
      %v1521 = vshrl.u32 %v1468, 16
      %v1523 = vrot.slane %v1521, 7
      %v1524 = vshll.u32 %v1468, 16
      %v1526 = vor.u32 %v1523, %v1524
      %v1527 = vsel %vm871, %v1519, %v1526
      %v1528 = vrot.slane %v1523, 4
      %v1530 = vshrl.u32 %v1469, 16
      %v1532 = vrot.slane %v1530, 7
      %v1533 = vshll.u32 %v1469, 16
      %v1535 = vor.u32 %v1532, %v1533
      %v1536 = vsel %vm871, %v1528, %v1535
      %v1538 = vshrl.u32 %v1470, 16
      %v1540 = vrot.slane %v1538, 7
      %v1541 = vrot.slane %v1540, 4
      %v1543 = vshrl.u32 %v1471, 16
      %v1545 = vrot.slane %v1543, 7
      %v1546 = vshll.u32 %v1471, 16
      %v1548 = vor.u32 %v1545, %v1546
      %v1549 = vsel %vm871, %v1541, %v1548
      %v1550 = vrot.slane %v1545, 4
      %v1552 = vshrl.u32 %v1472, 16
      %v1554 = vrot.slane %v1552, 7
      %v1555 = vshll.u32 %v1472, 16
      %v1557 = vor.u32 %v1554, %v1555
      %v1558 = vsel %vm871, %v1550, %v1557
      %v1560 = vshrl.u32 %v1473, 16
      %v1562 = vrot.slane %v1560, 7
      %v1563 = vrot.slane %v1562, 4
      %v1565 = vshrl.u32 %v1474, 16
      %v1567 = vrot.slane %v1565, 7
      %v1568 = vshll.u32 %v1474, 16
      %v1570 = vor.u32 %v1567, %v1568
      %v1571 = vsel %vm871, %v1563, %v1570
      %v1572 = vrot.slane %v1567, 4
      %v1574 = vshrl.u32 %v1475, 16
      %v1576 = vrot.slane %v1574, 7
      %v1577 = vshll.u32 %v1475, 16
      %v1579 = vor.u32 %v1576, %v1577
      %v1580 = vsel %vm871, %v1572, %v1579
      %v1582 = vshrl.u32 %v1476, 16
      %v1584 = vrot.slane %v1582, 7
      %v1585 = vrot.slane %v1584, 4
      %v1587 = vshrl.u32 %v1477, 16
      %v1589 = vrot.slane %v1587, 7
      %v1590 = vshll.u32 %v1477, 16
      %v1592 = vor.u32 %v1589, %v1590
      %v1593 = vsel %vm871, %v1585, %v1592
      %v1594 = vrot.slane %v1589, 4
      %v1596 = vshrl.u32 %v1478, 16
      %v1598 = vrot.slane %v1596, 7
      %v1599 = vshll.u32 %v1478, 16
      %v1601 = vor.u32 %v1598, %v1599
      %v1602 = vsel %vm871, %v1594, %v1601
      %v1604 = vshrl.u32 %v1479, 16
      %v1606 = vrot.slane %v1604, 7
      %v1607 = vrot.slane %v1606, 4
      %v1609 = vshrl.u32 %v1480, 16
      %v1611 = vrot.slane %v1609, 7
      %v1612 = vshll.u32 %v1480, 16
      %v1614 = vor.u32 %v1611, %v1612
      %v1615 = vsel %vm871, %v1607, %v1614
      %v1616 = vrot.slane %v1611, 4
      %v1618 = vshrl.u32 %v1481, 16
      %v1620 = vrot.slane %v1618, 7
      %v1621 = vshll.u32 %v1481, 16
      %v1623 = vor.u32 %v1620, %v1621
      %v1624 = vsel %vm871, %v1616, %v1623
      %v1626 = vshrl.u32 %v1482, 16
      %v1628 = vrot.slane %v1626, 7
      %v1629 = vrot.slane %v1628, 4
      %v1631 = vshrl.u32 %v1483, 16
      %v1633 = vrot.slane %v1631, 7
      %v1634 = vshll.u32 %v1483, 16
      %v1636 = vor.u32 %v1633, %v1634
      %v1637 = vsel %vm871, %v1629, %v1636
      %v1638 = vrot.slane %v1633, 4
      %v1640 = vshrl.u32 %v1484, 16
      %v1642 = vrot.slane %v1640, 7
      %v1643 = vshll.u32 %v1484, 16
      %v1645 = vor.u32 %v1642, %v1643
      %v1646 = vsel %vm871, %v1638, %v1645
      %v1648 = vshrl.u32 %v1485, 16
      %v1650 = vrot.slane %v1648, 7
      %v1651 = vrot.slane %v1650, 4
      %v1653 = vshrl.u32 %v1486, 16
      %v1655 = vrot.slane %v1653, 7
      %v1656 = vshll.u32 %v1486, 16
      %v1658 = vor.u32 %v1655, %v1656
      %v1659 = vsel %vm871, %v1651, %v1658
      %v1660 = vrot.slane %v1655, 4
      %v1662 = vshrl.u32 %v1487, 16
      %v1664 = vrot.slane %v1662, 7
      %v1665 = vshll.u32 %v1487, 16
      %v1667 = vor.u32 %v1664, %v1665
      %v1668 = vsel %vm871, %v1660, %v1667
      %v1670 = vshrl.u32 %v1488, 16
      %v1672 = vrot.slane %v1670, 7
      %v1673 = vrot.slane %v1672, 4
      %v1675 = vshrl.u32 %v1489, 16
      %v1677 = vrot.slane %v1675, 7
      %v1678 = vshll.u32 %v1489, 16
      %v1680 = vor.u32 %v1677, %v1678
      %v1681 = vsel %vm871, %v1673, %v1680
      %v1682 = vrot.slane %v1677, 4
      %v1684 = vshrl.u32 %v1490, 16
      %v1686 = vrot.slane %v1684, 7
      %v1687 = vshll.u32 %v1490, 16
      %v1689 = vor.u32 %v1686, %v1687
      %v1690 = vsel %vm871, %v1682, %v1689
      %v1692 = vshrl.u32 %v1491, 16
      %v1694 = vrot.slane %v1692, 7
      %v1695 = vrot.slane %v1694, 4
      %v1697 = vshrl.u32 %v1492, 16
      %v1699 = vrot.slane %v1697, 7
      %v1700 = vshll.u32 %v1492, 16
      %v1702 = vor.u32 %v1699, %v1700
      %v1703 = vsel %vm871, %v1695, %v1702
      %v1704 = vrot.slane %v1699, 4
      %v1706 = vshrl.u32 %v1493, 16
      %v1708 = vrot.slane %v1706, 7
      %v1709 = vshll.u32 %v1493, 16
      %v1711 = vor.u32 %v1708, %v1709
      %v1712 = vsel %vm871, %v1704, %v1711
      %v1714 = vshrl.u32 %v1494, 16
      %v1716 = vrot.slane %v1714, 7
      %v1717 = vrot.slane %v1716, 4
      %v1719 = vshrl.u32 %v1495, 16
      %v1721 = vrot.slane %v1719, 7
      %v1722 = vshll.u32 %v1495, 16
      %v1724 = vor.u32 %v1721, %v1722
      %v1725 = vsel %vm871, %v1717, %v1724
      %v1726 = vrot.slane %v1721, 4
      %v1728 = vshrl.u32 %v1496, 16
      %v1730 = vrot.slane %v1728, 7
      %v1731 = vshll.u32 %v1496, 16
      %v1733 = vor.u32 %v1730, %v1731
      %v1734 = vsel %vm871, %v1726, %v1733
      %v1736 = vshrl.u32 %v1497, 16
      %v1738 = vrot.slane %v1736, 7
      %v1739 = vrot.slane %v1738, 4
      %v1741 = vshrl.u32 %v1498, 16
      %v1743 = vrot.slane %v1741, 7
      %v1744 = vshll.u32 %v1498, 16
      %v1746 = vor.u32 %v1743, %v1744
      %v1747 = vsel %vm871, %v1739, %v1746
      %v1748 = vrot.slane %v1743, 4
      %v1750 = vshrl.u32 %v1499, 16
      %v1752 = vrot.slane %v1750, 7
      %v1753 = vshll.u32 %v1499, 16
      %v1755 = vor.u32 %v1752, %v1753
      %v1756 = vsel %vm871, %v1748, %v1755
      %v1758 = vshrl.u32 %v1500, 16
      %v1760 = vrot.slane %v1758, 7
      %v1761 = vrot.slane %v1760, 4
      %v1763 = vshrl.u32 %v1501, 16
      %v1765 = vrot.slane %v1763, 7
      %v1766 = vshll.u32 %v1501, 16
      %v1768 = vor.u32 %v1765, %v1766
      %v1769 = vsel %vm871, %v1761, %v1768
      %v1770 = vrot.slane %v1765, 4
      %v1772 = vshrl.u32 %v1502, 16
      %v1774 = vrot.slane %v1772, 7
      %v1775 = vshll.u32 %v1502, 16
      %v1777 = vor.u32 %v1774, %v1775
      %v1778 = vsel %vm871, %v1770, %v1777
      %v1780 = vshrl.u32 %v1503, 16
      %v1782 = vrot.slane %v1780, 7
      %v1783 = vrot.slane %v1782, 4
      %v1785 = vshrl.u32 %v1504, 16
      %v1787 = vrot.slane %v1785, 7
      %v1788 = vshll.u32 %v1504, 16
      %v1790 = vor.u32 %v1787, %v1788
      %v1791 = vsel %vm871, %v1783, %v1790
      %v1792 = vrot.slane %v1787, 4
      %v1794 = vshrl.u32 %v1505, 16
      %v1796 = vrot.slane %v1794, 7
      %v1797 = vshll.u32 %v1505, 16
      %v1799 = vor.u32 %v1796, %v1797
      %v1800 = vsel %vm871, %v1792, %v1799
      %v1802 = vshrl.u32 %v1506, 16
      %v1804 = vrot.slane %v1802, 7
      %v1805 = vrot.slane %v1804, 4
      %v1807 = vshrl.u32 %v1507, 16
      %v1809 = vrot.slane %v1807, 7
      %v1810 = vshll.u32 %v1507, 16
      %v1812 = vor.u32 %v1809, %v1810
      %v1813 = vsel %vm871, %v1805, %v1812
      %v1814 = vrot.slane %v1809, 4
      %v1816 = vshrl.u32 %v1508, 16
      %v1818 = vrot.slane %v1816, 7
      %v1819 = vshll.u32 %v1508, 16
      %v1821 = vor.u32 %v1818, %v1819
      %v1822 = vsel %vm871, %v1814, %v1821
      %v1824 = vshrl.u32 %v1509, 16
      %v1826 = vrot.slane %v1824, 7
      %v1827 = vrot.slane %v1826, 4
      %v1829 = vshrl.u32 %v1510, 16
      %v1831 = vrot.slane %v1829, 7
      %v1832 = vshll.u32 %v1510, 16
      %v1834 = vor.u32 %v1831, %v1832
      %v1835 = vsel %vm871, %v1827, %v1834
      %v1836 = vrot.slane %v1831, 4
      %v1838 = vshrl.u32 %v1511, 16
      %v1840 = vrot.slane %v1838, 7
      %v1841 = vshll.u32 %v1511, 16
      %v1843 = vor.u32 %v1840, %v1841
      %v1844 = vsel %vm871, %v1836, %v1843
      %v1846 = vshrl.u32 %v1512, 16
      %v1848 = vrot.slane %v1846, 7
      %v1849 = vrot.slane %v1848, 4
      %v1851 = vshrl.u32 %v1513, 16
      %v1853 = vrot.slane %v1851, 7
      %v1854 = vshll.u32 %v1513, 16
      %v1856 = vor.u32 %v1853, %v1854
      %v1857 = vsel %vm871, %v1849, %v1856
      %v1858 = vrot.slane %v1853, 4
      %v1860 = vshrl.u32 %v1514, 16
      %v1862 = vrot.slane %v1860, 7
      %v1863 = vshll.u32 %v1514, 16
      %v1865 = vor.u32 %v1862, %v1863
      %v1866 = vsel %vm871, %v1858, %v1865
      %v1867 = vld [vmem:[%s788 + $0xc] sm:$0x1]
      %v1868 = vld [vmem:[%s788 + $0x1c] sm:$0x1]
      %v1869 = vld [vmem:[%s788 + $0x2c] sm:$0x1]
      %v1870 = vld [vmem:[%s788 + $0x3c] sm:$0x1]
      %v1871 = vld [vmem:[%s788 + $0x4c] sm:$0x1]
      %v1872 = vld [vmem:[%s788 + $0x5c] sm:$0x1]
      %v1873 = vld [vmem:[%s788 + $0x6c] sm:$0x1]
      %v1874 = vld [vmem:[%s788 + $0x7c] sm:$0x1]
      %v1875 = vld [vmem:[%s788 + $0x8c] sm:$0x1]
      %v1876 = vld [vmem:[%s788 + $0x9c] sm:$0x1]
      %v1877 = vld [vmem:[%s788 + $0xac] sm:$0x1]
      %v1878 = vld [vmem:[%s788 + $0xbc] sm:$0x1]
      %v1879 = vld [vmem:[%s788 + $0xcc] sm:$0x1]
      %v1880 = vld [vmem:[%s788 + $0xdc] sm:$0x1]
      %v1881 = vld [vmem:[%s788 + $0xec] sm:$0x1]
      %v1882 = vld [vmem:[%s788 + $0xfc] sm:$0x1]
      %v1883 = vrot.slane %v1521, 4
      %v1884 = vrot.slane %v1524, 5
      %v1885 = vor.u32 %v1883, %v1884
      %v1886 = vrot.slane %v1885, 4
      %v1887 = vrot.slane %v1533, 5
      %v1888 = vsel %vm1242, %v1886, %v1887
      %v1889 = vrot.slane %v1530, 4
      %v1890 = vor.u32 %v1889, %v1887
      %v1891 = vrot.slane %v1890, 4
      %v1893 = vshll.u32 %v1867, 16
      %v1895 = vrot.slane %v1893, 5
      %v1896 = vsel %vm1242, %v1891, %v1895
      %v1897 = vrot.slane %v1543, 4
      %v1898 = vrot.slane %v1546, 5
      %v1899 = vor.u32 %v1897, %v1898
      %v1900 = vrot.slane %v1899, 4
      %v1901 = vrot.slane %v1555, 5
      %v1902 = vsel %vm1242, %v1900, %v1901
      %v1903 = vrot.slane %v1552, 4
      %v1904 = vor.u32 %v1903, %v1901
      %v1905 = vrot.slane %v1904, 4
      %v1907 = vshll.u32 %v1868, 16
      %v1909 = vrot.slane %v1907, 5
      %v1910 = vsel %vm1242, %v1905, %v1909
      %v1911 = vrot.slane %v1565, 4
      %v1912 = vrot.slane %v1568, 5
      %v1913 = vor.u32 %v1911, %v1912
      %v1914 = vrot.slane %v1913, 4
      %v1915 = vrot.slane %v1577, 5
      %v1916 = vsel %vm1242, %v1914, %v1915
      %v1917 = vrot.slane %v1574, 4
      %v1918 = vor.u32 %v1917, %v1915
      %v1919 = vrot.slane %v1918, 4
      %v1921 = vshll.u32 %v1869, 16
      %v1923 = vrot.slane %v1921, 5
      %v1924 = vsel %vm1242, %v1919, %v1923
      %v1925 = vrot.slane %v1587, 4
      %v1926 = vrot.slane %v1590, 5
      %v1927 = vor.u32 %v1925, %v1926
      %v1928 = vrot.slane %v1927, 4
      %v1929 = vrot.slane %v1599, 5
      %v1930 = vsel %vm1242, %v1928, %v1929
      %v1931 = vrot.slane %v1596, 4
      %v1932 = vor.u32 %v1931, %v1929
      %v1933 = vrot.slane %v1932, 4
      %v1935 = vshll.u32 %v1870, 16
      %v1937 = vrot.slane %v1935, 5
      %v1938 = vsel %vm1242, %v1933, %v1937
      %v1939 = vrot.slane %v1609, 4
      %v1940 = vrot.slane %v1612, 5
      %v1941 = vor.u32 %v1939, %v1940
      %v1942 = vrot.slane %v1941, 4
      %v1943 = vrot.slane %v1621, 5
      %v1944 = vsel %vm1242, %v1942, %v1943
      %v1945 = vrot.slane %v1618, 4
      %v1946 = vor.u32 %v1945, %v1943
      %v1947 = vrot.slane %v1946, 4
      %v1949 = vshll.u32 %v1871, 16
      %v1951 = vrot.slane %v1949, 5
      %v1952 = vsel %vm1242, %v1947, %v1951
      %v1953 = vrot.slane %v1631, 4
      %v1954 = vrot.slane %v1634, 5
      %v1955 = vor.u32 %v1953, %v1954
      %v1956 = vrot.slane %v1955, 4
      %v1957 = vrot.slane %v1643, 5
      %v1958 = vsel %vm1242, %v1956, %v1957
      %v1959 = vrot.slane %v1640, 4
      %v1960 = vor.u32 %v1959, %v1957
      %v1961 = vrot.slane %v1960, 4
      %v1963 = vshll.u32 %v1872, 16
      %v1965 = vrot.slane %v1963, 5
      %v1966 = vsel %vm1242, %v1961, %v1965
      %v1967 = vrot.slane %v1653, 4
      %v1968 = vrot.slane %v1656, 5
      %v1969 = vor.u32 %v1967, %v1968
      %v1970 = vrot.slane %v1969, 4
      %v1971 = vrot.slane %v1665, 5
      %v1972 = vsel %vm1242, %v1970, %v1971
      %v1973 = vrot.slane %v1662, 4
      %v1974 = vor.u32 %v1973, %v1971
      %v1975 = vrot.slane %v1974, 4
      %v1977 = vshll.u32 %v1873, 16
      %v1979 = vrot.slane %v1977, 5
      %v1980 = vsel %vm1242, %v1975, %v1979
      %v1981 = vrot.slane %v1675, 4
      %v1982 = vrot.slane %v1678, 5
      %v1983 = vor.u32 %v1981, %v1982
      %v1984 = vrot.slane %v1983, 4
      %v1985 = vrot.slane %v1687, 5
      %v1986 = vsel %vm1242, %v1984, %v1985
      %v1987 = vrot.slane %v1684, 4
      %v1988 = vor.u32 %v1987, %v1985
      %v1989 = vrot.slane %v1988, 4
      %v1991 = vshll.u32 %v1874, 16
      %v1993 = vrot.slane %v1991, 5
      %v1994 = vsel %vm1242, %v1989, %v1993
      %v1995 = vrot.slane %v1697, 4
      %v1996 = vrot.slane %v1700, 5
      %v1997 = vor.u32 %v1995, %v1996
      %v1998 = vrot.slane %v1997, 4
      %v1999 = vrot.slane %v1709, 5
      %v2000 = vsel %vm1242, %v1998, %v1999
      %v2001 = vrot.slane %v1706, 4
      %v2002 = vor.u32 %v2001, %v1999
      %v2003 = vrot.slane %v2002, 4
      %v2005 = vshll.u32 %v1875, 16
      %v2007 = vrot.slane %v2005, 5
      %v2008 = vsel %vm1242, %v2003, %v2007
      %v2009 = vrot.slane %v1719, 4
      %v2010 = vrot.slane %v1722, 5
      %v2011 = vor.u32 %v2009, %v2010
      %v2012 = vrot.slane %v2011, 4
      %v2013 = vrot.slane %v1731, 5
      %v2014 = vsel %vm1242, %v2012, %v2013
      %v2015 = vrot.slane %v1728, 4
      %v2016 = vor.u32 %v2015, %v2013
      %v2017 = vrot.slane %v2016, 4
      %v2019 = vshll.u32 %v1876, 16
      %v2021 = vrot.slane %v2019, 5
      %v2022 = vsel %vm1242, %v2017, %v2021
      %v2023 = vrot.slane %v1741, 4
      %v2024 = vrot.slane %v1744, 5
      %v2025 = vor.u32 %v2023, %v2024
      %v2026 = vrot.slane %v2025, 4
      %v2027 = vrot.slane %v1753, 5
      %v2028 = vsel %vm1242, %v2026, %v2027
      %v2029 = vrot.slane %v1750, 4
      %v2030 = vor.u32 %v2029, %v2027
      %v2031 = vrot.slane %v2030, 4
      %v2033 = vshll.u32 %v1877, 16
      %v2035 = vrot.slane %v2033, 5
      %v2036 = vsel %vm1242, %v2031, %v2035
      %v2037 = vrot.slane %v1763, 4
      %v2038 = vrot.slane %v1766, 5
      %v2039 = vor.u32 %v2037, %v2038
      %v2040 = vrot.slane %v2039, 4
      %v2041 = vrot.slane %v1775, 5
      %v2042 = vsel %vm1242, %v2040, %v2041
      %v2043 = vrot.slane %v1772, 4
      %v2044 = vor.u32 %v2043, %v2041
      %v2045 = vrot.slane %v2044, 4
      %v2047 = vshll.u32 %v1878, 16
      %v2049 = vrot.slane %v2047, 5
      %v2050 = vsel %vm1242, %v2045, %v2049
      %v2051 = vrot.slane %v1785, 4
      %v2052 = vrot.slane %v1788, 5
      %v2053 = vor.u32 %v2051, %v2052
      %v2054 = vrot.slane %v2053, 4
      %v2055 = vrot.slane %v1797, 5
      %v2056 = vsel %vm1242, %v2054, %v2055
      %v2057 = vrot.slane %v1794, 4
      %v2058 = vor.u32 %v2057, %v2055
      %v2059 = vrot.slane %v2058, 4
      %v2061 = vshll.u32 %v1879, 16
      %v2063 = vrot.slane %v2061, 5
      %v2064 = vsel %vm1242, %v2059, %v2063
      %v2065 = vrot.slane %v1807, 4
      %v2066 = vrot.slane %v1810, 5
      %v2067 = vor.u32 %v2065, %v2066
      %v2068 = vrot.slane %v2067, 4
      %v2069 = vrot.slane %v1819, 5
      %v2070 = vsel %vm1242, %v2068, %v2069
      %v2071 = vrot.slane %v1816, 4
      %v2072 = vor.u32 %v2071, %v2069
      %v2073 = vrot.slane %v2072, 4
      %v2075 = vshll.u32 %v1880, 16
      %v2077 = vrot.slane %v2075, 5
      %v2078 = vsel %vm1242, %v2073, %v2077
      %v2079 = vrot.slane %v1829, 4
      %v2080 = vrot.slane %v1832, 5
      %v2081 = vor.u32 %v2079, %v2080
      %v2082 = vrot.slane %v2081, 4
      %v2083 = vrot.slane %v1841, 5
      %v2084 = vsel %vm1242, %v2082, %v2083
      %v2085 = vrot.slane %v1838, 4
      %v2086 = vor.u32 %v2085, %v2083
      %v2087 = vrot.slane %v2086, 4
      %v2089 = vshll.u32 %v1881, 16
      %v2091 = vrot.slane %v2089, 5
      %v2092 = vsel %vm1242, %v2087, %v2091
      %v2093 = vrot.slane %v1851, 4
      %v2094 = vrot.slane %v1854, 5
      %v2095 = vor.u32 %v2093, %v2094
      %v2096 = vrot.slane %v2095, 4
      %v2097 = vrot.slane %v1863, 5
      %v2098 = vsel %vm1242, %v2096, %v2097
      %v2099 = vrot.slane %v1860, 4
      %v2100 = vor.u32 %v2099, %v2097
      %v2101 = vrot.slane %v2100, 4
      %v2103 = vshll.u32 %v1882, 16
      %v2105 = vrot.slane %v2103, 5
      %v2106 = vsel %vm1242, %v2101, %v2105
      %s2107 = scalar_lea.vmem [#allocation2], 32
      %v2108 = vld [vmem:[%s2107] sm:$0x8]
      %v2109 = vld [vmem:[%s2107 + $0x4] sm:$0xf]
      %v2110 = vld [vmem:[%s2107 + $0x8] sm:$0xf]
      %v2111 = vld [vmem:[%s2107 + $0x10] sm:$0x8]
      %v2112 = vld [vmem:[%s2107 + $0x14] sm:$0xf]
      %v2113 = vld [vmem:[%s2107 + $0x18] sm:$0xf]
      %v2114 = vld [vmem:[%s2107 + $0x20] sm:$0x8]
      %v2115 = vld [vmem:[%s2107 + $0x24] sm:$0xf]
      %v2116 = vld [vmem:[%s2107 + $0x28] sm:$0xf]
      %v2117 = vld [vmem:[%s2107 + $0x30] sm:$0x8]
      %v2118 = vld [vmem:[%s2107 + $0x34] sm:$0xf]
      %v2119 = vld [vmem:[%s2107 + $0x38] sm:$0xf]
      %v2120 = vld [vmem:[%s2107 + $0x40] sm:$0x8]
      %v2121 = vld [vmem:[%s2107 + $0x44] sm:$0xf]
      %v2122 = vld [vmem:[%s2107 + $0x48] sm:$0xf]
      %v2123 = vld [vmem:[%s2107 + $0x50] sm:$0x8]
      %v2124 = vld [vmem:[%s2107 + $0x54] sm:$0xf]
      %v2125 = vld [vmem:[%s2107 + $0x58] sm:$0xf]
      %v2126 = vld [vmem:[%s2107 + $0x60] sm:$0x8]
      %v2127 = vld [vmem:[%s2107 + $0x64] sm:$0xf]
      %v2128 = vld [vmem:[%s2107 + $0x68] sm:$0xf]
      %v2129 = vld [vmem:[%s2107 + $0x70] sm:$0x8]
      %v2130 = vld [vmem:[%s2107 + $0x74] sm:$0xf]
      %v2131 = vld [vmem:[%s2107 + $0x78] sm:$0xf]
      %v2132 = vld [vmem:[%s2107 + $0x80] sm:$0x8]
      %v2133 = vld [vmem:[%s2107 + $0x84] sm:$0xf]
      %v2134 = vld [vmem:[%s2107 + $0x88] sm:$0xf]
      %v2135 = vld [vmem:[%s2107 + $0x90] sm:$0x8]
      %v2136 = vld [vmem:[%s2107 + $0x94] sm:$0xf]
      %v2137 = vld [vmem:[%s2107 + $0x98] sm:$0xf]
      %v2138 = vld [vmem:[%s2107 + $0xa0] sm:$0x8]
      %v2139 = vld [vmem:[%s2107 + $0xa4] sm:$0xf]
      %v2140 = vld [vmem:[%s2107 + $0xa8] sm:$0xf]
      %v2141 = vld [vmem:[%s2107 + $0xb0] sm:$0x8]
      %v2142 = vld [vmem:[%s2107 + $0xb4] sm:$0xf]
      %v2143 = vld [vmem:[%s2107 + $0xb8] sm:$0xf]
      %v2144 = vld [vmem:[%s2107 + $0xc0] sm:$0x8]
      %v2145 = vld [vmem:[%s2107 + $0xc4] sm:$0xf]
      %v2146 = vld [vmem:[%s2107 + $0xc8] sm:$0xf]
      %v2147 = vld [vmem:[%s2107 + $0xd0] sm:$0x8]
      %v2148 = vld [vmem:[%s2107 + $0xd4] sm:$0xf]
      %v2149 = vld [vmem:[%s2107 + $0xd8] sm:$0xf]
      %v2150 = vld [vmem:[%s2107 + $0xe0] sm:$0x8]
      %v2151 = vld [vmem:[%s2107 + $0xe4] sm:$0xf]
      %v2152 = vld [vmem:[%s2107 + $0xe8] sm:$0xf]
      %v2153 = vld [vmem:[%s2107 + $0xf0] sm:$0x8]
      %v2154 = vld [vmem:[%s2107 + $0xf4] sm:$0xf]
      %v2155 = vld [vmem:[%s2107 + $0xf8] sm:$0xf]
      %v2157 = vshrl.u32 %v2108, 16
      %v2159 = vrot.slane %v2157, 7
      %v2160 = vrot.slane %v2159, 4
      %v2162 = vshrl.u32 %v2109, 16
      %v2164 = vrot.slane %v2162, 7
      %v2165 = vshll.u32 %v2109, 16
      %v2167 = vor.u32 %v2164, %v2165
      %v2168 = vsel %vm871, %v2160, %v2167
      %v2169 = vrot.slane %v2164, 4
      %v2171 = vshrl.u32 %v2110, 16
      %v2173 = vrot.slane %v2171, 7
      %v2174 = vshll.u32 %v2110, 16
      %v2176 = vor.u32 %v2173, %v2174
      %v2177 = vsel %vm871, %v2169, %v2176
      %v2179 = vshrl.u32 %v2111, 16
      %v2181 = vrot.slane %v2179, 7
      %v2182 = vrot.slane %v2181, 4
      %v2184 = vshrl.u32 %v2112, 16
      %v2186 = vrot.slane %v2184, 7
      %v2187 = vshll.u32 %v2112, 16
      %v2189 = vor.u32 %v2186, %v2187
      %v2190 = vsel %vm871, %v2182, %v2189
      %v2191 = vrot.slane %v2186, 4
      %v2193 = vshrl.u32 %v2113, 16
      %v2195 = vrot.slane %v2193, 7
      %v2196 = vshll.u32 %v2113, 16
      %v2198 = vor.u32 %v2195, %v2196
      %v2199 = vsel %vm871, %v2191, %v2198
      %v2201 = vshrl.u32 %v2114, 16
      %v2203 = vrot.slane %v2201, 7
      %v2204 = vrot.slane %v2203, 4
      %v2206 = vshrl.u32 %v2115, 16
      %v2208 = vrot.slane %v2206, 7
      %v2209 = vshll.u32 %v2115, 16
      %v2211 = vor.u32 %v2208, %v2209
      %v2212 = vsel %vm871, %v2204, %v2211
      %v2213 = vrot.slane %v2208, 4
      %v2215 = vshrl.u32 %v2116, 16
      %v2217 = vrot.slane %v2215, 7
      %v2218 = vshll.u32 %v2116, 16
      %v2220 = vor.u32 %v2217, %v2218
      %v2221 = vsel %vm871, %v2213, %v2220
      %v2223 = vshrl.u32 %v2117, 16
      %v2225 = vrot.slane %v2223, 7
      %v2226 = vrot.slane %v2225, 4
      %v2228 = vshrl.u32 %v2118, 16
      %v2230 = vrot.slane %v2228, 7
      %v2231 = vshll.u32 %v2118, 16
      %v2233 = vor.u32 %v2230, %v2231
      %v2234 = vsel %vm871, %v2226, %v2233
      %v2235 = vrot.slane %v2230, 4
      %v2237 = vshrl.u32 %v2119, 16
      %v2239 = vrot.slane %v2237, 7
      %v2240 = vshll.u32 %v2119, 16
      %v2242 = vor.u32 %v2239, %v2240
      %v2243 = vsel %vm871, %v2235, %v2242
      %v2245 = vshrl.u32 %v2120, 16
      %v2247 = vrot.slane %v2245, 7
      %v2248 = vrot.slane %v2247, 4
      %v2250 = vshrl.u32 %v2121, 16
      %v2252 = vrot.slane %v2250, 7
      %v2253 = vshll.u32 %v2121, 16
      %v2255 = vor.u32 %v2252, %v2253
      %v2256 = vsel %vm871, %v2248, %v2255
      %v2257 = vrot.slane %v2252, 4
      %v2259 = vshrl.u32 %v2122, 16
      %v2261 = vrot.slane %v2259, 7
      %v2262 = vshll.u32 %v2122, 16
      %v2264 = vor.u32 %v2261, %v2262
      %v2265 = vsel %vm871, %v2257, %v2264
      %v2267 = vshrl.u32 %v2123, 16
      %v2269 = vrot.slane %v2267, 7
      %v2270 = vrot.slane %v2269, 4
      %v2272 = vshrl.u32 %v2124, 16
      %v2274 = vrot.slane %v2272, 7
      %v2275 = vshll.u32 %v2124, 16
      %v2277 = vor.u32 %v2274, %v2275
      %v2278 = vsel %vm871, %v2270, %v2277
      %v2279 = vrot.slane %v2274, 4
      %v2281 = vshrl.u32 %v2125, 16
      %v2283 = vrot.slane %v2281, 7
      %v2284 = vshll.u32 %v2125, 16
      %v2286 = vor.u32 %v2283, %v2284
      %v2287 = vsel %vm871, %v2279, %v2286
      %v2289 = vshrl.u32 %v2126, 16
      %v2291 = vrot.slane %v2289, 7
      %v2292 = vrot.slane %v2291, 4
      %v2294 = vshrl.u32 %v2127, 16
      %v2296 = vrot.slane %v2294, 7
      %v2297 = vshll.u32 %v2127, 16
      %v2299 = vor.u32 %v2296, %v2297
      %v2300 = vsel %vm871, %v2292, %v2299
      %v2301 = vrot.slane %v2296, 4
      %v2303 = vshrl.u32 %v2128, 16
      %v2305 = vrot.slane %v2303, 7
      %v2306 = vshll.u32 %v2128, 16
      %v2308 = vor.u32 %v2305, %v2306
      %v2309 = vsel %vm871, %v2301, %v2308
      %v2311 = vshrl.u32 %v2129, 16
      %v2313 = vrot.slane %v2311, 7
      %v2314 = vrot.slane %v2313, 4
      %v2316 = vshrl.u32 %v2130, 16
      %v2318 = vrot.slane %v2316, 7
      %v2319 = vshll.u32 %v2130, 16
      %v2321 = vor.u32 %v2318, %v2319
      %v2322 = vsel %vm871, %v2314, %v2321
      %v2323 = vrot.slane %v2318, 4
      %v2325 = vshrl.u32 %v2131, 16
      %v2327 = vrot.slane %v2325, 7
      %v2328 = vshll.u32 %v2131, 16
      %v2330 = vor.u32 %v2327, %v2328
      %v2331 = vsel %vm871, %v2323, %v2330
      %v2333 = vshrl.u32 %v2132, 16
      %v2335 = vrot.slane %v2333, 7
      %v2336 = vrot.slane %v2335, 4
      %v2338 = vshrl.u32 %v2133, 16
      %v2340 = vrot.slane %v2338, 7
      %v2341 = vshll.u32 %v2133, 16
      %v2343 = vor.u32 %v2340, %v2341
      %v2344 = vsel %vm871, %v2336, %v2343
      %v2345 = vrot.slane %v2340, 4
      %v2347 = vshrl.u32 %v2134, 16
      %v2349 = vrot.slane %v2347, 7
      %v2350 = vshll.u32 %v2134, 16
      %v2352 = vor.u32 %v2349, %v2350
      %v2353 = vsel %vm871, %v2345, %v2352
      %v2355 = vshrl.u32 %v2135, 16
      %v2357 = vrot.slane %v2355, 7
      %v2358 = vrot.slane %v2357, 4
      %v2360 = vshrl.u32 %v2136, 16
      %v2362 = vrot.slane %v2360, 7
      %v2363 = vshll.u32 %v2136, 16
      %v2365 = vor.u32 %v2362, %v2363
      %v2366 = vsel %vm871, %v2358, %v2365
      %v2367 = vrot.slane %v2362, 4
      %v2369 = vshrl.u32 %v2137, 16
      %v2371 = vrot.slane %v2369, 7
      %v2372 = vshll.u32 %v2137, 16
      %v2374 = vor.u32 %v2371, %v2372
      %v2375 = vsel %vm871, %v2367, %v2374
      %v2377 = vshrl.u32 %v2138, 16
      %v2379 = vrot.slane %v2377, 7
      %v2380 = vrot.slane %v2379, 4
      %v2382 = vshrl.u32 %v2139, 16
      %v2384 = vrot.slane %v2382, 7
      %v2385 = vshll.u32 %v2139, 16
      %v2387 = vor.u32 %v2384, %v2385
      %v2388 = vsel %vm871, %v2380, %v2387
      %v2389 = vrot.slane %v2384, 4
      %v2391 = vshrl.u32 %v2140, 16
      %v2393 = vrot.slane %v2391, 7
      %v2394 = vshll.u32 %v2140, 16
      %v2396 = vor.u32 %v2393, %v2394
      %v2397 = vsel %vm871, %v2389, %v2396
      %v2399 = vshrl.u32 %v2141, 16
      %v2401 = vrot.slane %v2399, 7
      %v2402 = vrot.slane %v2401, 4
      %v2404 = vshrl.u32 %v2142, 16
      %v2406 = vrot.slane %v2404, 7
      %v2407 = vshll.u32 %v2142, 16
      %v2409 = vor.u32 %v2406, %v2407
      %v2410 = vsel %vm871, %v2402, %v2409
      %v2411 = vrot.slane %v2406, 4
      %v2413 = vshrl.u32 %v2143, 16
      %v2415 = vrot.slane %v2413, 7
      %v2416 = vshll.u32 %v2143, 16
      %v2418 = vor.u32 %v2415, %v2416
      %v2419 = vsel %vm871, %v2411, %v2418
      %v2421 = vshrl.u32 %v2144, 16
      %v2423 = vrot.slane %v2421, 7
      %v2424 = vrot.slane %v2423, 4
      %v2426 = vshrl.u32 %v2145, 16
      %v2428 = vrot.slane %v2426, 7
      %v2429 = vshll.u32 %v2145, 16
      %v2431 = vor.u32 %v2428, %v2429
      %v2432 = vsel %vm871, %v2424, %v2431
      %v2433 = vrot.slane %v2428, 4
      %v2435 = vshrl.u32 %v2146, 16
      %v2437 = vrot.slane %v2435, 7
      %v2438 = vshll.u32 %v2146, 16
      %v2440 = vor.u32 %v2437, %v2438
      %v2441 = vsel %vm871, %v2433, %v2440
      %v2443 = vshrl.u32 %v2147, 16
      %v2445 = vrot.slane %v2443, 7
      %v2446 = vrot.slane %v2445, 4
      %v2448 = vshrl.u32 %v2148, 16
      %v2450 = vrot.slane %v2448, 7
      %v2451 = vshll.u32 %v2148, 16
      %v2453 = vor.u32 %v2450, %v2451
      %v2454 = vsel %vm871, %v2446, %v2453
      %v2455 = vrot.slane %v2450, 4
      %v2457 = vshrl.u32 %v2149, 16
      %v2459 = vrot.slane %v2457, 7
      %v2460 = vshll.u32 %v2149, 16
      %v2462 = vor.u32 %v2459, %v2460
      %v2463 = vsel %vm871, %v2455, %v2462
      %v2465 = vshrl.u32 %v2150, 16
      %v2467 = vrot.slane %v2465, 7
      %v2468 = vrot.slane %v2467, 4
      %v2470 = vshrl.u32 %v2151, 16
      %v2472 = vrot.slane %v2470, 7
      %v2473 = vshll.u32 %v2151, 16
      %v2475 = vor.u32 %v2472, %v2473
      %v2476 = vsel %vm871, %v2468, %v2475
      %v2477 = vrot.slane %v2472, 4
      %v2479 = vshrl.u32 %v2152, 16
      %v2481 = vrot.slane %v2479, 7
      %v2482 = vshll.u32 %v2152, 16
      %v2484 = vor.u32 %v2481, %v2482
      %v2485 = vsel %vm871, %v2477, %v2484
      %v2487 = vshrl.u32 %v2153, 16
      %v2489 = vrot.slane %v2487, 7
      %v2490 = vrot.slane %v2489, 4
      %v2492 = vshrl.u32 %v2154, 16
      %v2494 = vrot.slane %v2492, 7
      %v2495 = vshll.u32 %v2154, 16
      %v2497 = vor.u32 %v2494, %v2495
      %v2498 = vsel %vm871, %v2490, %v2497
      %v2499 = vrot.slane %v2494, 4
      %v2501 = vshrl.u32 %v2155, 16
      %v2503 = vrot.slane %v2501, 7
      %v2504 = vshll.u32 %v2155, 16
      %v2506 = vor.u32 %v2503, %v2504
      %v2507 = vsel %vm871, %v2499, %v2506
      %v2508 = vld [vmem:[%s2107 + $0xc] sm:$0x1]
      %v2509 = vld [vmem:[%s2107 + $0x1c] sm:$0x1]
      %v2510 = vld [vmem:[%s2107 + $0x2c] sm:$0x1]
      %v2511 = vld [vmem:[%s2107 + $0x3c] sm:$0x1]
      %v2512 = vld [vmem:[%s2107 + $0x4c] sm:$0x1]
      %v2513 = vld [vmem:[%s2107 + $0x5c] sm:$0x1]
      %v2514 = vld [vmem:[%s2107 + $0x6c] sm:$0x1]
      %v2515 = vld [vmem:[%s2107 + $0x7c] sm:$0x1]
      %v2516 = vld [vmem:[%s2107 + $0x8c] sm:$0x1]
      %v2517 = vld [vmem:[%s2107 + $0x9c] sm:$0x1]
      %v2518 = vld [vmem:[%s2107 + $0xac] sm:$0x1]
      %v2519 = vld [vmem:[%s2107 + $0xbc] sm:$0x1]
      %v2520 = vld [vmem:[%s2107 + $0xcc] sm:$0x1]
      %v2521 = vld [vmem:[%s2107 + $0xdc] sm:$0x1]
      %v2522 = vld [vmem:[%s2107 + $0xec] sm:$0x1]
      %v2523 = vld [vmem:[%s2107 + $0xfc] sm:$0x1]
      %v2524 = vrot.slane %v2162, 4
      %v2525 = vrot.slane %v2165, 5
      %v2526 = vor.u32 %v2524, %v2525
      %v2527 = vrot.slane %v2526, 4
      %v2528 = vrot.slane %v2174, 5
      %v2529 = vsel %vm1242, %v2527, %v2528
      %v2530 = vrot.slane %v2171, 4
      %v2531 = vor.u32 %v2530, %v2528
      %v2532 = vrot.slane %v2531, 4
      %v2534 = vshll.u32 %v2508, 16
      %v2536 = vrot.slane %v2534, 5
      %v2537 = vsel %vm1242, %v2532, %v2536
      %v2538 = vrot.slane %v2184, 4
      %v2539 = vrot.slane %v2187, 5
      %v2540 = vor.u32 %v2538, %v2539
      %v2541 = vrot.slane %v2540, 4
      %v2542 = vrot.slane %v2196, 5
      %v2543 = vsel %vm1242, %v2541, %v2542
      %v2544 = vrot.slane %v2193, 4
      %v2545 = vor.u32 %v2544, %v2542
      %v2546 = vrot.slane %v2545, 4
      %v2548 = vshll.u32 %v2509, 16
      %v2550 = vrot.slane %v2548, 5
      %v2551 = vsel %vm1242, %v2546, %v2550
      %v2552 = vrot.slane %v2206, 4
      %v2553 = vrot.slane %v2209, 5
      %v2554 = vor.u32 %v2552, %v2553
      %v2555 = vrot.slane %v2554, 4
      %v2556 = vrot.slane %v2218, 5
      %v2557 = vsel %vm1242, %v2555, %v2556
      %v2558 = vrot.slane %v2215, 4
      %v2559 = vor.u32 %v2558, %v2556
      %v2560 = vrot.slane %v2559, 4
      %v2562 = vshll.u32 %v2510, 16
      %v2564 = vrot.slane %v2562, 5
      %v2565 = vsel %vm1242, %v2560, %v2564
      %v2566 = vrot.slane %v2228, 4
      %v2567 = vrot.slane %v2231, 5
      %v2568 = vor.u32 %v2566, %v2567
      %v2569 = vrot.slane %v2568, 4
      %v2570 = vrot.slane %v2240, 5
      %v2571 = vsel %vm1242, %v2569, %v2570
      %v2572 = vrot.slane %v2237, 4
      %v2573 = vor.u32 %v2572, %v2570
      %v2574 = vrot.slane %v2573, 4
      %v2576 = vshll.u32 %v2511, 16
      %v2578 = vrot.slane %v2576, 5
      %v2579 = vsel %vm1242, %v2574, %v2578
      %v2580 = vrot.slane %v2250, 4
      %v2581 = vrot.slane %v2253, 5
      %v2582 = vor.u32 %v2580, %v2581
      %v2583 = vrot.slane %v2582, 4
      %v2584 = vrot.slane %v2262, 5
      %v2585 = vsel %vm1242, %v2583, %v2584
      %v2586 = vrot.slane %v2259, 4
      %v2587 = vor.u32 %v2586, %v2584
      %v2588 = vrot.slane %v2587, 4
      %v2590 = vshll.u32 %v2512, 16
      %v2592 = vrot.slane %v2590, 5
      %v2593 = vsel %vm1242, %v2588, %v2592
      %v2594 = vrot.slane %v2272, 4
      %v2595 = vrot.slane %v2275, 5
      %v2596 = vor.u32 %v2594, %v2595
      %v2597 = vrot.slane %v2596, 4
      %v2598 = vrot.slane %v2284, 5
      %v2599 = vsel %vm1242, %v2597, %v2598
      %v2600 = vrot.slane %v2281, 4
      %v2601 = vor.u32 %v2600, %v2598
      %v2602 = vrot.slane %v2601, 4
      %v2604 = vshll.u32 %v2513, 16
      %v2606 = vrot.slane %v2604, 5
      %v2607 = vsel %vm1242, %v2602, %v2606
      %v2608 = vrot.slane %v2294, 4
      %v2609 = vrot.slane %v2297, 5
      %v2610 = vor.u32 %v2608, %v2609
      %v2611 = vrot.slane %v2610, 4
      %v2612 = vrot.slane %v2306, 5
      %v2613 = vsel %vm1242, %v2611, %v2612
      %v2614 = vrot.slane %v2303, 4
      %v2615 = vor.u32 %v2614, %v2612
      %v2616 = vrot.slane %v2615, 4
      %v2618 = vshll.u32 %v2514, 16
      %v2620 = vrot.slane %v2618, 5
      %v2621 = vsel %vm1242, %v2616, %v2620
      %v2622 = vrot.slane %v2316, 4
      %v2623 = vrot.slane %v2319, 5
      %v2624 = vor.u32 %v2622, %v2623
      %v2625 = vrot.slane %v2624, 4
      %v2626 = vrot.slane %v2328, 5
      %v2627 = vsel %vm1242, %v2625, %v2626
      %v2628 = vrot.slane %v2325, 4
      %v2629 = vor.u32 %v2628, %v2626
      %v2630 = vrot.slane %v2629, 4
      %v2632 = vshll.u32 %v2515, 16
      %v2634 = vrot.slane %v2632, 5
      %v2635 = vsel %vm1242, %v2630, %v2634
      %v2636 = vrot.slane %v2338, 4
      %v2637 = vrot.slane %v2341, 5
      %v2638 = vor.u32 %v2636, %v2637
      %v2639 = vrot.slane %v2638, 4
      %v2640 = vrot.slane %v2350, 5
      %v2641 = vsel %vm1242, %v2639, %v2640
      %v2642 = vrot.slane %v2347, 4
      %v2643 = vor.u32 %v2642, %v2640
      %v2644 = vrot.slane %v2643, 4
      %v2646 = vshll.u32 %v2516, 16
      %v2648 = vrot.slane %v2646, 5
      %v2649 = vsel %vm1242, %v2644, %v2648
      %v2650 = vrot.slane %v2360, 4
      %v2651 = vrot.slane %v2363, 5
      %v2652 = vor.u32 %v2650, %v2651
      %v2653 = vrot.slane %v2652, 4
      %v2654 = vrot.slane %v2372, 5
      %v2655 = vsel %vm1242, %v2653, %v2654
      %v2656 = vrot.slane %v2369, 4
      %v2657 = vor.u32 %v2656, %v2654
      %v2658 = vrot.slane %v2657, 4
      %v2660 = vshll.u32 %v2517, 16
      %v2662 = vrot.slane %v2660, 5
      %v2663 = vsel %vm1242, %v2658, %v2662
      %v2664 = vrot.slane %v2382, 4
      %v2665 = vrot.slane %v2385, 5
      %v2666 = vor.u32 %v2664, %v2665
      %v2667 = vrot.slane %v2666, 4
      %v2668 = vrot.slane %v2394, 5
      %v2669 = vsel %vm1242, %v2667, %v2668
      %v2670 = vrot.slane %v2391, 4
      %v2671 = vor.u32 %v2670, %v2668
      %v2672 = vrot.slane %v2671, 4
      %v2674 = vshll.u32 %v2518, 16
      %v2676 = vrot.slane %v2674, 5
      %v2677 = vsel %vm1242, %v2672, %v2676
      %v2678 = vrot.slane %v2404, 4
      %v2679 = vrot.slane %v2407, 5
      %v2680 = vor.u32 %v2678, %v2679
      %v2681 = vrot.slane %v2680, 4
      %v2682 = vrot.slane %v2416, 5
      %v2683 = vsel %vm1242, %v2681, %v2682
      %v2684 = vrot.slane %v2413, 4
      %v2685 = vor.u32 %v2684, %v2682
      %v2686 = vrot.slane %v2685, 4
      %v2688 = vshll.u32 %v2519, 16
      %v2690 = vrot.slane %v2688, 5
      %v2691 = vsel %vm1242, %v2686, %v2690
      %v2692 = vrot.slane %v2426, 4
      %v2693 = vrot.slane %v2429, 5
      %v2694 = vor.u32 %v2692, %v2693
      %v2695 = vrot.slane %v2694, 4
      %v2696 = vrot.slane %v2438, 5
      %v2697 = vsel %vm1242, %v2695, %v2696
      %v2698 = vrot.slane %v2435, 4
      %v2699 = vor.u32 %v2698, %v2696
      %v2700 = vrot.slane %v2699, 4
      %v2702 = vshll.u32 %v2520, 16
      %v2704 = vrot.slane %v2702, 5
      %v2705 = vsel %vm1242, %v2700, %v2704
      %v2706 = vrot.slane %v2448, 4
      %v2707 = vrot.slane %v2451, 5
      %v2708 = vor.u32 %v2706, %v2707
      %v2709 = vrot.slane %v2708, 4
      %v2710 = vrot.slane %v2460, 5
      %v2711 = vsel %vm1242, %v2709, %v2710
      %v2712 = vrot.slane %v2457, 4
      %v2713 = vor.u32 %v2712, %v2710
      %v2714 = vrot.slane %v2713, 4
      %v2716 = vshll.u32 %v2521, 16
      %v2718 = vrot.slane %v2716, 5
      %v2719 = vsel %vm1242, %v2714, %v2718
      %v2720 = vrot.slane %v2470, 4
      %v2721 = vrot.slane %v2473, 5
      %v2722 = vor.u32 %v2720, %v2721
      %v2723 = vrot.slane %v2722, 4
      %v2724 = vrot.slane %v2482, 5
      %v2725 = vsel %vm1242, %v2723, %v2724
      %v2726 = vrot.slane %v2479, 4
      %v2727 = vor.u32 %v2726, %v2724
      %v2728 = vrot.slane %v2727, 4
      %v2730 = vshll.u32 %v2522, 16
      %v2732 = vrot.slane %v2730, 5
      %v2733 = vsel %vm1242, %v2728, %v2732
      %v2734 = vrot.slane %v2492, 4
      %v2735 = vrot.slane %v2495, 5
      %v2736 = vor.u32 %v2734, %v2735
      %v2737 = vrot.slane %v2736, 4
      %v2738 = vrot.slane %v2504, 5
      %v2739 = vsel %vm1242, %v2737, %v2738
      %v2740 = vrot.slane %v2501, 4
      %v2741 = vor.u32 %v2740, %v2738
      %v2742 = vrot.slane %v2741, 4
      %v2744 = vshll.u32 %v2523, 16
      %v2746 = vrot.slane %v2744, 5
      %v2747 = vsel %vm1242, %v2742, %v2746
      %v2748 = vunpack.c.l.b16 %v884
      %v2749 = vunpack.c.l.b16 %v893
      %v2750 = vunpack.c.l.b16 %v906
      %v2751 = vunpack.c.l.b16 %v915
      %v2752 = vunpack.c.l.b16 %v928
      %v2753 = vunpack.c.l.b16 %v937
      %v2754 = vunpack.c.l.b16 %v950
      %v2755 = vunpack.c.l.b16 %v959
      %v2756 = vunpack.c.l.b16 %v972
      %v2757 = vunpack.c.l.b16 %v981
      %v2758 = vunpack.c.l.b16 %v994
      %v2759 = vunpack.c.l.b16 %v1003
      %v2760 = vunpack.c.l.b16 %v1016
      %v2761 = vunpack.c.l.b16 %v1025
      %v2762 = vunpack.c.l.b16 %v1038
      %v2763 = vunpack.c.l.b16 %v1047
      %v2764 = vunpack.c.l.b16 %v1060
      %v2765 = vunpack.c.l.b16 %v1069
      %v2766 = vunpack.c.l.b16 %v1082
      %v2767 = vunpack.c.l.b16 %v1091
      %v2768 = vunpack.c.l.b16 %v1104
      %v2769 = vunpack.c.l.b16 %v1113
      %v2770 = vunpack.c.l.b16 %v1126
      %v2771 = vunpack.c.l.b16 %v1135
      %v2772 = vunpack.c.l.b16 %v1148
      %v2773 = vunpack.c.l.b16 %v1157
      %v2774 = vunpack.c.l.b16 %v1170
      %v2775 = vunpack.c.l.b16 %v1179
      %v2776 = vunpack.c.l.b16 %v1192
      %v2777 = vunpack.c.l.b16 %v1201
      %v2778 = vunpack.c.l.b16 %v1214
      %v2779 = vunpack.c.l.b16 %v1223
      %v2780 = vpack.c.b16 %v2749, %v2748
      %v2781 = vpack.c.b16 %v2751, %v2750
      %v2782 = vpack.c.b16 %v2753, %v2752
      %v2783 = vpack.c.b16 %v2755, %v2754
      %v2784 = vpack.c.b16 %v2757, %v2756
      %v2785 = vpack.c.b16 %v2759, %v2758
      %v2786 = vpack.c.b16 %v2761, %v2760
      %v2787 = vpack.c.b16 %v2763, %v2762
      %v2788 = vpack.c.b16 %v2765, %v2764
      %v2789 = vpack.c.b16 %v2767, %v2766
      %v2790 = vpack.c.b16 %v2769, %v2768
      %v2791 = vpack.c.b16 %v2771, %v2770
      %v2792 = vpack.c.b16 %v2773, %v2772
      %v2793 = vpack.c.b16 %v2775, %v2774
      %v2794 = vpack.c.b16 %v2777, %v2776
      %v2795 = vpack.c.b16 %v2779, %v2778
      %v2828 = vunpack.c.l.b16 %v822
      %v2829 = vunpack.c.l.b16 %v823
      %v2830 = vunpack.c.l.b16 %v825
      %v2831 = vunpack.c.l.b16 %v826
      %v2832 = vunpack.c.l.b16 %v828
      %v2833 = vunpack.c.l.b16 %v829
      %v2834 = vunpack.c.l.b16 %v831
      %v2835 = vunpack.c.l.b16 %v832
      %v2836 = vunpack.c.l.b16 %v834
      %v2837 = vunpack.c.l.b16 %v835
      %v2838 = vunpack.c.l.b16 %v837
      %v2839 = vunpack.c.l.b16 %v838
      %v2840 = vunpack.c.l.b16 %v840
      %v2841 = vunpack.c.l.b16 %v841
      %v2842 = vunpack.c.l.b16 %v843
      %v2843 = vunpack.c.l.b16 %v844
      %v2844 = vunpack.c.l.b16 %v846
      %v2845 = vunpack.c.l.b16 %v847
      %v2846 = vunpack.c.l.b16 %v849
      %v2847 = vunpack.c.l.b16 %v850
      %v2848 = vunpack.c.l.b16 %v852
      %v2849 = vunpack.c.l.b16 %v853
      %v2850 = vunpack.c.l.b16 %v855
      %v2851 = vunpack.c.l.b16 %v856
      %v2852 = vunpack.c.l.b16 %v858
      %v2853 = vunpack.c.l.b16 %v859
      %v2854 = vunpack.c.l.b16 %v861
      %v2855 = vunpack.c.l.b16 %v862
      %v2856 = vunpack.c.l.b16 %v864
      %v2857 = vunpack.c.l.b16 %v865
      %v2858 = vunpack.c.l.b16 %v867
      %v2859 = vunpack.c.l.b16 %v868
      %v2860 = vpack.c.b16 %v2829, %v2828
      %v2861 = vpack.c.b16 %v2831, %v2830
      %v2862 = vpack.c.b16 %v2833, %v2832
      %v2863 = vpack.c.b16 %v2835, %v2834
      %v2864 = vpack.c.b16 %v2837, %v2836
      %v2865 = vpack.c.b16 %v2839, %v2838
      %v2866 = vpack.c.b16 %v2841, %v2840
      %v2867 = vpack.c.b16 %v2843, %v2842
      %v2868 = vpack.c.b16 %v2845, %v2844
      %v2869 = vpack.c.b16 %v2847, %v2846
      %v2870 = vpack.c.b16 %v2849, %v2848
      %v2871 = vpack.c.b16 %v2851, %v2850
      %v2872 = vpack.c.b16 %v2853, %v2852
      %v2873 = vpack.c.b16 %v2855, %v2854
      %v2874 = vpack.c.b16 %v2857, %v2856
      %v2875 = vpack.c.b16 %v2859, %v2858
      %2876 = vrot.lane.b32.xlu0 %v2860, 64
      %v2877 = vpop.permute.xlu0 %2876
      %2878 = vrot.lane.b32.xlu0 %v2861, 64
      %v2879 = vpop.permute.xlu0 %2878
      %2880 = vrot.lane.b32.xlu0 %v2862, 64
      %v2881 = vpop.permute.xlu0 %2880
      %2882 = vrot.lane.b32.xlu0 %v2863, 64
      %v2883 = vpop.permute.xlu0 %2882
      %2884 = vrot.lane.b32.xlu0 %v2864, 64
      %v2885 = vpop.permute.xlu0 %2884
      %2886 = vrot.lane.b32.xlu0 %v2865, 64
      %v2887 = vpop.permute.xlu0 %2886
      %2888 = vrot.lane.b32.xlu0 %v2866, 64
      %v2889 = vpop.permute.xlu0 %2888
      %2890 = vrot.lane.b32.xlu0 %v2867, 64
      %v2891 = vpop.permute.xlu0 %2890
      %2892 = vrot.lane.b32.xlu0 %v2868, 64
      %v2893 = vpop.permute.xlu0 %2892
      %2894 = vrot.lane.b32.xlu0 %v2869, 64
      %v2895 = vpop.permute.xlu0 %2894
      %2896 = vrot.lane.b32.xlu0 %v2870, 64
      %v2897 = vpop.permute.xlu0 %2896
      %2898 = vrot.lane.b32.xlu0 %v2871, 64
      %v2899 = vpop.permute.xlu0 %2898
      %2900 = vrot.lane.b32.xlu0 %v2872, 64
      %v2901 = vpop.permute.xlu0 %2900
      %2902 = vrot.lane.b32.xlu0 %v2873, 64
      %v2903 = vpop.permute.xlu0 %2902
      %2904 = vrot.lane.b32.xlu0 %v2874, 64
      %v2905 = vpop.permute.xlu0 %2904
      %2906 = vrot.lane.b32.xlu0 %v2875, 64
      %v2907 = vpop.permute.xlu0 %2906
      %v2908 = vunpack.c.l.b16 %v1248
      %v2909 = vunpack.c.l.b16 %v1256
      %v2910 = vunpack.c.l.b16 %v1262
      %v2911 = vunpack.c.l.b16 %v1270
      %v2912 = vunpack.c.l.b16 %v1276
      %v2913 = vunpack.c.l.b16 %v1284
      %v2914 = vunpack.c.l.b16 %v1290
      %v2915 = vunpack.c.l.b16 %v1298
      %v2916 = vunpack.c.l.b16 %v1304
      %v2917 = vunpack.c.l.b16 %v1312
      %v2918 = vunpack.c.l.b16 %v1318
      %v2919 = vunpack.c.l.b16 %v1326
      %v2920 = vunpack.c.l.b16 %v1332
      %v2921 = vunpack.c.l.b16 %v1340
      %v2922 = vunpack.c.l.b16 %v1346
      %v2923 = vunpack.c.l.b16 %v1354
      %v2924 = vunpack.c.l.b16 %v1360
      %v2925 = vunpack.c.l.b16 %v1368
      %v2926 = vunpack.c.l.b16 %v1374
      %v2927 = vunpack.c.l.b16 %v1382
      %v2928 = vunpack.c.l.b16 %v1388
      %v2929 = vunpack.c.l.b16 %v1396
      %v2930 = vunpack.c.l.b16 %v1402
      %v2931 = vunpack.c.l.b16 %v1410
      %v2932 = vunpack.c.l.b16 %v1416
      %v2933 = vunpack.c.l.b16 %v1424
      %v2934 = vunpack.c.l.b16 %v1430
      %v2935 = vunpack.c.l.b16 %v1438
      %v2936 = vunpack.c.l.b16 %v1444
      %v2937 = vunpack.c.l.b16 %v1452
      %v2938 = vunpack.c.l.b16 %v1458
      %v2939 = vunpack.c.l.b16 %v1466
      %v2940 = vpack.c.b16 %v2909, %v2908
      %v2941 = vpack.c.b16 %v2911, %v2910
      %v2942 = vpack.c.b16 %v2913, %v2912
      %v2943 = vpack.c.b16 %v2915, %v2914
      %v2944 = vpack.c.b16 %v2917, %v2916
      %v2945 = vpack.c.b16 %v2919, %v2918
      %v2946 = vpack.c.b16 %v2921, %v2920
      %v2947 = vpack.c.b16 %v2923, %v2922
      %v2948 = vpack.c.b16 %v2925, %v2924
      %v2949 = vpack.c.b16 %v2927, %v2926
      %v2950 = vpack.c.b16 %v2929, %v2928
      %v2951 = vpack.c.b16 %v2931, %v2930
      %v2952 = vpack.c.b16 %v2933, %v2932
      %v2953 = vpack.c.b16 %v2935, %v2934
      %v2954 = vpack.c.b16 %v2937, %v2936
      %v2955 = vpack.c.b16 %v2939, %v2938
      %v2956 = vunpack.c.l.b16 %v1527
      %v2957 = vunpack.c.l.b16 %v1536
      %v2958 = vunpack.c.l.b16 %v1549
      %v2959 = vunpack.c.l.b16 %v1558
      %v2960 = vunpack.c.l.b16 %v1571
      %v2961 = vunpack.c.l.b16 %v1580
      %v2962 = vunpack.c.l.b16 %v1593
      %v2963 = vunpack.c.l.b16 %v1602
      %v2964 = vunpack.c.l.b16 %v1615
      %v2965 = vunpack.c.l.b16 %v1624
      %v2966 = vunpack.c.l.b16 %v1637
      %v2967 = vunpack.c.l.b16 %v1646
      %v2968 = vunpack.c.l.b16 %v1659
      %v2969 = vunpack.c.l.b16 %v1668
      %v2970 = vunpack.c.l.b16 %v1681
      %v2971 = vunpack.c.l.b16 %v1690
      %v2972 = vunpack.c.l.b16 %v1703
      %v2973 = vunpack.c.l.b16 %v1712
      %v2974 = vunpack.c.l.b16 %v1725
      %v2975 = vunpack.c.l.b16 %v1734
      %v2976 = vunpack.c.l.b16 %v1747
      %v2977 = vunpack.c.l.b16 %v1756
      %v2978 = vunpack.c.l.b16 %v1769
      %v2979 = vunpack.c.l.b16 %v1778
      %v2980 = vunpack.c.l.b16 %v1791
      %v2981 = vunpack.c.l.b16 %v1800
      %v2982 = vunpack.c.l.b16 %v1813
      %v2983 = vunpack.c.l.b16 %v1822
      %v2984 = vunpack.c.l.b16 %v1835
      %v2985 = vunpack.c.l.b16 %v1844
      %v2986 = vunpack.c.l.b16 %v1857
      %v2987 = vunpack.c.l.b16 %v1866
      %v2988 = vpack.c.b16 %v2957, %v2956
      %v2989 = vpack.c.b16 %v2959, %v2958
      %v2990 = vpack.c.b16 %v2961, %v2960
      %v2991 = vpack.c.b16 %v2963, %v2962
      %v2992 = vpack.c.b16 %v2965, %v2964
      %v2993 = vpack.c.b16 %v2967, %v2966
      %v2994 = vpack.c.b16 %v2969, %v2968
      %v2995 = vpack.c.b16 %v2971, %v2970
      %v2996 = vpack.c.b16 %v2973, %v2972
      %v2997 = vpack.c.b16 %v2975, %v2974
      %v2998 = vpack.c.b16 %v2977, %v2976
      %v2999 = vpack.c.b16 %v2979, %v2978
      %v3000 = vpack.c.b16 %v2981, %v2980
      %v3001 = vpack.c.b16 %v2983, %v2982
      %v3002 = vpack.c.b16 %v2985, %v2984
      %v3003 = vpack.c.b16 %v2987, %v2986
      %3004 = vrot.lane.b32.xlu0 %v2988, 64
      %v3005 = vpop.permute.xlu0 %3004
      %3006 = vrot.lane.b32.xlu0 %v2989, 64
      %v3007 = vpop.permute.xlu0 %3006
      %3008 = vrot.lane.b32.xlu0 %v2990, 64
      %v3009 = vpop.permute.xlu0 %3008
      %3010 = vrot.lane.b32.xlu0 %v2991, 64
      %v3011 = vpop.permute.xlu0 %3010
      %3012 = vrot.lane.b32.xlu0 %v2992, 64
      %v3013 = vpop.permute.xlu0 %3012
      %3014 = vrot.lane.b32.xlu0 %v2993, 64
      %v3015 = vpop.permute.xlu0 %3014
      %3016 = vrot.lane.b32.xlu0 %v2994, 64
      %v3017 = vpop.permute.xlu0 %3016
      %3018 = vrot.lane.b32.xlu0 %v2995, 64
      %v3019 = vpop.permute.xlu0 %3018
      %3020 = vrot.lane.b32.xlu0 %v2996, 64
      %v3021 = vpop.permute.xlu0 %3020
      %3022 = vrot.lane.b32.xlu0 %v2997, 64
      %v3023 = vpop.permute.xlu0 %3022
      %3024 = vrot.lane.b32.xlu0 %v2998, 64
      %v3025 = vpop.permute.xlu0 %3024
      %3026 = vrot.lane.b32.xlu0 %v2999, 64
      %v3027 = vpop.permute.xlu0 %3026
      %3028 = vrot.lane.b32.xlu0 %v3000, 64
      %v3029 = vpop.permute.xlu0 %3028
      %3030 = vrot.lane.b32.xlu0 %v3001, 64
      %v3031 = vpop.permute.xlu0 %3030
      %3032 = vrot.lane.b32.xlu0 %v3002, 64
      %v3033 = vpop.permute.xlu0 %3032
      %3034 = vrot.lane.b32.xlu0 %v3003, 64
      %v3035 = vpop.permute.xlu0 %3034
      %v3068 = vunpack.c.l.b16 %v1468
      %v3069 = vunpack.c.l.b16 %v1469
      %v3070 = vunpack.c.l.b16 %v1471
      %v3071 = vunpack.c.l.b16 %v1472
      %v3072 = vunpack.c.l.b16 %v1474
      %v3073 = vunpack.c.l.b16 %v1475
      %v3074 = vunpack.c.l.b16 %v1477
      %v3075 = vunpack.c.l.b16 %v1478
      %v3076 = vunpack.c.l.b16 %v1480
      %v3077 = vunpack.c.l.b16 %v1481
      %v3078 = vunpack.c.l.b16 %v1483
      %v3079 = vunpack.c.l.b16 %v1484
      %v3080 = vunpack.c.l.b16 %v1486
      %v3081 = vunpack.c.l.b16 %v1487
      %v3082 = vunpack.c.l.b16 %v1489
      %v3083 = vunpack.c.l.b16 %v1490
      %v3084 = vunpack.c.l.b16 %v1492
      %v3085 = vunpack.c.l.b16 %v1493
      %v3086 = vunpack.c.l.b16 %v1495
      %v3087 = vunpack.c.l.b16 %v1496
      %v3088 = vunpack.c.l.b16 %v1498
      %v3089 = vunpack.c.l.b16 %v1499
      %v3090 = vunpack.c.l.b16 %v1501
      %v3091 = vunpack.c.l.b16 %v1502
      %v3092 = vunpack.c.l.b16 %v1504
      %v3093 = vunpack.c.l.b16 %v1505
      %v3094 = vunpack.c.l.b16 %v1507
      %v3095 = vunpack.c.l.b16 %v1508
      %v3096 = vunpack.c.l.b16 %v1510
      %v3097 = vunpack.c.l.b16 %v1511
      %v3098 = vunpack.c.l.b16 %v1513
      %v3099 = vunpack.c.l.b16 %v1514
      %v3100 = vpack.c.b16 %v3069, %v3068
      %v3101 = vpack.c.b16 %v3071, %v3070
      %v3102 = vpack.c.b16 %v3073, %v3072
      %v3103 = vpack.c.b16 %v3075, %v3074
      %v3104 = vpack.c.b16 %v3077, %v3076
      %v3105 = vpack.c.b16 %v3079, %v3078
      %v3106 = vpack.c.b16 %v3081, %v3080
      %v3107 = vpack.c.b16 %v3083, %v3082
      %v3108 = vpack.c.b16 %v3085, %v3084
      %v3109 = vpack.c.b16 %v3087, %v3086
      %v3110 = vpack.c.b16 %v3089, %v3088
      %v3111 = vpack.c.b16 %v3091, %v3090
      %v3112 = vpack.c.b16 %v3093, %v3092
      %v3113 = vpack.c.b16 %v3095, %v3094
      %v3114 = vpack.c.b16 %v3097, %v3096
      %v3115 = vpack.c.b16 %v3099, %v3098
      %v3116 = vunpack.c.l.b16 %v1888
      %v3117 = vunpack.c.l.b16 %v1896
      %v3118 = vunpack.c.l.b16 %v1902
      %v3119 = vunpack.c.l.b16 %v1910
      %v3120 = vunpack.c.l.b16 %v1916
      %v3121 = vunpack.c.l.b16 %v1924
      %v3122 = vunpack.c.l.b16 %v1930
      %v3123 = vunpack.c.l.b16 %v1938
      %v3124 = vunpack.c.l.b16 %v1944
      %v3125 = vunpack.c.l.b16 %v1952
      %v3126 = vunpack.c.l.b16 %v1958
      %v3127 = vunpack.c.l.b16 %v1966
      %v3128 = vunpack.c.l.b16 %v1972
      %v3129 = vunpack.c.l.b16 %v1980
      %v3130 = vunpack.c.l.b16 %v1986
      %v3131 = vunpack.c.l.b16 %v1994
      %v3132 = vunpack.c.l.b16 %v2000
      %v3133 = vunpack.c.l.b16 %v2008
      %v3134 = vunpack.c.l.b16 %v2014
      %v3135 = vunpack.c.l.b16 %v2022
      %v3136 = vunpack.c.l.b16 %v2028
      %v3137 = vunpack.c.l.b16 %v2036
      %v3138 = vunpack.c.l.b16 %v2042
      %v3139 = vunpack.c.l.b16 %v2050
      %v3140 = vunpack.c.l.b16 %v2056
      %v3141 = vunpack.c.l.b16 %v2064
      %v3142 = vunpack.c.l.b16 %v2070
      %v3143 = vunpack.c.l.b16 %v2078
      %v3144 = vunpack.c.l.b16 %v2084
      %v3145 = vunpack.c.l.b16 %v2092
      %v3146 = vunpack.c.l.b16 %v2098
      %v3147 = vunpack.c.l.b16 %v2106
      %v3148 = vpack.c.b16 %v3117, %v3116
      %v3149 = vpack.c.b16 %v3119, %v3118
      %v3150 = vpack.c.b16 %v3121, %v3120
      %v3151 = vpack.c.b16 %v3123, %v3122
      %v3152 = vpack.c.b16 %v3125, %v3124
      %v3153 = vpack.c.b16 %v3127, %v3126
      %v3154 = vpack.c.b16 %v3129, %v3128
      %v3155 = vpack.c.b16 %v3131, %v3130
      %v3156 = vpack.c.b16 %v3133, %v3132
      %v3157 = vpack.c.b16 %v3135, %v3134
      %v3158 = vpack.c.b16 %v3137, %v3136
      %v3159 = vpack.c.b16 %v3139, %v3138
      %v3160 = vpack.c.b16 %v3141, %v3140
      %v3161 = vpack.c.b16 %v3143, %v3142
      %v3162 = vpack.c.b16 %v3145, %v3144
      %v3163 = vpack.c.b16 %v3147, %v3146
      %3164 = vrot.lane.b32.xlu0 %v3148, 64
      %v3165 = vpop.permute.xlu0 %3164
      %3166 = vrot.lane.b32.xlu0 %v3149, 64
      %v3167 = vpop.permute.xlu0 %3166
      %3168 = vrot.lane.b32.xlu0 %v3150, 64
      %v3169 = vpop.permute.xlu0 %3168
      %3170 = vrot.lane.b32.xlu0 %v3151, 64
      %v3171 = vpop.permute.xlu0 %3170
      %3172 = vrot.lane.b32.xlu0 %v3152, 64
      %v3173 = vpop.permute.xlu0 %3172
      %3174 = vrot.lane.b32.xlu0 %v3153, 64
      %v3175 = vpop.permute.xlu0 %3174
      %3176 = vrot.lane.b32.xlu0 %v3154, 64
      %v3177 = vpop.permute.xlu0 %3176
      %3178 = vrot.lane.b32.xlu0 %v3155, 64
      %v3179 = vpop.permute.xlu0 %3178
      %3180 = vrot.lane.b32.xlu0 %v3156, 64
      %v3181 = vpop.permute.xlu0 %3180
      %3182 = vrot.lane.b32.xlu0 %v3157, 64
      %v3183 = vpop.permute.xlu0 %3182
      %3184 = vrot.lane.b32.xlu0 %v3158, 64
      %v3185 = vpop.permute.xlu0 %3184
      %3186 = vrot.lane.b32.xlu0 %v3159, 64
      %v3187 = vpop.permute.xlu0 %3186
      %3188 = vrot.lane.b32.xlu0 %v3160, 64
      %v3189 = vpop.permute.xlu0 %3188
      %3190 = vrot.lane.b32.xlu0 %v3161, 64
      %v3191 = vpop.permute.xlu0 %3190
      %3192 = vrot.lane.b32.xlu0 %v3162, 64
      %v3193 = vpop.permute.xlu0 %3192
      %3194 = vrot.lane.b32.xlu0 %v3163, 64
      %v3195 = vpop.permute.xlu0 %3194
      %v3196 = vunpack.c.l.b16 %v2168
      %v3197 = vunpack.c.l.b16 %v2177
      %v3198 = vunpack.c.l.b16 %v2190
      %v3199 = vunpack.c.l.b16 %v2199
      %v3200 = vunpack.c.l.b16 %v2212
      %v3201 = vunpack.c.l.b16 %v2221
      %v3202 = vunpack.c.l.b16 %v2234
      %v3203 = vunpack.c.l.b16 %v2243
      %v3204 = vunpack.c.l.b16 %v2256
      %v3205 = vunpack.c.l.b16 %v2265
      %v3206 = vunpack.c.l.b16 %v2278
      %v3207 = vunpack.c.l.b16 %v2287
      %v3208 = vunpack.c.l.b16 %v2300
      %v3209 = vunpack.c.l.b16 %v2309
      %v3210 = vunpack.c.l.b16 %v2322
      %v3211 = vunpack.c.l.b16 %v2331
      %v3212 = vunpack.c.l.b16 %v2344
      %v3213 = vunpack.c.l.b16 %v2353
      %v3214 = vunpack.c.l.b16 %v2366
      %v3215 = vunpack.c.l.b16 %v2375
      %v3216 = vunpack.c.l.b16 %v2388
      %v3217 = vunpack.c.l.b16 %v2397
      %v3218 = vunpack.c.l.b16 %v2410
      %v3219 = vunpack.c.l.b16 %v2419
      %v3220 = vunpack.c.l.b16 %v2432
      %v3221 = vunpack.c.l.b16 %v2441
      %v3222 = vunpack.c.l.b16 %v2454
      %v3223 = vunpack.c.l.b16 %v2463
      %v3224 = vunpack.c.l.b16 %v2476
      %v3225 = vunpack.c.l.b16 %v2485
      %v3226 = vunpack.c.l.b16 %v2498
      %v3227 = vunpack.c.l.b16 %v2507
      %v3228 = vpack.c.b16 %v3197, %v3196
      %v3229 = vpack.c.b16 %v3199, %v3198
      %v3230 = vpack.c.b16 %v3201, %v3200
      %v3231 = vpack.c.b16 %v3203, %v3202
      %v3232 = vpack.c.b16 %v3205, %v3204
      %v3233 = vpack.c.b16 %v3207, %v3206
      %v3234 = vpack.c.b16 %v3209, %v3208
      %v3235 = vpack.c.b16 %v3211, %v3210
      %v3236 = vpack.c.b16 %v3213, %v3212
      %v3237 = vpack.c.b16 %v3215, %v3214
      %v3238 = vpack.c.b16 %v3217, %v3216
      %v3239 = vpack.c.b16 %v3219, %v3218
      %v3240 = vpack.c.b16 %v3221, %v3220
      %v3241 = vpack.c.b16 %v3223, %v3222
      %v3242 = vpack.c.b16 %v3225, %v3224
      %v3243 = vpack.c.b16 %v3227, %v3226
      %v3276 = vunpack.c.l.b16 %v2109
      %v3277 = vunpack.c.l.b16 %v2110
      %v3278 = vunpack.c.l.b16 %v2112
      %v3279 = vunpack.c.l.b16 %v2113
      %v3280 = vunpack.c.l.b16 %v2115
      %v3281 = vunpack.c.l.b16 %v2116
      %v3282 = vunpack.c.l.b16 %v2118
      %v3283 = vunpack.c.l.b16 %v2119
      %v3284 = vunpack.c.l.b16 %v2121
      %v3285 = vunpack.c.l.b16 %v2122
      %v3286 = vunpack.c.l.b16 %v2124
      %v3287 = vunpack.c.l.b16 %v2125
      %v3288 = vunpack.c.l.b16 %v2127
      %v3289 = vunpack.c.l.b16 %v2128
      %v3290 = vunpack.c.l.b16 %v2130
      %v3291 = vunpack.c.l.b16 %v2131
      %v3292 = vunpack.c.l.b16 %v2133
      %v3293 = vunpack.c.l.b16 %v2134
      %v3294 = vunpack.c.l.b16 %v2136
      %v3295 = vunpack.c.l.b16 %v2137
      %v3296 = vunpack.c.l.b16 %v2139
      %v3297 = vunpack.c.l.b16 %v2140
      %v3298 = vunpack.c.l.b16 %v2142
      %v3299 = vunpack.c.l.b16 %v2143
      %v3300 = vunpack.c.l.b16 %v2145
      %v3301 = vunpack.c.l.b16 %v2146
      %v3302 = vunpack.c.l.b16 %v2148
      %v3303 = vunpack.c.l.b16 %v2149
      %v3304 = vunpack.c.l.b16 %v2151
      %v3305 = vunpack.c.l.b16 %v2152
      %v3306 = vunpack.c.l.b16 %v2154
      %v3307 = vunpack.c.l.b16 %v2155
      %v3308 = vpack.c.b16 %v3277, %v3276
      %v3309 = vpack.c.b16 %v3279, %v3278
      %v3310 = vpack.c.b16 %v3281, %v3280
      %v3311 = vpack.c.b16 %v3283, %v3282
      %v3312 = vpack.c.b16 %v3285, %v3284
      %v3313 = vpack.c.b16 %v3287, %v3286
      %v3314 = vpack.c.b16 %v3289, %v3288
      %v3315 = vpack.c.b16 %v3291, %v3290
      %v3316 = vpack.c.b16 %v3293, %v3292
      %v3317 = vpack.c.b16 %v3295, %v3294
      %v3318 = vpack.c.b16 %v3297, %v3296
      %v3319 = vpack.c.b16 %v3299, %v3298
      %v3320 = vpack.c.b16 %v3301, %v3300
      %v3321 = vpack.c.b16 %v3303, %v3302
      %v3322 = vpack.c.b16 %v3305, %v3304
      %v3323 = vpack.c.b16 %v3307, %v3306
      %3324 = vrot.lane.b32.xlu0 %v3308, 64
      %v3325 = vpop.permute.xlu0 %3324
      %3326 = vrot.lane.b32.xlu0 %v3309, 64
      %v3327 = vpop.permute.xlu0 %3326
      %3328 = vrot.lane.b32.xlu0 %v3310, 64
      %v3329 = vpop.permute.xlu0 %3328
      %3330 = vrot.lane.b32.xlu0 %v3311, 64
      %v3331 = vpop.permute.xlu0 %3330
      %3332 = vrot.lane.b32.xlu0 %v3312, 64
      %v3333 = vpop.permute.xlu0 %3332
      %3334 = vrot.lane.b32.xlu0 %v3313, 64
      %v3335 = vpop.permute.xlu0 %3334
      %3336 = vrot.lane.b32.xlu0 %v3314, 64
      %v3337 = vpop.permute.xlu0 %3336
      %3338 = vrot.lane.b32.xlu0 %v3315, 64
      %v3339 = vpop.permute.xlu0 %3338
      %3340 = vrot.lane.b32.xlu0 %v3316, 64
      %v3341 = vpop.permute.xlu0 %3340
      %3342 = vrot.lane.b32.xlu0 %v3317, 64
      %v3343 = vpop.permute.xlu0 %3342
      %3344 = vrot.lane.b32.xlu0 %v3318, 64
      %v3345 = vpop.permute.xlu0 %3344
      %3346 = vrot.lane.b32.xlu0 %v3319, 64
      %v3347 = vpop.permute.xlu0 %3346
      %3348 = vrot.lane.b32.xlu0 %v3320, 64
      %v3349 = vpop.permute.xlu0 %3348
      %3350 = vrot.lane.b32.xlu0 %v3321, 64
      %v3351 = vpop.permute.xlu0 %3350
      %3352 = vrot.lane.b32.xlu0 %v3322, 64
      %v3353 = vpop.permute.xlu0 %3352
      %3354 = vrot.lane.b32.xlu0 %v3323, 64
      %v3355 = vpop.permute.xlu0 %3354
      %v3356 = vunpack.c.l.b16 %v2529
      %v3357 = vunpack.c.l.b16 %v2537
      %v3358 = vunpack.c.l.b16 %v2543
      %v3359 = vunpack.c.l.b16 %v2551
      %v3360 = vunpack.c.l.b16 %v2557
      %v3361 = vunpack.c.l.b16 %v2565
      %v3362 = vunpack.c.l.b16 %v2571
      %v3363 = vunpack.c.l.b16 %v2579
      %v3364 = vunpack.c.l.b16 %v2585
      %v3365 = vunpack.c.l.b16 %v2593
      %v3366 = vunpack.c.l.b16 %v2599
      %v3367 = vunpack.c.l.b16 %v2607
      %v3368 = vunpack.c.l.b16 %v2613
      %v3369 = vunpack.c.l.b16 %v2621
      %v3370 = vunpack.c.l.b16 %v2627
      %v3371 = vunpack.c.l.b16 %v2635
      %v3372 = vunpack.c.l.b16 %v2641
      %v3373 = vunpack.c.l.b16 %v2649
      %v3374 = vunpack.c.l.b16 %v2655
      %v3375 = vunpack.c.l.b16 %v2663
      %v3376 = vunpack.c.l.b16 %v2669
      %v3377 = vunpack.c.l.b16 %v2677
      %v3378 = vunpack.c.l.b16 %v2683
      %v3379 = vunpack.c.l.b16 %v2691
      %v3380 = vunpack.c.l.b16 %v2697
      %v3381 = vunpack.c.l.b16 %v2705
      %v3382 = vunpack.c.l.b16 %v2711
      %v3383 = vunpack.c.l.b16 %v2719
      %v3384 = vunpack.c.l.b16 %v2725
      %v3385 = vunpack.c.l.b16 %v2733
      %v3386 = vunpack.c.l.b16 %v2739
      %v3387 = vunpack.c.l.b16 %v2747
      %v3388 = vpack.c.b16 %v3357, %v3356
      %v3389 = vpack.c.b16 %v3359, %v3358
      %v3390 = vpack.c.b16 %v3361, %v3360
      %v3391 = vpack.c.b16 %v3363, %v3362
      %v3392 = vpack.c.b16 %v3365, %v3364
      %v3393 = vpack.c.b16 %v3367, %v3366
      %v3394 = vpack.c.b16 %v3369, %v3368
      %v3395 = vpack.c.b16 %v3371, %v3370
      %v3396 = vpack.c.b16 %v3373, %v3372
      %v3397 = vpack.c.b16 %v3375, %v3374
      %v3398 = vpack.c.b16 %v3377, %v3376
      %v3399 = vpack.c.b16 %v3379, %v3378
      %v3400 = vpack.c.b16 %v3381, %v3380
      %v3401 = vpack.c.b16 %v3383, %v3382
      %v3402 = vpack.c.b16 %v3385, %v3384
      %v3403 = vpack.c.b16 %v3387, %v3386
      %v3406 = vsel %vm492, %v2780, %v2877
      %v3410 = vsel %vm492, %v2781, %v2879
      %v3414 = vsel %vm492, %v2782, %v2881
      %v3418 = vsel %vm492, %v2783, %v2883
      %v3422 = vsel %vm492, %v2784, %v2885
      %v3426 = vsel %vm492, %v2785, %v2887
      %v3430 = vsel %vm492, %v2786, %v2889
      %v3434 = vsel %vm492, %v2787, %v2891
      %v3438 = vsel %vm492, %v2788, %v2893
      %v3442 = vsel %vm492, %v2789, %v2895
      %v3446 = vsel %vm492, %v2790, %v2897
      %v3450 = vsel %vm492, %v2791, %v2899
      %v3454 = vsel %vm492, %v2792, %v2901
      %v3458 = vsel %vm492, %v2793, %v2903
      %v3462 = vsel %vm492, %v2794, %v2905
      %v3466 = vsel %vm492, %v2795, %v2907
      %v3470 = vsel %vm492, %v2940, %v3005
      %v3474 = vsel %vm492, %v2941, %v3007
      %v3478 = vsel %vm492, %v2942, %v3009
      %v3482 = vsel %vm492, %v2943, %v3011
      %v3486 = vsel %vm492, %v2944, %v3013
      %v3490 = vsel %vm492, %v2945, %v3015
      %v3494 = vsel %vm492, %v2946, %v3017
      %v3498 = vsel %vm492, %v2947, %v3019
      %v3502 = vsel %vm492, %v2948, %v3021
      %v3506 = vsel %vm492, %v2949, %v3023
      %v3510 = vsel %vm492, %v2950, %v3025
      %v3514 = vsel %vm492, %v2951, %v3027
      %v3518 = vsel %vm492, %v2952, %v3029
      %v3522 = vsel %vm492, %v2953, %v3031
      %v3526 = vsel %vm492, %v2954, %v3033
      %v3530 = vsel %vm492, %v2955, %v3035
      %v3534 = vsel %vm492, %v3100, %v3165
      %v3538 = vsel %vm492, %v3101, %v3167
      %v3542 = vsel %vm492, %v3102, %v3169
      %v3546 = vsel %vm492, %v3103, %v3171
      %v3550 = vsel %vm492, %v3104, %v3173
      %v3554 = vsel %vm492, %v3105, %v3175
      %v3558 = vsel %vm492, %v3106, %v3177
      %v3562 = vsel %vm492, %v3107, %v3179
      %v3566 = vsel %vm492, %v3108, %v3181
      %v3570 = vsel %vm492, %v3109, %v3183
      %v3574 = vsel %vm492, %v3110, %v3185
      %v3578 = vsel %vm492, %v3111, %v3187
      %v3582 = vsel %vm492, %v3112, %v3189
      %v3586 = vsel %vm492, %v3113, %v3191
      %v3590 = vsel %vm492, %v3114, %v3193
      %v3594 = vsel %vm492, %v3115, %v3195
      %v3598 = vsel %vm492, %v3228, %v3325
      %v3602 = vsel %vm492, %v3229, %v3327
      %v3606 = vsel %vm492, %v3230, %v3329
      %v3610 = vsel %vm492, %v3231, %v3331
      %v3614 = vsel %vm492, %v3232, %v3333
      %v3618 = vsel %vm492, %v3233, %v3335
      %v3622 = vsel %vm492, %v3234, %v3337
      %v3626 = vsel %vm492, %v3235, %v3339
      %v3630 = vsel %vm492, %v3236, %v3341
      %v3634 = vsel %vm492, %v3237, %v3343
      %v3638 = vsel %vm492, %v3238, %v3345
      %v3642 = vsel %vm492, %v3239, %v3347
      %v3646 = vsel %vm492, %v3240, %v3349
      %v3650 = vsel %vm492, %v3241, %v3351
      %v3654 = vsel %vm492, %v3242, %v3353
      %v3658 = vsel %vm492, %v3243, %v3355
      %v3660 = vld [vmem:[%s5] sm:$0xf]
      %v3661 = vld [vmem:[%s5 + $0x4] sm:$0xf]
      %v3662 = vld [vmem:[%s5 + $0x8] sm:$0xf]
      %v3663 = vld [vmem:[%s5 + $0xc] sm:$0xf]
      %v3664 = vld [vmem:[%s5 + $0x10] sm:$0xf]
      %v3665 = vld [vmem:[%s5 + $0x14] sm:$0xf]
      %v3666 = vld [vmem:[%s5 + $0x18] sm:$0xf]
      %v3667 = vld [vmem:[%s5 + $0x1c] sm:$0xf]
      %v3668 = vld [vmem:[%s5 + $0x20] sm:$0xf]
      %v3669 = vld [vmem:[%s5 + $0x24] sm:$0xf]
      %v3670 = vld [vmem:[%s5 + $0x28] sm:$0xf]
      %v3671 = vld [vmem:[%s5 + $0x2c] sm:$0xf]
      %v3672 = vld [vmem:[%s5 + $0x30] sm:$0xf]
      %v3673 = vld [vmem:[%s5 + $0x34] sm:$0xf]
      %v3674 = vld [vmem:[%s5 + $0x38] sm:$0xf]
      %v3675 = vld [vmem:[%s5 + $0x3c] sm:$0xf]
      %v3676 = vld [vmem:[%s5 + $0x40] sm:$0xf]
      %v3677 = vld [vmem:[%s5 + $0x44] sm:$0xf]
      %v3678 = vld [vmem:[%s5 + $0x48] sm:$0xf]
      %v3679 = vld [vmem:[%s5 + $0x4c] sm:$0xf]
      %v3680 = vld [vmem:[%s5 + $0x50] sm:$0xf]
      %v3681 = vld [vmem:[%s5 + $0x54] sm:$0xf]
      %v3682 = vld [vmem:[%s5 + $0x58] sm:$0xf]
      %v3683 = vld [vmem:[%s5 + $0x5c] sm:$0xf]
      %v3684 = vld [vmem:[%s5 + $0x60] sm:$0xf]
      %v3685 = vld [vmem:[%s5 + $0x64] sm:$0xf]
      %v3686 = vld [vmem:[%s5 + $0x68] sm:$0xf]
      %v3687 = vld [vmem:[%s5 + $0x6c] sm:$0xf]
      %v3688 = vld [vmem:[%s5 + $0x70] sm:$0xf]
      %v3689 = vld [vmem:[%s5 + $0x74] sm:$0xf]
      %v3690 = vld [vmem:[%s5 + $0x78] sm:$0xf]
      %v3691 = vld [vmem:[%s5 + $0x7c] sm:$0xf]
      %v3692 = vld [vmem:[%s5 + $0x80] sm:$0xf]
      %v3693 = vld [vmem:[%s5 + $0x84] sm:$0xf]
      %v3694 = vld [vmem:[%s5 + $0x88] sm:$0xf]
      %v3695 = vld [vmem:[%s5 + $0x8c] sm:$0xf]
      %v3696 = vld [vmem:[%s5 + $0x90] sm:$0xf]
      %v3697 = vld [vmem:[%s5 + $0x94] sm:$0xf]
      %v3698 = vld [vmem:[%s5 + $0x98] sm:$0xf]
      %v3699 = vld [vmem:[%s5 + $0x9c] sm:$0xf]
      %v3700 = vld [vmem:[%s5 + $0xa0] sm:$0xf]
      %v3701 = vld [vmem:[%s5 + $0xa4] sm:$0xf]
      %v3702 = vld [vmem:[%s5 + $0xa8] sm:$0xf]
      %v3703 = vld [vmem:[%s5 + $0xac] sm:$0xf]
      %v3704 = vld [vmem:[%s5 + $0xb0] sm:$0xf]
      %v3705 = vld [vmem:[%s5 + $0xb4] sm:$0xf]
      %v3706 = vld [vmem:[%s5 + $0xb8] sm:$0xf]
      %v3707 = vld [vmem:[%s5 + $0xbc] sm:$0xf]
      %v3708 = vld [vmem:[%s5 + $0xc0] sm:$0xf]
      %v3709 = vld [vmem:[%s5 + $0xc4] sm:$0xf]
      %v3710 = vld [vmem:[%s5 + $0xc8] sm:$0xf]
      %v3711 = vld [vmem:[%s5 + $0xcc] sm:$0xf]
      %v3712 = vld [vmem:[%s5 + $0xd0] sm:$0xf]
      %v3713 = vld [vmem:[%s5 + $0xd4] sm:$0xf]
      %v3714 = vld [vmem:[%s5 + $0xd8] sm:$0xf]
      %v3715 = vld [vmem:[%s5 + $0xdc] sm:$0xf]
      %v3716 = vld [vmem:[%s5 + $0xe0] sm:$0xf]
      %v3717 = vld [vmem:[%s5 + $0xe4] sm:$0xf]
      %v3718 = vld [vmem:[%s5 + $0xe8] sm:$0xf]
      %v3719 = vld [vmem:[%s5 + $0xec] sm:$0xf]
      %v3720 = vld [vmem:[%s5 + $0xf0] sm:$0xf]
      %v3721 = vld [vmem:[%s5 + $0xf4] sm:$0xf]
      %v3722 = vld [vmem:[%s5 + $0xf8] sm:$0xf]
      %v3723 = vld [vmem:[%s5 + $0xfc] sm:$0xf]
      %v3724 = vld [vmem:[%s5 + $0x100] sm:$0xf]
      %v3725 = vld [vmem:[%s5 + $0x104] sm:$0xf]
      %v3726 = vld [vmem:[%s5 + $0x108] sm:$0xf]
      %v3727 = vld [vmem:[%s5 + $0x10c] sm:$0xf]
      %v3728 = vld [vmem:[%s5 + $0x110] sm:$0xf]
      %v3729 = vld [vmem:[%s5 + $0x114] sm:$0xf]
      %v3730 = vld [vmem:[%s5 + $0x118] sm:$0xf]
      %v3731 = vld [vmem:[%s5 + $0x11c] sm:$0xf]
      %v3804 = vunpack.c.l.b16 %v3660
      %v3805 = vunpack.c.l.b16 %v3661
      %v3806 = vunpack.c.l.b16 %v3662
      %v3807 = vunpack.c.l.b16 %v3663
      %v3808 = vunpack.c.l.b16 %v3664
      %v3809 = vunpack.c.l.b16 %v3665
      %v3810 = vunpack.c.l.b16 %v3666
      %v3811 = vunpack.c.l.b16 %v3667
      %v3812 = vunpack.c.l.b16 %v3668
      %v3813 = vunpack.c.l.b16 %v3669
      %v3814 = vunpack.c.l.b16 %v3670
      %v3815 = vunpack.c.l.b16 %v3671
      %v3816 = vunpack.c.l.b16 %v3672
      %v3817 = vunpack.c.l.b16 %v3673
      %v3818 = vunpack.c.l.b16 %v3674
      %v3819 = vunpack.c.l.b16 %v3675
      %v3820 = vunpack.c.l.b16 %v3676
      %v3821 = vunpack.c.l.b16 %v3677
      %v3822 = vunpack.c.l.b16 %v3678
      %v3823 = vunpack.c.l.b16 %v3679
      %v3824 = vunpack.c.l.b16 %v3680
      %v3825 = vunpack.c.l.b16 %v3681
      %v3826 = vunpack.c.l.b16 %v3682
      %v3827 = vunpack.c.l.b16 %v3683
      %v3828 = vunpack.c.l.b16 %v3684
      %v3829 = vunpack.c.l.b16 %v3685
      %v3830 = vunpack.c.l.b16 %v3686
      %v3831 = vunpack.c.l.b16 %v3687
      %v3832 = vunpack.c.l.b16 %v3688
      %v3833 = vunpack.c.l.b16 %v3689
      %v3834 = vunpack.c.l.b16 %v3690
      %v3835 = vunpack.c.l.b16 %v3691
      %v3836 = vunpack.c.l.b16 %v3692
      %v3837 = vunpack.c.l.b16 %v3693
      %v3838 = vunpack.c.l.b16 %v3694
      %v3839 = vunpack.c.l.b16 %v3695
      %v3840 = vunpack.c.l.b16 %v3696
      %v3841 = vunpack.c.l.b16 %v3697
      %v3842 = vunpack.c.l.b16 %v3698
      %v3843 = vunpack.c.l.b16 %v3699
      %v3844 = vunpack.c.l.b16 %v3700
      %v3845 = vunpack.c.l.b16 %v3701
      %v3846 = vunpack.c.l.b16 %v3702
      %v3847 = vunpack.c.l.b16 %v3703
      %v3848 = vunpack.c.l.b16 %v3704
      %v3849 = vunpack.c.l.b16 %v3705
      %v3850 = vunpack.c.l.b16 %v3706
      %v3851 = vunpack.c.l.b16 %v3707
      %v3852 = vunpack.c.l.b16 %v3708
      %v3853 = vunpack.c.l.b16 %v3709
      %v3854 = vunpack.c.l.b16 %v3710
      %v3855 = vunpack.c.l.b16 %v3711
      %v3856 = vunpack.c.l.b16 %v3712
      %v3857 = vunpack.c.l.b16 %v3713
      %v3858 = vunpack.c.l.b16 %v3714
      %v3859 = vunpack.c.l.b16 %v3715
      %v3860 = vunpack.c.l.b16 %v3716
      %v3861 = vunpack.c.l.b16 %v3717
      %v3862 = vunpack.c.l.b16 %v3718
      %v3863 = vunpack.c.l.b16 %v3719
      %v3864 = vunpack.c.l.b16 %v3720
      %v3865 = vunpack.c.l.b16 %v3721
      %v3866 = vunpack.c.l.b16 %v3722
      %v3867 = vunpack.c.l.b16 %v3723
      %v3868 = vunpack.c.l.b16 %v3724
      %v3869 = vunpack.c.l.b16 %v3725
      %v3870 = vunpack.c.l.b16 %v3726
      %v3871 = vunpack.c.l.b16 %v3727
      %v3872 = vunpack.c.l.b16 %v3728
      %v3873 = vunpack.c.l.b16 %v3729
      %v3874 = vunpack.c.l.b16 %v3730
      %v3875 = vunpack.c.l.b16 %v3731
      %v3876 = vpack.c.b16 %v3805, %v3804
      %v3877 = vpack.c.b16 %v3807, %v3806
      %v3878 = vpack.c.b16 %v3809, %v3808
      %v3879 = vpack.c.b16 %v3811, %v3810
      %v3880 = vpack.c.b16 %v3813, %v3812
      %v3881 = vpack.c.b16 %v3815, %v3814
      %v3882 = vpack.c.b16 %v3817, %v3816
      %v3883 = vpack.c.b16 %v3819, %v3818
      %v3884 = vpack.c.b16 %v3821, %v3820
      %v3885 = vpack.c.b16 %v3823, %v3822
      %v3886 = vpack.c.b16 %v3825, %v3824
      %v3887 = vpack.c.b16 %v3827, %v3826
      %v3888 = vpack.c.b16 %v3829, %v3828
      %v3889 = vpack.c.b16 %v3831, %v3830
      %v3890 = vpack.c.b16 %v3833, %v3832
      %v3891 = vpack.c.b16 %v3835, %v3834
      %v3892 = vpack.c.b16 %v3837, %v3836
      %v3893 = vpack.c.b16 %v3839, %v3838
      %v3894 = vpack.c.b16 %v3841, %v3840
      %v3895 = vpack.c.b16 %v3843, %v3842
      %v3896 = vpack.c.b16 %v3845, %v3844
      %v3897 = vpack.c.b16 %v3847, %v3846
      %v3898 = vpack.c.b16 %v3849, %v3848
      %v3899 = vpack.c.b16 %v3851, %v3850
      %v3900 = vpack.c.b16 %v3853, %v3852
      %v3901 = vpack.c.b16 %v3855, %v3854
      %v3902 = vpack.c.b16 %v3857, %v3856
      %v3903 = vpack.c.b16 %v3859, %v3858
      %v3904 = vpack.c.b16 %v3861, %v3860
      %v3905 = vpack.c.b16 %v3863, %v3862
      %v3906 = vpack.c.b16 %v3865, %v3864
      %v3907 = vpack.c.b16 %v3867, %v3866
      %v3908 = vpack.c.b16 %v3869, %v3868
      %v3909 = vpack.c.b16 %v3871, %v3870
      %v3910 = vpack.c.b16 %v3873, %v3872
      %v3911 = vpack.c.b16 %v3875, %v3874
      %v3949 = vsel %vm492, %v3388, 0
      %v3952 = vsel %vm492, %v3389, 0
      %v3955 = vsel %vm492, %v3390, 0
      %v3958 = vsel %vm492, %v3391, 0
      %v3961 = vsel %vm492, %v3392, 0
      %v3964 = vsel %vm492, %v3393, 0
      %v3967 = vsel %vm492, %v3394, 0
      %v3970 = vsel %vm492, %v3395, 0
      %v3973 = vsel %vm492, %v3396, 0
      %v3976 = vsel %vm492, %v3397, 0
      %v3979 = vsel %vm492, %v3398, 0
      %v3982 = vsel %vm492, %v3399, 0
      %v3985 = vsel %vm492, %v3400, 0
      %v3988 = vsel %vm492, %v3401, 0
      %v3991 = vsel %vm492, %v3402, 0
      %v3994 = vsel %vm492, %v3403, 0
      %3996 = vmatpush.bf16.msra.mxu0 %v3883
      %3997 = vmatpush.bf16.msra.mxu0 %v3882
      %3998 = vmatpush.bf16.msra.mxu0 %v3881
      %3999 = vmatpush.bf16.msra.mxu0 %v3880
      %4000 = vmatpush.bf16.msra.mxu0 %v3879
      %4001 = vmatpush.bf16.msra.mxu0 %v3878
      %4002 = vmatpush.bf16.msra.mxu0 %v3877
      %4003 = vmatpush.bf16.msra.mxu0 %v3876
      %4004 = vmatmul.bf16.gmra.mxu0 %v3406
      %v4005 = vpop.f32.mrf.mxu0
      %v4006 = vadd.f32 0.0, %v4005
      %v4007 = vpop.f32.mrf.mxu0
      %v4008 = vadd.f32 0.0, %v4007
      %4009 = vmatmul.bf16.gmra.mxu0 %v3410
      %v4010 = vpop.f32.mrf.mxu0
      %v4011 = vadd.f32 0.0, %v4010
      %v4012 = vpop.f32.mrf.mxu0
      %v4013 = vadd.f32 0.0, %v4012
      %4014 = vmatmul.bf16.gmra.mxu0 %v3414
      %v4015 = vpop.f32.mrf.mxu0
      %v4016 = vadd.f32 0.0, %v4015
      %v4017 = vpop.f32.mrf.mxu0
      %v4018 = vadd.f32 0.0, %v4017
      %4019 = vmatmul.bf16.gmra.mxu0 %v3418
      %v4020 = vpop.f32.mrf.mxu0
      %v4021 = vadd.f32 0.0, %v4020
      %v4022 = vpop.f32.mrf.mxu0
      %v4023 = vadd.f32 0.0, %v4022
      %4024 = vmatmul.bf16.gmra.mxu0 %v3422
      %v4025 = vpop.f32.mrf.mxu0
      %v4026 = vadd.f32 0.0, %v4025
      %v4027 = vpop.f32.mrf.mxu0
      %v4028 = vadd.f32 0.0, %v4027
      %4029 = vmatmul.bf16.gmra.mxu0 %v3426
      %v4030 = vpop.f32.mrf.mxu0
      %v4031 = vadd.f32 0.0, %v4030
      %v4032 = vpop.f32.mrf.mxu0
      %v4033 = vadd.f32 0.0, %v4032
      %4034 = vmatmul.bf16.gmra.mxu0 %v3430
      %v4035 = vpop.f32.mrf.mxu0
      %v4036 = vadd.f32 0.0, %v4035
      %v4037 = vpop.f32.mrf.mxu0
      %v4038 = vadd.f32 0.0, %v4037
      %4039 = vmatmul.bf16.gmra.mxu0 %v3434
      %v4040 = vpop.f32.mrf.mxu0
      %v4041 = vadd.f32 0.0, %v4040
      %v4042 = vpop.f32.mrf.mxu0
      %v4043 = vadd.f32 0.0, %v4042
      %4044 = vmatmul.bf16.gmra.mxu0 %v3438
      %v4045 = vpop.f32.mrf.mxu0
      %v4046 = vadd.f32 0.0, %v4045
      %v4047 = vpop.f32.mrf.mxu0
      %v4048 = vadd.f32 0.0, %v4047
      %4049 = vmatmul.bf16.gmra.mxu0 %v3442
      %v4050 = vpop.f32.mrf.mxu0
      %v4051 = vadd.f32 0.0, %v4050
      %v4052 = vpop.f32.mrf.mxu0
      %v4053 = vadd.f32 0.0, %v4052
      %4054 = vmatmul.bf16.gmra.mxu0 %v3446
      %v4055 = vpop.f32.mrf.mxu0
      %v4056 = vadd.f32 0.0, %v4055
      %v4057 = vpop.f32.mrf.mxu0
      %v4058 = vadd.f32 0.0, %v4057
      %4059 = vmatmul.bf16.gmra.mxu0 %v3450
      %v4060 = vpop.f32.mrf.mxu0
      %v4061 = vadd.f32 0.0, %v4060
      %v4062 = vpop.f32.mrf.mxu0
      %v4063 = vadd.f32 0.0, %v4062
      %4064 = vmatmul.bf16.gmra.mxu0 %v3454
      %v4065 = vpop.f32.mrf.mxu0
      %v4066 = vadd.f32 0.0, %v4065
      %v4067 = vpop.f32.mrf.mxu0
      %v4068 = vadd.f32 0.0, %v4067
      %4069 = vmatmul.bf16.gmra.mxu0 %v3458
      %v4070 = vpop.f32.mrf.mxu0
      %v4071 = vadd.f32 0.0, %v4070
      %v4072 = vpop.f32.mrf.mxu0
      %v4073 = vadd.f32 0.0, %v4072
      %4074 = vmatmul.bf16.gmra.mxu0 %v3462
      %v4075 = vpop.f32.mrf.mxu0
      %v4076 = vadd.f32 0.0, %v4075
      %v4077 = vpop.f32.mrf.mxu0
      %v4078 = vadd.f32 0.0, %v4077
      %4079 = vmatmul.bf16.gmra.mxu0 %v3466
      %v4080 = vpop.f32.mrf.mxu0
      %v4081 = vadd.f32 0.0, %v4080
      %v4082 = vpop.f32.mrf.mxu0
      %v4083 = vadd.f32 0.0, %v4082
      %4084 = vdwg.mxu0
      %4085 = vmatpush.bf16.msra.mxu0 %v3891
      %4086 = vmatpush.bf16.msra.mxu0 %v3890
      %4087 = vmatpush.bf16.msra.mxu0 %v3889
      %4088 = vmatpush.bf16.msra.mxu0 %v3888
      %4089 = vmatpush.bf16.msra.mxu0 %v3887
      %4090 = vmatpush.bf16.msra.mxu0 %v3886
      %4091 = vmatpush.bf16.msra.mxu0 %v3885
      %4092 = vmatpush.bf16.msra.mxu0 %v3884
      %4093 = vmatmul.bf16.gmra.mxu0 %v3470
      %v4094 = vpop.f32.mrf.mxu0
      %v4095 = vadd.f32 %v4006, %v4094
      %v4096 = vpop.f32.mrf.mxu0
      %v4097 = vadd.f32 %v4008, %v4096
      %4098 = vmatmul.bf16.gmra.mxu0 %v3474
      %v4099 = vpop.f32.mrf.mxu0
      %v4100 = vadd.f32 %v4011, %v4099
      %v4101 = vpop.f32.mrf.mxu0
      %v4102 = vadd.f32 %v4013, %v4101
      %4103 = vmatmul.bf16.gmra.mxu0 %v3478
      %v4104 = vpop.f32.mrf.mxu0
      %v4105 = vadd.f32 %v4016, %v4104
      %v4106 = vpop.f32.mrf.mxu0
      %v4107 = vadd.f32 %v4018, %v4106
      %4108 = vmatmul.bf16.gmra.mxu0 %v3482
      %v4109 = vpop.f32.mrf.mxu0
      %v4110 = vadd.f32 %v4021, %v4109
      %v4111 = vpop.f32.mrf.mxu0
      %v4112 = vadd.f32 %v4023, %v4111
      %4113 = vmatmul.bf16.gmra.mxu0 %v3486
      %v4114 = vpop.f32.mrf.mxu0
      %v4115 = vadd.f32 %v4026, %v4114
      %v4116 = vpop.f32.mrf.mxu0
      %v4117 = vadd.f32 %v4028, %v4116
      %4118 = vmatmul.bf16.gmra.mxu0 %v3490
      %v4119 = vpop.f32.mrf.mxu0
      %v4120 = vadd.f32 %v4031, %v4119
      %v4121 = vpop.f32.mrf.mxu0
      %v4122 = vadd.f32 %v4033, %v4121
      %4123 = vmatmul.bf16.gmra.mxu0 %v3494
      %v4124 = vpop.f32.mrf.mxu0
      %v4125 = vadd.f32 %v4036, %v4124
      %v4126 = vpop.f32.mrf.mxu0
      %v4127 = vadd.f32 %v4038, %v4126
      %4128 = vmatmul.bf16.gmra.mxu0 %v3498
      %v4129 = vpop.f32.mrf.mxu0
      %v4130 = vadd.f32 %v4041, %v4129
      %v4131 = vpop.f32.mrf.mxu0
      %v4132 = vadd.f32 %v4043, %v4131
      %4133 = vmatmul.bf16.gmra.mxu0 %v3502
      %v4134 = vpop.f32.mrf.mxu0
      %v4135 = vadd.f32 %v4046, %v4134
      %v4136 = vpop.f32.mrf.mxu0
      %v4137 = vadd.f32 %v4048, %v4136
      %4138 = vmatmul.bf16.gmra.mxu0 %v3506
      %v4139 = vpop.f32.mrf.mxu0
      %v4140 = vadd.f32 %v4051, %v4139
      %v4141 = vpop.f32.mrf.mxu0
      %v4142 = vadd.f32 %v4053, %v4141
      %4143 = vmatmul.bf16.gmra.mxu0 %v3510
      %v4144 = vpop.f32.mrf.mxu0
      %v4145 = vadd.f32 %v4056, %v4144
      %v4146 = vpop.f32.mrf.mxu0
      %v4147 = vadd.f32 %v4058, %v4146
      %4148 = vmatmul.bf16.gmra.mxu0 %v3514
      %v4149 = vpop.f32.mrf.mxu0
      %v4150 = vadd.f32 %v4061, %v4149
      %v4151 = vpop.f32.mrf.mxu0
      %v4152 = vadd.f32 %v4063, %v4151
      %4153 = vmatmul.bf16.gmra.mxu0 %v3518
      %v4154 = vpop.f32.mrf.mxu0
      %v4155 = vadd.f32 %v4066, %v4154
      %v4156 = vpop.f32.mrf.mxu0
      %v4157 = vadd.f32 %v4068, %v4156
      %4158 = vmatmul.bf16.gmra.mxu0 %v3522
      %v4159 = vpop.f32.mrf.mxu0
      %v4160 = vadd.f32 %v4071, %v4159
      %v4161 = vpop.f32.mrf.mxu0
      %v4162 = vadd.f32 %v4073, %v4161
      %4163 = vmatmul.bf16.gmra.mxu0 %v3526
      %v4164 = vpop.f32.mrf.mxu0
      %v4165 = vadd.f32 %v4076, %v4164
      %v4166 = vpop.f32.mrf.mxu0
      %v4167 = vadd.f32 %v4078, %v4166
      %4168 = vmatmul.bf16.gmra.mxu0 %v3530
      %v4169 = vpop.f32.mrf.mxu0
      %v4170 = vadd.f32 %v4081, %v4169
      %v4171 = vpop.f32.mrf.mxu0
      %v4172 = vadd.f32 %v4083, %v4171
      %4173 = vdwg.mxu0
      %4174 = vmatpush.bf16.msra.mxu0 %v3899
      %4175 = vmatpush.bf16.msra.mxu0 %v3898
      %4176 = vmatpush.bf16.msra.mxu0 %v3897
      %4177 = vmatpush.bf16.msra.mxu0 %v3896
      %4178 = vmatpush.bf16.msra.mxu0 %v3895
      %4179 = vmatpush.bf16.msra.mxu0 %v3894
      %4180 = vmatpush.bf16.msra.mxu0 %v3893
      %4181 = vmatpush.bf16.msra.mxu0 %v3892
      %4182 = vmatmul.bf16.gmra.mxu0 %v3534
      %v4183 = vpop.f32.mrf.mxu0
      %v4184 = vadd.f32 %v4095, %v4183
      %v4185 = vpop.f32.mrf.mxu0
      %v4186 = vadd.f32 %v4097, %v4185
      %4187 = vmatmul.bf16.gmra.mxu0 %v3538
      %v4188 = vpop.f32.mrf.mxu0
      %v4189 = vadd.f32 %v4100, %v4188
      %v4190 = vpop.f32.mrf.mxu0
      %v4191 = vadd.f32 %v4102, %v4190
      %4192 = vmatmul.bf16.gmra.mxu0 %v3542
      %v4193 = vpop.f32.mrf.mxu0
      %v4194 = vadd.f32 %v4105, %v4193
      %v4195 = vpop.f32.mrf.mxu0
      %v4196 = vadd.f32 %v4107, %v4195
      %4197 = vmatmul.bf16.gmra.mxu0 %v3546
      %v4198 = vpop.f32.mrf.mxu0
      %v4199 = vadd.f32 %v4110, %v4198
      %v4200 = vpop.f32.mrf.mxu0
      %v4201 = vadd.f32 %v4112, %v4200
      %4202 = vmatmul.bf16.gmra.mxu0 %v3550
      %v4203 = vpop.f32.mrf.mxu0
      %v4204 = vadd.f32 %v4115, %v4203
      %v4205 = vpop.f32.mrf.mxu0
      %v4206 = vadd.f32 %v4117, %v4205
      %4207 = vmatmul.bf16.gmra.mxu0 %v3554
      %v4208 = vpop.f32.mrf.mxu0
      %v4209 = vadd.f32 %v4120, %v4208
      %v4210 = vpop.f32.mrf.mxu0
      %v4211 = vadd.f32 %v4122, %v4210
      %4212 = vmatmul.bf16.gmra.mxu0 %v3558
      %v4213 = vpop.f32.mrf.mxu0
      %v4214 = vadd.f32 %v4125, %v4213
      %v4215 = vpop.f32.mrf.mxu0
      %v4216 = vadd.f32 %v4127, %v4215
      %4217 = vmatmul.bf16.gmra.mxu0 %v3562
      %v4218 = vpop.f32.mrf.mxu0
      %v4219 = vadd.f32 %v4130, %v4218
      %v4220 = vpop.f32.mrf.mxu0
      %v4221 = vadd.f32 %v4132, %v4220
      %4222 = vmatmul.bf16.gmra.mxu0 %v3566
      %v4223 = vpop.f32.mrf.mxu0
      %v4224 = vadd.f32 %v4135, %v4223
      %v4225 = vpop.f32.mrf.mxu0
      %v4226 = vadd.f32 %v4137, %v4225
      %4227 = vmatmul.bf16.gmra.mxu0 %v3570
      %v4228 = vpop.f32.mrf.mxu0
      %v4229 = vadd.f32 %v4140, %v4228
      %v4230 = vpop.f32.mrf.mxu0
      %v4231 = vadd.f32 %v4142, %v4230
      %4232 = vmatmul.bf16.gmra.mxu0 %v3574
      %v4233 = vpop.f32.mrf.mxu0
      %v4234 = vadd.f32 %v4145, %v4233
      %v4235 = vpop.f32.mrf.mxu0
      %v4236 = vadd.f32 %v4147, %v4235
      %4237 = vmatmul.bf16.gmra.mxu0 %v3578
      %v4238 = vpop.f32.mrf.mxu0
      %v4239 = vadd.f32 %v4150, %v4238
      %v4240 = vpop.f32.mrf.mxu0
      %v4241 = vadd.f32 %v4152, %v4240
      %4242 = vmatmul.bf16.gmra.mxu0 %v3582
      %v4243 = vpop.f32.mrf.mxu0
      %v4244 = vadd.f32 %v4155, %v4243
      %v4245 = vpop.f32.mrf.mxu0
      %v4246 = vadd.f32 %v4157, %v4245
      %4247 = vmatmul.bf16.gmra.mxu0 %v3586
      %v4248 = vpop.f32.mrf.mxu0
      %v4249 = vadd.f32 %v4160, %v4248
      %v4250 = vpop.f32.mrf.mxu0
      %v4251 = vadd.f32 %v4162, %v4250
      %4252 = vmatmul.bf16.gmra.mxu0 %v3590
      %v4253 = vpop.f32.mrf.mxu0
      %v4254 = vadd.f32 %v4165, %v4253
      %v4255 = vpop.f32.mrf.mxu0
      %v4256 = vadd.f32 %v4167, %v4255
      %4257 = vmatmul.bf16.gmra.mxu0 %v3594
      %v4258 = vpop.f32.mrf.mxu0
      %v4259 = vadd.f32 %v4170, %v4258
      %v4260 = vpop.f32.mrf.mxu0
      %v4261 = vadd.f32 %v4172, %v4260
      %4262 = vdwg.mxu0
      %4263 = vmatpush.bf16.msra.mxu0 %v3907
      %4264 = vmatpush.bf16.msra.mxu0 %v3906
      %4265 = vmatpush.bf16.msra.mxu0 %v3905
      %4266 = vmatpush.bf16.msra.mxu0 %v3904
      %4267 = vmatpush.bf16.msra.mxu0 %v3903
      %4268 = vmatpush.bf16.msra.mxu0 %v3902
      %4269 = vmatpush.bf16.msra.mxu0 %v3901
      %4270 = vmatpush.bf16.msra.mxu0 %v3900
      %4271 = vmatmul.bf16.gmra.mxu0 %v3598
      %v4272 = vpop.f32.mrf.mxu0
      %v4273 = vadd.f32 %v4184, %v4272
      %v4274 = vpop.f32.mrf.mxu0
      %v4275 = vadd.f32 %v4186, %v4274
      %4276 = vmatmul.bf16.gmra.mxu0 %v3602
      %v4277 = vpop.f32.mrf.mxu0
      %v4278 = vadd.f32 %v4189, %v4277
      %v4279 = vpop.f32.mrf.mxu0
      %v4280 = vadd.f32 %v4191, %v4279
      %4281 = vmatmul.bf16.gmra.mxu0 %v3606
      %v4282 = vpop.f32.mrf.mxu0
      %v4283 = vadd.f32 %v4194, %v4282
      %v4284 = vpop.f32.mrf.mxu0
      %v4285 = vadd.f32 %v4196, %v4284
      %4286 = vmatmul.bf16.gmra.mxu0 %v3610
      %v4287 = vpop.f32.mrf.mxu0
      %v4288 = vadd.f32 %v4199, %v4287
      %v4289 = vpop.f32.mrf.mxu0
      %v4290 = vadd.f32 %v4201, %v4289
      %4291 = vmatmul.bf16.gmra.mxu0 %v3614
      %v4292 = vpop.f32.mrf.mxu0
      %v4293 = vadd.f32 %v4204, %v4292
      %v4294 = vpop.f32.mrf.mxu0
      %v4295 = vadd.f32 %v4206, %v4294
      %4296 = vmatmul.bf16.gmra.mxu0 %v3618
      %v4297 = vpop.f32.mrf.mxu0
      %v4298 = vadd.f32 %v4209, %v4297
      %v4299 = vpop.f32.mrf.mxu0
      %v4300 = vadd.f32 %v4211, %v4299
      %4301 = vmatmul.bf16.gmra.mxu0 %v3622
      %v4302 = vpop.f32.mrf.mxu0
      %v4303 = vadd.f32 %v4214, %v4302
      %v4304 = vpop.f32.mrf.mxu0
      %v4305 = vadd.f32 %v4216, %v4304
      %4306 = vmatmul.bf16.gmra.mxu0 %v3626
      %v4307 = vpop.f32.mrf.mxu0
      %v4308 = vadd.f32 %v4219, %v4307
      %v4309 = vpop.f32.mrf.mxu0
      %v4310 = vadd.f32 %v4221, %v4309
      %4311 = vmatmul.bf16.gmra.mxu0 %v3630
      %v4312 = vpop.f32.mrf.mxu0
      %v4313 = vadd.f32 %v4224, %v4312
      %v4314 = vpop.f32.mrf.mxu0
      %v4315 = vadd.f32 %v4226, %v4314
      %4316 = vmatmul.bf16.gmra.mxu0 %v3634
      %v4317 = vpop.f32.mrf.mxu0
      %v4318 = vadd.f32 %v4229, %v4317
      %v4319 = vpop.f32.mrf.mxu0
      %v4320 = vadd.f32 %v4231, %v4319
      %4321 = vmatmul.bf16.gmra.mxu0 %v3638
      %v4322 = vpop.f32.mrf.mxu0
      %v4323 = vadd.f32 %v4234, %v4322
      %v4324 = vpop.f32.mrf.mxu0
      %v4325 = vadd.f32 %v4236, %v4324
      %4326 = vmatmul.bf16.gmra.mxu0 %v3642
      %v4327 = vpop.f32.mrf.mxu0
      %v4328 = vadd.f32 %v4239, %v4327
      %v4329 = vpop.f32.mrf.mxu0
      %v4330 = vadd.f32 %v4241, %v4329
      %4331 = vmatmul.bf16.gmra.mxu0 %v3646
      %v4332 = vpop.f32.mrf.mxu0
      %v4333 = vadd.f32 %v4244, %v4332
      %v4334 = vpop.f32.mrf.mxu0
      %v4335 = vadd.f32 %v4246, %v4334
      %4336 = vmatmul.bf16.gmra.mxu0 %v3650
      %v4337 = vpop.f32.mrf.mxu0
      %v4338 = vadd.f32 %v4249, %v4337
      %v4339 = vpop.f32.mrf.mxu0
      %v4340 = vadd.f32 %v4251, %v4339
      %4341 = vmatmul.bf16.gmra.mxu0 %v3654
      %v4342 = vpop.f32.mrf.mxu0
      %v4343 = vadd.f32 %v4254, %v4342
      %v4344 = vpop.f32.mrf.mxu0
      %v4345 = vadd.f32 %v4256, %v4344
      %4346 = vmatmul.bf16.gmra.mxu0 %v3658
      %v4347 = vpop.f32.mrf.mxu0
      %v4348 = vadd.f32 %v4259, %v4347
      %v4349 = vpop.f32.mrf.mxu0
      %v4350 = vadd.f32 %v4261, %v4349
      %4351 = vdwg.mxu0
      %4352 = vmatpush.bf16.msra.mxu0 0
      %4353 = vmatpush.bf16.msra.mxu0 0
      %4354 = vmatpush.bf16.msra.mxu0 0
      %4355 = vmatpush.bf16.msra.mxu0 0
      %4356 = vmatpush.bf16.msra.mxu0 %v3911
      %4357 = vmatpush.bf16.msra.mxu0 %v3910
      %4358 = vmatpush.bf16.msra.mxu0 %v3909
      %4359 = vmatpush.bf16.msra.mxu0 %v3908
      %4360 = vmatmul.bf16.gmra.mxu0 %v3949
      %v4361 = vpop.f32.mrf.mxu0
      %v4362 = vadd.f32 %v4273, %v4361
      %v4363 = vpop.f32.mrf.mxu0
      %v4364 = vadd.f32 %v4275, %v4363
      %4365 = vmatmul.bf16.gmra.mxu0 %v3952
      %v4366 = vpop.f32.mrf.mxu0
      %v4367 = vadd.f32 %v4278, %v4366
      %v4368 = vpop.f32.mrf.mxu0
      %v4369 = vadd.f32 %v4280, %v4368
      %4370 = vmatmul.bf16.gmra.mxu0 %v3955
      %v4371 = vpop.f32.mrf.mxu0
      %v4372 = vadd.f32 %v4283, %v4371
      %v4373 = vpop.f32.mrf.mxu0
      %v4374 = vadd.f32 %v4285, %v4373
      %4375 = vmatmul.bf16.gmra.mxu0 %v3958
      %v4376 = vpop.f32.mrf.mxu0
      %v4377 = vadd.f32 %v4288, %v4376
      %v4378 = vpop.f32.mrf.mxu0
      %v4379 = vadd.f32 %v4290, %v4378
      %4380 = vmatmul.bf16.gmra.mxu0 %v3961
      %v4381 = vpop.f32.mrf.mxu0
      %v4382 = vadd.f32 %v4293, %v4381
      %v4383 = vpop.f32.mrf.mxu0
      %v4384 = vadd.f32 %v4295, %v4383
      %4385 = vmatmul.bf16.gmra.mxu0 %v3964
      %v4386 = vpop.f32.mrf.mxu0
      %v4387 = vadd.f32 %v4298, %v4386
      %v4388 = vpop.f32.mrf.mxu0
      %v4389 = vadd.f32 %v4300, %v4388
      %4390 = vmatmul.bf16.gmra.mxu0 %v3967
      %v4391 = vpop.f32.mrf.mxu0
      %v4392 = vadd.f32 %v4303, %v4391
      %v4393 = vpop.f32.mrf.mxu0
      %v4394 = vadd.f32 %v4305, %v4393
      %4395 = vmatmul.bf16.gmra.mxu0 %v3970
      %v4396 = vpop.f32.mrf.mxu0
      %v4397 = vadd.f32 %v4308, %v4396
      %v4398 = vpop.f32.mrf.mxu0
      %v4399 = vadd.f32 %v4310, %v4398
      %4400 = vmatmul.bf16.gmra.mxu0 %v3973
      %v4401 = vpop.f32.mrf.mxu0
      %v4402 = vadd.f32 %v4313, %v4401
      %v4403 = vpop.f32.mrf.mxu0
      %v4404 = vadd.f32 %v4315, %v4403
      %4405 = vmatmul.bf16.gmra.mxu0 %v3976
      %v4406 = vpop.f32.mrf.mxu0
      %v4407 = vadd.f32 %v4318, %v4406
      %v4408 = vpop.f32.mrf.mxu0
      %v4409 = vadd.f32 %v4320, %v4408
      %4410 = vmatmul.bf16.gmra.mxu0 %v3979
      %v4411 = vpop.f32.mrf.mxu0
      %v4412 = vadd.f32 %v4323, %v4411
      %v4413 = vpop.f32.mrf.mxu0
      %v4414 = vadd.f32 %v4325, %v4413
      %4415 = vmatmul.bf16.gmra.mxu0 %v3982
      %v4416 = vpop.f32.mrf.mxu0
      %v4417 = vadd.f32 %v4328, %v4416
      %v4418 = vpop.f32.mrf.mxu0
      %v4419 = vadd.f32 %v4330, %v4418
      %4420 = vmatmul.bf16.gmra.mxu0 %v3985
      %v4421 = vpop.f32.mrf.mxu0
      %v4422 = vadd.f32 %v4333, %v4421
      %v4423 = vpop.f32.mrf.mxu0
      %v4424 = vadd.f32 %v4335, %v4423
      %4425 = vmatmul.bf16.gmra.mxu0 %v3988
      %v4426 = vpop.f32.mrf.mxu0
      %v4427 = vadd.f32 %v4338, %v4426
      %v4428 = vpop.f32.mrf.mxu0
      %v4429 = vadd.f32 %v4340, %v4428
      %4430 = vmatmul.bf16.gmra.mxu0 %v3991
      %v4431 = vpop.f32.mrf.mxu0
      %v4432 = vadd.f32 %v4343, %v4431
      %v4433 = vpop.f32.mrf.mxu0
      %v4434 = vadd.f32 %v4345, %v4433
      %4435 = vmatmul.bf16.gmra.mxu0 %v3994
      %v4436 = vpop.f32.mrf.mxu0
      %v4437 = vadd.f32 %v4348, %v4436
      %v4438 = vpop.f32.mrf.mxu0
      %v4439 = vadd.f32 %v4350, %v4438
      %4440 = vdwg.mxu0
      %v4441 = vpack.c.bf16 %v4362, %v4362
      %v4442 = vpack.c.bf16 %v4364, %v4364
      %v4443 = vpack.c.bf16 %v4367, %v4367
      %v4444 = vpack.c.bf16 %v4369, %v4369
      %v4445 = vpack.c.bf16 %v4372, %v4372
      %v4446 = vpack.c.bf16 %v4374, %v4374
      %v4447 = vpack.c.bf16 %v4377, %v4377
      %v4448 = vpack.c.bf16 %v4379, %v4379
      %v4449 = vpack.c.bf16 %v4382, %v4382
      %v4450 = vpack.c.bf16 %v4384, %v4384
      %v4451 = vpack.c.bf16 %v4387, %v4387
      %v4452 = vpack.c.bf16 %v4389, %v4389
      %v4453 = vpack.c.bf16 %v4392, %v4392
      %v4454 = vpack.c.bf16 %v4394, %v4394
      %v4455 = vpack.c.bf16 %v4397, %v4397
      %v4456 = vpack.c.bf16 %v4399, %v4399
      %v4457 = vpack.c.bf16 %v4402, %v4402
      %v4458 = vpack.c.bf16 %v4404, %v4404
      %v4459 = vpack.c.bf16 %v4407, %v4407
      %v4460 = vpack.c.bf16 %v4409, %v4409
      %v4461 = vpack.c.bf16 %v4412, %v4412
      %v4462 = vpack.c.bf16 %v4414, %v4414
      %v4463 = vpack.c.bf16 %v4417, %v4417
      %v4464 = vpack.c.bf16 %v4419, %v4419
      %v4465 = vpack.c.bf16 %v4422, %v4422
      %v4466 = vpack.c.bf16 %v4424, %v4424
      %v4467 = vpack.c.bf16 %v4427, %v4427
      %v4468 = vpack.c.bf16 %v4429, %v4429
      %v4469 = vpack.c.bf16 %v4432, %v4432
      %v4470 = vpack.c.bf16 %v4434, %v4434
      %v4471 = vpack.c.bf16 %v4437, %v4437
      %v4472 = vpack.c.bf16 %v4439, %v4439
      %4473 = vst [vmem:[%s316] sm:$0xf] %v4441
      %4474 = vst [vmem:[%s316 + $0x4] sm:$0xf] %v4442
      %4475 = vst [vmem:[%s316 + $0x8] sm:$0xf] %v4443
      %4476 = vst [vmem:[%s316 + $0xc] sm:$0xf] %v4444
      %4477 = vst [vmem:[%s316 + $0x10] sm:$0xf] %v4445
      %4478 = vst [vmem:[%s316 + $0x14] sm:$0xf] %v4446
      %4479 = vst [vmem:[%s316 + $0x18] sm:$0xf] %v4447
      %4480 = vst [vmem:[%s316 + $0x1c] sm:$0xf] %v4448
      %4481 = vst [vmem:[%s316 + $0x20] sm:$0xf] %v4449
      %4482 = vst [vmem:[%s316 + $0x24] sm:$0xf] %v4450
      %4483 = vst [vmem:[%s316 + $0x28] sm:$0xf] %v4451
      %4484 = vst [vmem:[%s316 + $0x2c] sm:$0xf] %v4452
      %4485 = vst [vmem:[%s316 + $0x30] sm:$0xf] %v4453
      %4486 = vst [vmem:[%s316 + $0x34] sm:$0xf] %v4454
      %4487 = vst [vmem:[%s316 + $0x38] sm:$0xf] %v4455
      %4488 = vst [vmem:[%s316 + $0x3c] sm:$0xf] %v4456
      %4489 = vst [vmem:[%s316 + $0x40] sm:$0xf] %v4457
      %4490 = vst [vmem:[%s316 + $0x44] sm:$0xf] %v4458
      %4491 = vst [vmem:[%s316 + $0x48] sm:$0xf] %v4459
      %4492 = vst [vmem:[%s316 + $0x4c] sm:$0xf] %v4460
      %4493 = vst [vmem:[%s316 + $0x50] sm:$0xf] %v4461
      %4494 = vst [vmem:[%s316 + $0x54] sm:$0xf] %v4462
      %4495 = vst [vmem:[%s316 + $0x58] sm:$0xf] %v4463
      %4496 = vst [vmem:[%s316 + $0x5c] sm:$0xf] %v4464
      %4497 = vst [vmem:[%s316 + $0x60] sm:$0xf] %v4465
      %4498 = vst [vmem:[%s316 + $0x64] sm:$0xf] %v4466
      %4499 = vst [vmem:[%s316 + $0x68] sm:$0xf] %v4467
      %4500 = vst [vmem:[%s316 + $0x6c] sm:$0xf] %v4468
      %4501 = vst [vmem:[%s316 + $0x70] sm:$0xf] %v4469
      %4502 = vst [vmem:[%s316 + $0x74] sm:$0xf] %v4470
      %4503 = vst [vmem:[%s316 + $0x78] sm:$0xf] %v4471
      %4504 = vst [vmem:[%s316 + $0x7c] sm:$0xf] %v4472
      %v4505 = vadd.f32 %v4362, %v4364
      %v4506 = vadd.f32 %v4505, %v4367
      %v4507 = vadd.f32 %v4506, %v4369
      %v4508 = vadd.f32 %v4507, %v4372
      %v4509 = vadd.f32 %v4508, %v4374
      %v4510 = vadd.f32 %v4509, %v4377
      %v4511 = vadd.f32 %v4510, %v4379
      %v4512 = vadd.f32 %v4511, %v4382
      %v4513 = vadd.f32 %v4512, %v4384
      %v4514 = vadd.f32 %v4513, %v4387
      %v4515 = vadd.f32 %v4514, %v4389
      %v4516 = vadd.f32 %v4515, %v4392
      %v4517 = vadd.f32 %v4516, %v4394
      %v4518 = vadd.f32 %v4517, %v4397
      %v4519 = vadd.f32 %v4518, %v4399
      %v4520 = vadd.f32 %v4519, %v4402
      %v4521 = vadd.f32 %v4520, %v4404
      %v4522 = vadd.f32 %v4521, %v4407
      %v4523 = vadd.f32 %v4522, %v4409
      %v4524 = vadd.f32 %v4523, %v4412
      %v4525 = vadd.f32 %v4524, %v4414
      %v4526 = vadd.f32 %v4525, %v4417
      %v4527 = vadd.f32 %v4526, %v4419
      %v4528 = vadd.f32 %v4527, %v4422
      %v4529 = vadd.f32 %v4528, %v4424
      %v4530 = vadd.f32 %v4529, %v4427
      %v4531 = vadd.f32 %v4530, %v4429
      %v4532 = vadd.f32 %v4531, %v4432
      %v4533 = vadd.f32 %v4532, %v4434
      %v4534 = vadd.f32 %v4533, %v4437
      %v4535 = vadd.f32 %v4534, %v4439
      %v4536 = vrot.slane %v4535, 4
      %v4537 = vadd.f32 %v4535, %v4536
      %v4538 = vrot.slane %v4537, 2
      %v4539 = vadd.f32 %v4537, %v4538
      %v4540 = vrot.slane %v4539, 1
      %v4541 = vadd.f32 %v4539, %v4540
      %v4542 = vmul.f32 %v4541, %v568
      %4543 = vst [vmem:[%s319] sm:$0x1] %v4542
      %v4544 = vsub.f32 %v4362, %v4542
      %v4545 = vsub.f32 %v4364, %v4542
      %v4546 = vsub.f32 %v4367, %v4542
      %v4547 = vsub.f32 %v4369, %v4542
      %v4548 = vsub.f32 %v4372, %v4542
      %v4549 = vsub.f32 %v4374, %v4542
      %v4550 = vsub.f32 %v4377, %v4542
      %v4551 = vsub.f32 %v4379, %v4542
      %v4552 = vsub.f32 %v4382, %v4542
      %v4553 = vsub.f32 %v4384, %v4542
      %v4554 = vsub.f32 %v4387, %v4542
      %v4555 = vsub.f32 %v4389, %v4542
      %v4556 = vsub.f32 %v4392, %v4542
      %v4557 = vsub.f32 %v4394, %v4542
      %v4558 = vsub.f32 %v4397, %v4542
      %v4559 = vsub.f32 %v4399, %v4542
      %v4560 = vsub.f32 %v4402, %v4542
      %v4561 = vsub.f32 %v4404, %v4542
      %v4562 = vsub.f32 %v4407, %v4542
      %v4563 = vsub.f32 %v4409, %v4542
      %v4564 = vsub.f32 %v4412, %v4542
      %v4565 = vsub.f32 %v4414, %v4542
      %v4566 = vsub.f32 %v4417, %v4542
      %v4567 = vsub.f32 %v4419, %v4542
      %v4568 = vsub.f32 %v4422, %v4542
      %v4569 = vsub.f32 %v4424, %v4542
      %v4570 = vsub.f32 %v4427, %v4542
      %v4571 = vsub.f32 %v4429, %v4542
      %v4572 = vsub.f32 %v4432, %v4542
      %v4573 = vsub.f32 %v4434, %v4542
      %v4574 = vsub.f32 %v4437, %v4542
      %v4575 = vsub.f32 %v4439, %v4542
      %v4576 = vmul.f32 %v4544, %v4544
      %v4577 = vmul.f32 %v4545, %v4545
      %v4578 = vmul.f32 %v4546, %v4546
      %v4579 = vmul.f32 %v4547, %v4547
      %v4580 = vmul.f32 %v4548, %v4548
      %v4581 = vmul.f32 %v4549, %v4549
      %v4582 = vmul.f32 %v4550, %v4550
      %v4583 = vmul.f32 %v4551, %v4551
      %v4584 = vmul.f32 %v4552, %v4552
      %v4585 = vmul.f32 %v4553, %v4553
      %v4586 = vmul.f32 %v4554, %v4554
      %v4587 = vmul.f32 %v4555, %v4555
      %v4588 = vmul.f32 %v4556, %v4556
      %v4589 = vmul.f32 %v4557, %v4557
      %v4590 = vmul.f32 %v4558, %v4558
      %v4591 = vmul.f32 %v4559, %v4559
      %v4592 = vmul.f32 %v4560, %v4560
      %v4593 = vmul.f32 %v4561, %v4561
      %v4594 = vmul.f32 %v4562, %v4562
      %v4595 = vmul.f32 %v4563, %v4563
      %v4596 = vmul.f32 %v4564, %v4564
      %v4597 = vmul.f32 %v4565, %v4565
      %v4598 = vmul.f32 %v4566, %v4566
      %v4599 = vmul.f32 %v4567, %v4567
      %v4600 = vmul.f32 %v4568, %v4568
      %v4601 = vmul.f32 %v4569, %v4569
      %v4602 = vmul.f32 %v4570, %v4570
      %v4603 = vmul.f32 %v4571, %v4571
      %v4604 = vmul.f32 %v4572, %v4572
      %v4605 = vmul.f32 %v4573, %v4573
      %v4606 = vmul.f32 %v4574, %v4574
      %v4607 = vmul.f32 %v4575, %v4575
      %v4608 = vadd.f32 %v4576, %v4577
      %v4609 = vadd.f32 %v4608, %v4578
      %v4610 = vadd.f32 %v4609, %v4579
      %v4611 = vadd.f32 %v4610, %v4580
      %v4612 = vadd.f32 %v4611, %v4581
      %v4613 = vadd.f32 %v4612, %v4582
      %v4614 = vadd.f32 %v4613, %v4583
      %v4615 = vadd.f32 %v4614, %v4584
      %v4616 = vadd.f32 %v4615, %v4585
      %v4617 = vadd.f32 %v4616, %v4586
      %v4618 = vadd.f32 %v4617, %v4587
      %v4619 = vadd.f32 %v4618, %v4588
      %v4620 = vadd.f32 %v4619, %v4589
      %v4621 = vadd.f32 %v4620, %v4590
      %v4622 = vadd.f32 %v4621, %v4591
      %v4623 = vadd.f32 %v4622, %v4592
      %v4624 = vadd.f32 %v4623, %v4593
      %v4625 = vadd.f32 %v4624, %v4594
      %v4626 = vadd.f32 %v4625, %v4595
      %v4627 = vadd.f32 %v4626, %v4596
      %v4628 = vadd.f32 %v4627, %v4597
      %v4629 = vadd.f32 %v4628, %v4598
      %v4630 = vadd.f32 %v4629, %v4599
      %v4631 = vadd.f32 %v4630, %v4600
      %v4632 = vadd.f32 %v4631, %v4601
      %v4633 = vadd.f32 %v4632, %v4602
      %v4634 = vadd.f32 %v4633, %v4603
      %v4635 = vadd.f32 %v4634, %v4604
      %v4636 = vadd.f32 %v4635, %v4605
      %v4637 = vadd.f32 %v4636, %v4606
      %v4638 = vadd.f32 %v4637, %v4607
      %v4639 = vrot.slane %v4638, 4
      %v4640 = vadd.f32 %v4638, %v4639
      %v4641 = vrot.slane %v4640, 2
      %v4642 = vadd.f32 %v4640, %v4641
      %v4643 = vrot.slane %v4642, 1
      %v4644 = vadd.f32 %v4642, %v4643
      %4645 = vst [vmem:[%s322] sm:$0x1] %v4644
      %p4646 = scmp.lt.s32.totalorder %s20, 1
      %s4647 = scalar_select %p4646, %s20, 1
      %s4648 = smul.addr %s4647, 32
      %s4649 = smul.addr %s4648, 4
      %s4650 = scalar_lea.vmem %s6, %s4649
      %p4651 = scmp.lt.s32.totalorder %s20, 1
      %s4652 = scalar_select %p4651, %s20, 1
      %s4653 = scalar_lea.vmem %s7, %s4652
      %p4654 = scmp.lt.s32.totalorder %s20, 1
      %s4655 = scalar_select %p4654, %s20, 1
      %s4656 = scalar_lea.vmem %s8, %s4655
      // Predicated region
      $region45: #{simple_cnn_with_se.4} parent=43 // pred_check
        %p4657 = pneg %p169
      $region46: #{simple_cnn_with_se.4} parent=43 // pred_check_branch
        %4659 = sbr.rel (%p4657) target = $region48
      $region47: #{simple_cnn_with_se.4} parent=43 // pred_region
        _
      $region48: #{simple_cnn_with_se.4} parent=43 // pred_fallthru
        _
      // Predicated region
      $region49: #{simple_cnn_with_se.4} parent=43 // pred_check
        %p4660 = pneg %p195
      $region50: #{simple_cnn_with_se.4} parent=43 // pred_check_branch
        %4662 = sbr.rel (%p4660) target = $region52
      $region51: #{simple_cnn_with_se.4} parent=43 // pred_region
        _
      $region52: #{simple_cnn_with_se.4} parent=43 // pred_fallthru
        _
      // Predicated region
      $region53: #{simple_cnn_with_se.4} parent=43 // pred_check
        %p4663 = pneg %p221
      $region54: #{simple_cnn_with_se.4} parent=43 // pred_check_branch
        %4665 = sbr.rel (%p4663) target = $region56
      $region55: #{simple_cnn_with_se.4} parent=43 // pred_region
        _
      $region56: #{simple_cnn_with_se.4} parent=43 // pred_fallthru
        _
    $region44: #{simple_cnn_with_se.4} parent=5 // pred_fallthru
      _
    %p4666 = scmp.le.s32.totalorder 2, %s15
    // Predicated region
    $region57: #{simple_cnn_with_se.4} parent=5 // pred_check
      %p4667 = pneg %p4666
    $region58: #{simple_cnn_with_se.4} parent=5 // pred_check_branch
      %4669 = sbr.rel (%p4667) target = $region60
    $region59: #{simple_cnn_with_se.4} parent=5 // pred_region
      %s4670 = ssub.s32 %s15, 2
      // Predicated region
      $region61: #{simple_cnn_with_se.4} parent=59 // pred_check
        %p4671 = pneg %p175
      $region62: #{simple_cnn_with_se.4} parent=59 // pred_check_branch
        %4673 = sbr.rel (%p4671) target = $region64
      $region63: #{simple_cnn_with_se.4} parent=59 // pred_region
        %p4674 = scmp.lt.s32.totalorder %s21, 1
        %s4675 = scalar_select %p4674, %s21, 1
        %s4676 = smul.addr %s4675, 32
        %s4677 = smul.addr %s4676, 4
        %s4678 = scalar_lea.vmem %s6, %s4677
      $region64: #{simple_cnn_with_se.4} parent=59 // pred_fallthru
        _
      // Predicated region
      $region65: #{simple_cnn_with_se.4} parent=59 // pred_check
        %p4679 = pneg %p201
      $region66: #{simple_cnn_with_se.4} parent=59 // pred_check_branch
        %4681 = sbr.rel (%p4679) target = $region68
      $region67: #{simple_cnn_with_se.4} parent=59 // pred_region
        %p4682 = scmp.lt.s32.totalorder %s21, 1
        %s4683 = scalar_select %p4682, %s21, 1
        %s4684 = scalar_lea.vmem %s7, %s4683
      $region68: #{simple_cnn_with_se.4} parent=59 // pred_fallthru
        _
      // Predicated region
      $region69: #{simple_cnn_with_se.4} parent=59 // pred_check
        %p4685 = pneg %p227
      $region70: #{simple_cnn_with_se.4} parent=59 // pred_check_branch
        %4687 = sbr.rel (%p4685) target = $region72
      $region71: #{simple_cnn_with_se.4} parent=59 // pred_region
        %p4688 = scmp.lt.s32.totalorder %s21, 1
        %s4689 = scalar_select %p4688, %s21, 1
        %s4690 = scalar_lea.vmem %s8, %s4689
      $region72: #{simple_cnn_with_se.4} parent=59 // pred_fallthru
        _
    $region60: #{simple_cnn_with_se.4} parent=5 // pred_fallthru
      _
  $region6: #{simple_cnn_with_se.4} parent=0 // loop_footer
    %s19 = sadd.s32 1, %s15
  $region7: #{simple_cnn_with_se.4} parent=0 // loop_footer_branch
    %14 = sbr.rel target = $region3
  $region8: #{simple_cnn_with_se.4} parent=0 // loop_exit
    _

</llo_original>
